<compile_context>
chip_gen: v6e
topology: v6e:2x2x1
jax: 0.10.0
libtpu: 0.0.40
codegen_flags: <defaults>
</compile_context>

<pallas_src>
import functools

import jax
import jax.numpy as jnp
from jax.experimental import pallas as pl
from jax.experimental.pallas import tpu as pltpu

K = 3          # conv kernel size (padding = 1, stride = 1)
SLAB = 128     # lane-dense packed width: ft (32) | logits (2) | loc scratch | 0
TB_MAX = 128   # max samples per grid step


def _round_up(x, m):
    return ((x + m - 1) // m) * m


# ----------------------------- Pallas kernel ------------------------------ #
def local_model_kernel(
    cols_ref,    # [TB, H*W, K*K*C]   im2col activations, f32
    locp_ref,    # [TB, SLAB]         locations in lanes feat:feat+loc_dim, f32
    wconv_ref,   # [K*K*C, 16]        conv weight, rows ordered (kh, kw, c), f32
    bconv_ref,   # [1, 16]
    wfcp_ref,    # [16, SLAB]         w_fc padded into lanes 0:feat
    bfcp_ref,    # [1, SLAB]
    w1p_ref,     # [SLAB, 64]         classifier L1 (rows 0:feat=ft, feat:feat+ld=loc)
    b1_ref,      # [1, 64]
    w2p_ref,     # [64, SLAB]         classifier L2 padded into lanes feat:feat+2
    b2p_ref,     # [1, SLAB]
    slab_ref,    # [TB, SLAB]         packed output (ft | logits | 0)
):
    tb, hw, p = cols_ref.shape
    n_conv = wconv_ref.shape[1]

    # Conv2d(pad=1) as a single im2col matmul, M = TB*H*W, K = 9*C.
    cols = cols_ref[...].reshape(tb * hw, p)                  # layout no-op reshape
    conv = jnp.dot(cols, wconv_ref[...], preferred_element_type=jnp.float32)
    conv = jnp.maximum(conv + bconv_ref[...], 0.0)            # [TB*HW, 16]

    # Global average pool per sample (sublane reduction, no pooling matrix).
    pooled = jnp.sum(conv.reshape(tb, hw, n_conv), axis=1) * (1.0 / hw)   # [TB, 16]

    # ft produced directly in lanes 0:feat of a SLAB-wide slab (rest stays 0).
    ft_slab = jnp.maximum(
        jnp.dot(pooled, wfcp_ref[...], preferred_element_type=jnp.float32)
        + bfcp_ref[...], 0.0)                                 # [TB, SLAB]

    # classifier L1: cat((ft, loc), dim=1) realized as a lane-packed add,
    # then ONE matmul with full 128 K lanes.
    xin = ft_slab + locp_ref[...]                             # [TB, SLAB]
    hcl = jnp.maximum(
        jnp.dot(xin, w1p_ref[...], preferred_element_type=jnp.float32)
        + b1_ref[...], 0.0)                                   # [TB, 64]

    # Output slab: lanes 0:feat = ft, lanes feat:feat+2 = logits. One wide store.
    slab_ref[...] = (ft_slab
                     + jnp.dot(hcl, w2p_ref[...], preferred_element_type=jnp.float32)
                     + b2p_ref[...]).astype(slab_ref.dtype)


# ------------------------------- JAX glue --------------------------------- #
@functools.partial(jax.jit, static_argnames=("feat", "n_out"))
def local_model_forward(observation, locations, kparams, *, feat=32, n_out=2):
    n, c, h, w = observation.shape
    hw = h * w
    p = K * K * c
    loc_dim = locations.shape[1]

    # im2col in the wrapper: NCHW -> NHWC, pad by 1, gather the 9 taps.
    # Blow-up is ~36 KB/sample — negligible, and it gives the kernel one fused
    # matmul with aligned, leading-dim layout instead of 9 unaligned slices.
    obs = jnp.transpose(observation, (0, 2, 3, 1)).astype(jnp.float32)
    obs = jnp.pad(obs, ((0, 0), (1, 1), (1, 1), (0, 0)))       # [N, H+2, W+2, C]
    taps = [obs[:, kh:kh + h, kw:kw + w, :] for kh in range(K) for kw in range(K)]
    cols = jnp.stack(taps, axis=3).reshape(n, hw, p)           # rows (kh, kw, c)

    # locations pre-placed in lanes feat:feat+loc_dim of a SLAB-wide slab.
    locp = jnp.zeros((n, SLAB), jnp.float32).at[:, feat:feat + loc_dim].set(
        locations.astype(jnp.float32))

    # Batch tile: amortize per-step overhead; aim for >=2 grid steps (v7x 2 TCs)
    # while keeping the double-buffered cols block well inside scoped VMEM.
    tb = max(8, min(TB_MAX, _round_up(pl.cdiv(n, 2), 8)))
    npad = _round_up(n, tb)
    if npad != n:
        cols = jnp.pad(cols, ((0, npad - n), (0, 0), (0, 0)))
        locp = jnp.pad(locp, ((0, npad - n), (0, 0)))

    def resident(arr):  # small weights: constant block index -> fetched once
        return pl.BlockSpec(arr.shape, lambda i, _nd=arr.ndim: (0,) * _nd)

    slab = pl.pallas_call(
        local_model_kernel,
        out_shape=jax.ShapeDtypeStruct((npad, SLAB), jnp.float32),
        grid=(npad // tb,),
        in_specs=[
            pl.BlockSpec((tb, hw, p), lambda i: (i, 0, 0)),
            pl.BlockSpec((tb, SLAB), lambda i: (i, 0)),
            resident(kparams["w_conv"]), resident(kparams["b_conv"]),
            resident(kparams["w_fc_pad"]), resident(kparams["b_fc_pad"]),
            resident(kparams["w1_pad"]), resident(kparams["b1"]),
            resident(kparams["w2_pad"]), resident(kparams["b2_pad"]),
        ],
        out_specs=pl.BlockSpec((tb, SLAB), lambda i: (i, 0)),
        compiler_params=pltpu.CompilerParams(
            dimension_semantics=("parallel",),      # batch blocks are independent
            vmem_limit_bytes=32 * 1024 * 1024),     # safe on v5e/v6e/v7x
    )(cols, locp,
      kparams["w_conv"], kparams["b_conv"],
      kparams["w_fc_pad"], kparams["b_fc_pad"],
      kparams["w1_pad"], kparams["b1"],
      kparams["w2_pad"], kparams["b2_pad"])

    slab = slab[:n]
    out = slab[:, feat:feat + n_out]
    ft = slab[:, :feat]
    return out, ft


# -------------------------- parameters / reference ------------------------ #
def init_params(key, c_in=4, conv_out=16, feat=32, loc_dim=4, hidden=64, n_out=2):
    """PyTorch-layout parameters (used by the pure-JAX reference)."""
    ks = jax.random.split(key, 8)
    s = 0.1
    return {
        "w_conv4": s * jax.random.normal(ks[0], (conv_out, c_in, K, K), jnp.float32),
        "b_conv": 0.05 * jax.random.normal(ks[1], (conv_out,), jnp.float32),
        "w_fc":   s * jax.random.normal(ks[2], (conv_out, feat), jnp.float32),
        "b_fc":   0.05 * jax.random.normal(ks[3], (feat,), jnp.float32),
        "w1":     s * jax.random.normal(ks[4], (feat + loc_dim, hidden), jnp.float32),
        "b1":     0.05 * jax.random.normal(ks[5], (hidden,), jnp.float32),
        "w2":     s * jax.random.normal(ks[6], (hidden, n_out), jnp.float32),
        "b2":     0.05 * jax.random.normal(ks[7], (n_out,), jnp.float32),
    }


def pack_params(p):
    """Rearrange PyTorch-layout params into the kernel's lane-padded layouts."""
    conv_out, c_in, _, _ = p["w_conv4"].shape
    feat = p["w_fc"].shape[1]
    hidden, n_out = p["w2"].shape
    loc_dim = p["w1"].shape[0] - feat
    # Conv weight rows ordered (kh, kw, c) to match the im2col column order.
    w_conv = jnp.transpose(p["w_conv4"], (2, 3, 1, 0)).reshape(K * K * c_in, conv_out)
    w_fc_pad = jnp.zeros((conv_out, SLAB), jnp.float32).at[:, :feat].set(p["w_fc"])
    b_fc_pad = jnp.zeros((1, SLAB), jnp.float32).at[:, :feat].set(p["b_fc"][None, :])
    w1_pad = jnp.zeros((SLAB, hidden), jnp.float32).at[:feat + loc_dim, :].set(p["w1"])
    w2_pad = jnp.zeros((hidden, SLAB), jnp.float32).at[:, feat:feat + n_out].set(p["w2"])
    b2_pad = jnp.zeros((1, SLAB), jnp.float32).at[:, feat:feat + n_out].set(p["b2"][None, :])
    return {
        "w_conv": w_conv.astype(jnp.float32),
        "b_conv": p["b_conv"][None, :],
        "w_fc_pad": w_fc_pad,
        "b_fc_pad": b_fc_pad,
        "w1_pad": w1_pad,
        "b1": p["b1"][None, :],
        "w2_pad": w2_pad,
        "b2_pad": b2_pad,
    }


def reference_forward(observation, locations, p):
    """Pure-JAX f32 reference of the same forward pass."""
    conv = jax.lax.conv_general_dilated(
        observation, p["w_conv4"], window_strides=(1, 1), padding="SAME",
        dimension_numbers=("NCHW", "OIHW", "NCHW"))
    conv = jnp.maximum(conv + p["b_conv"][None, :, None, None], 0.0)
    pooled = conv.mean(axis=(2, 3))
    ft = jnp.maximum(pooled @ p["w_fc"] + p["b_fc"][None, :], 0.0)
    x = jnp.concatenate([ft, locations], axis=1)
    h = jnp.maximum(x @ p["w1"] + p["b1"][None, :], 0.0)
    out = h @ p["w2"] + p["b2"][None, :]
    return out, ft


if __name__ == "__main__":
    key = jax.random.PRNGKey(0)
    k_obs, k_loc, k_par = jax.random.split(key, 3)

    N, C, H, W = 2, 4, 16, 16
    LOC_DIM = 4

    observation = jax.random.normal(k_obs, (N, C, H, W), jnp.float32)   # NCHW
    locations = jax.random.normal(k_loc, (N, LOC_DIM), jnp.float32)
    params = init_params(k_par, c_in=C, loc_dim=LOC_DIM)
    kparams = pack_params(params)

    out, ft = local_model_forward(observation, locations, kparams, feat=32, n_out=2)
    jax.block_until_ready((out, ft))

    assert out.shape == (N, 2) and ft.shape == (N, 32)

    # Numerical check vs. pure-JAX f32 reference (f32 everywhere -> tight tol).
    out_ref, ft_ref = reference_forward(observation, locations, params)
    assert bool(jnp.allclose(ft, ft_ref, atol=1e-2, rtol=1e-2))
    assert bool(jnp.allclose(out, out_ref, atol=1e-2, rtol=1e-2))

    print("KERNEL_OK")
</pallas_src>

<mosaic_0001>
module attributes {stable_mosaic.version = 11 : i64} {
  func.func @local_model_kernel(%arg0: i32, %arg1: memref<8x256x36xf32, #tpu.memory_space<vmem>>, %arg2: memref<8x128xf32, #tpu.memory_space<vmem>>, %arg3: memref<36x16xf32, #tpu.memory_space<vmem>>, %arg4: memref<1x16xf32, #tpu.memory_space<vmem>>, %arg5: memref<16x128xf32, #tpu.memory_space<vmem>>, %arg6: memref<1x128xf32, #tpu.memory_space<vmem>>, %arg7: memref<128x64xf32, #tpu.memory_space<vmem>>, %arg8: memref<1x64xf32, #tpu.memory_space<vmem>>, %arg9: memref<64x128xf32, #tpu.memory_space<vmem>>, %arg10: memref<1x128xf32, #tpu.memory_space<vmem>>, %arg11: memref<8x128xf32, #tpu.memory_space<vmem>>) attributes {dimension_semantics = [#tpu.dimension_semantics<parallel>], iteration_bounds = array<i64: 1>, scalar_prefetch = 0 : i64, scratch_operands = 0 : i64, tpu.core_type = #tpu.core_type<tc>, window_params = [{transform_indices = @transform_0, window_bounds = array<i64: 8, 256, 36>}, {transform_indices = @transform_1, window_bounds = array<i64: 8, 128>}, {pipeline_mode = #tpu.pipeline_mode<synchronous>, transform_indices = @transform_2, window_bounds = array<i64: 36, 16>}, {pipeline_mode = #tpu.pipeline_mode<synchronous>, transform_indices = @transform_3, window_bounds = array<i64: 1, 16>}, {pipeline_mode = #tpu.pipeline_mode<synchronous>, transform_indices = @transform_4, window_bounds = array<i64: 16, 128>}, {pipeline_mode = #tpu.pipeline_mode<synchronous>, transform_indices = @transform_5, window_bounds = array<i64: 1, 128>}, {pipeline_mode = #tpu.pipeline_mode<synchronous>, transform_indices = @transform_6, window_bounds = array<i64: 128, 64>}, {pipeline_mode = #tpu.pipeline_mode<synchronous>, transform_indices = @transform_7, window_bounds = array<i64: 1, 64>}, {pipeline_mode = #tpu.pipeline_mode<synchronous>, transform_indices = @transform_8, window_bounds = array<i64: 64, 128>}, {pipeline_mode = #tpu.pipeline_mode<synchronous>, transform_indices = @transform_9, window_bounds = array<i64: 1, 128>}, {transform_indices = @transform_10, window_bounds = array<i64: 8, 128>}]} {
    %c0 = arith.constant 0 : index
    %c0_0 = arith.constant 0 : index
    %c0_1 = arith.constant 0 : index
    %0 = vector.load %arg1[%c0, %c0_0, %c0_1] : memref<8x256x36xf32, #tpu.memory_space<vmem>>, vector<8x256x36xf32>
    %1 = vector.shape_cast %0 : vector<8x256x36xf32> to vector<2048x36xf32>
    %c0_2 = arith.constant 0 : index
    %c0_3 = arith.constant 0 : index
    %2 = vector.load %arg3[%c0_2, %c0_3] : memref<36x16xf32, #tpu.memory_space<vmem>>, vector<36x16xf32>
    %cst = arith.constant dense<0.000000e+00> : vector<2048x16xf32>
    %3 = tpu.matmul %1, %2, %cst {dimension_numbers = #tpu.dot_dimension_numbers<[1], [0], [0], [1], [0, 0, 1, 1], [], []>} : vector<2048x36xf32>, vector<36x16xf32>, vector<2048x16xf32> -> vector<2048x16xf32>
    %c0_4 = arith.constant 0 : index
    %c0_5 = arith.constant 0 : index
    %4 = vector.load %arg4[%c0_4, %c0_5] : memref<1x16xf32, #tpu.memory_space<vmem>>, vector<1x16xf32>
    %5 = vector.broadcast %4 : vector<1x16xf32> to vector<2048x16xf32>
    %6 = arith.addf %3, %5 : vector<2048x16xf32>
    %cst_6 = arith.constant 0.000000e+00 : f32
    %7 = vector.broadcast %cst_6 : f32 to vector<2048x16xf32>
    %8 = arith.maximumf %6, %7 : vector<2048x16xf32>
    %9 = vector.shape_cast %8 : vector<2048x16xf32> to vector<8x256x16xf32>
    %cst_7 = arith.constant dense<0.000000e+00> : vector<8x16xf32>
    %10 = vector.multi_reduction <add>, %9, %cst_7 [1] : vector<8x256x16xf32> to vector<8x16xf32>
    %cst_8 = arith.constant 3.906250e-03 : f32
    %11 = vector.broadcast %cst_8 : f32 to vector<8x16xf32>
    %12 = arith.mulf %10, %11 : vector<8x16xf32>
    %c0_9 = arith.constant 0 : index
    %c0_10 = arith.constant 0 : index
    %13 = vector.load %arg5[%c0_9, %c0_10] : memref<16x128xf32, #tpu.memory_space<vmem>>, vector<16x128xf32>
    %cst_11 = arith.constant dense<0.000000e+00> : vector<8x128xf32>
    %14 = tpu.matmul %12, %13, %cst_11 {dimension_numbers = #tpu.dot_dimension_numbers<[1], [0], [0], [1], [0, 0, 1, 1], [], []>} : vector<8x16xf32>, vector<16x128xf32>, vector<8x128xf32> -> vector<8x128xf32>
    %c0_12 = arith.constant 0 : index
    %c0_13 = arith.constant 0 : index
    %15 = vector.load %arg6[%c0_12, %c0_13] : memref<1x128xf32, #tpu.memory_space<vmem>>, vector<1x128xf32>
    %16 = vector.broadcast %15 : vector<1x128xf32> to vector<8x128xf32>
    %17 = arith.addf %14, %16 : vector<8x128xf32>
    %cst_14 = arith.constant 0.000000e+00 : f32
    %18 = vector.broadcast %cst_14 : f32 to vector<8x128xf32>
    %19 = arith.maximumf %17, %18 : vector<8x128xf32>
    %c0_15 = arith.constant 0 : index
    %c0_16 = arith.constant 0 : index
    %20 = vector.load %arg2[%c0_15, %c0_16] : memref<8x128xf32, #tpu.memory_space<vmem>>, vector<8x128xf32>
    %21 = arith.addf %19, %20 : vector<8x128xf32>
    %c0_17 = arith.constant 0 : index
    %c0_18 = arith.constant 0 : index
    %22 = vector.load %arg7[%c0_17, %c0_18] : memref<128x64xf32, #tpu.memory_space<vmem>>, vector<128x64xf32>
    %cst_19 = arith.constant dense<0.000000e+00> : vector<8x64xf32>
    %23 = tpu.matmul %21, %22, %cst_19 {dimension_numbers = #tpu.dot_dimension_numbers<[1], [0], [0], [1], [0, 0, 1, 1], [], []>} : vector<8x128xf32>, vector<128x64xf32>, vector<8x64xf32> -> vector<8x64xf32>
    %c0_20 = arith.constant 0 : index
    %c0_21 = arith.constant 0 : index
    %24 = vector.load %arg8[%c0_20, %c0_21] : memref<1x64xf32, #tpu.memory_space<vmem>>, vector<1x64xf32>
    %25 = vector.broadcast %24 : vector<1x64xf32> to vector<8x64xf32>
    %26 = arith.addf %23, %25 : vector<8x64xf32>
    %cst_22 = arith.constant 0.000000e+00 : f32
    %27 = vector.broadcast %cst_22 : f32 to vector<8x64xf32>
    %28 = arith.maximumf %26, %27 : vector<8x64xf32>
    %c0_23 = arith.constant 0 : index
    %c0_24 = arith.constant 0 : index
    %29 = vector.load %arg9[%c0_23, %c0_24] : memref<64x128xf32, #tpu.memory_space<vmem>>, vector<64x128xf32>
    %cst_25 = arith.constant dense<0.000000e+00> : vector<8x128xf32>
    %30 = tpu.matmul %28, %29, %cst_25 {dimension_numbers = #tpu.dot_dimension_numbers<[1], [0], [0], [1], [0, 0, 1, 1], [], []>} : vector<8x64xf32>, vector<64x128xf32>, vector<8x128xf32> -> vector<8x128xf32>
    %31 = arith.addf %19, %30 : vector<8x128xf32>
    %c0_26 = arith.constant 0 : index
    %c0_27 = arith.constant 0 : index
    %32 = vector.load %arg10[%c0_26, %c0_27] : memref<1x128xf32, #tpu.memory_space<vmem>>, vector<1x128xf32>
    %33 = vector.broadcast %32 : vector<1x128xf32> to vector<8x128xf32>
    %34 = arith.addf %31, %33 : vector<8x128xf32>
    %c0_28 = arith.constant 0 : index
    %c0_29 = arith.constant 0 : index
    %35 = vector.load %arg11[%c0_28, %c0_29] : memref<8x128xf32, #tpu.memory_space<vmem>>, vector<8x128xf32>
    tpu.vector_store %arg11[%c0_28, %c0_29], %34 {strides = array<i32>} : memref<8x128xf32, #tpu.memory_space<vmem>>, vector<8x128xf32>,
    return
  }
  func.func @transform_0(%arg0: i32) -> (i32, i32, i32) {
    %c0_i32 = arith.constant 0 : i32
    %c0_i32_0 = arith.constant 0 : i32
    %c0_i32_1 = arith.constant 0 : i32
    return %arg0, %c0_i32, %c0_i32_0 : i32, i32, i32
  }
  func.func @transform_1(%arg0: i32) -> (i32, i32) {
    %c0_i32 = arith.constant 0 : i32
    %c0_i32_0 = arith.constant 0 : i32
    return %arg0, %c0_i32 : i32, i32
  }
  func.func @transform_2(%arg0: i32) -> (i32, i32) {
    %c0_i32 = arith.constant 0 : i32
    %c0_i32_0 = arith.constant 0 : i32
    %c0_i32_1 = arith.constant 0 : i32
    return %c0_i32, %c0_i32_0 : i32, i32
  }
  func.func @transform_3(%arg0: i32) -> (i32, i32) {
    %c0_i32 = arith.constant 0 : i32
    %c0_i32_0 = arith.constant 0 : i32
    %c0_i32_1 = arith.constant 0 : i32
    return %c0_i32, %c0_i32_0 : i32, i32
  }
  func.func @transform_4(%arg0: i32) -> (i32, i32) {
    %c0_i32 = arith.constant 0 : i32
    %c0_i32_0 = arith.constant 0 : i32
    %c0_i32_1 = arith.constant 0 : i32
    return %c0_i32, %c0_i32_0 : i32, i32
  }
  func.func @transform_5(%arg0: i32) -> (i32, i32) {
    %c0_i32 = arith.constant 0 : i32
    %c0_i32_0 = arith.constant 0 : i32
    %c0_i32_1 = arith.constant 0 : i32
    return %c0_i32, %c0_i32_0 : i32, i32
  }
  func.func @transform_6(%arg0: i32) -> (i32, i32) {
    %c0_i32 = arith.constant 0 : i32
    %c0_i32_0 = arith.constant 0 : i32
    %c0_i32_1 = arith.constant 0 : i32
    return %c0_i32, %c0_i32_0 : i32, i32
  }
  func.func @transform_7(%arg0: i32) -> (i32, i32) {
    %c0_i32 = arith.constant 0 : i32
    %c0_i32_0 = arith.constant 0 : i32
    %c0_i32_1 = arith.constant 0 : i32
    return %c0_i32, %c0_i32_0 : i32, i32
  }
  func.func @transform_8(%arg0: i32) -> (i32, i32) {
    %c0_i32 = arith.constant 0 : i32
    %c0_i32_0 = arith.constant 0 : i32
    %c0_i32_1 = arith.constant 0 : i32
    return %c0_i32, %c0_i32_0 : i32, i32
  }
  func.func @transform_9(%arg0: i32) -> (i32, i32) {
    %c0_i32 = arith.constant 0 : i32
    %c0_i32_0 = arith.constant 0 : i32
    %c0_i32_1 = arith.constant 0 : i32
    return %c0_i32, %c0_i32_0 : i32, i32
  }
  func.func @transform_10(%arg0: i32) -> (i32, i32) {
    %c0_i32 = arith.constant 0 : i32
    %c0_i32_0 = arith.constant 0 : i32
    return %arg0, %c0_i32 : i32, i32
  }
}

</mosaic_0001>

<llo_original>
// kernel: local_model_forward.1
$region0: #{local_model_forward.1}
  #allocation0 [shape = 'u32[]', space=smem, size = 0x4, offset = 0x4, fixed_abs, tag = 'smem constant byte address 0x4 - core index']
  #allocation1 [shape = 'u32[144,128]{1,0:T(1,128)}', space=vmem, size = 0x12000, scoped, tag = 'internal scratch']
  %s0 = inlined_call_operand.vmem [shape: f32[8,256,36], index: 0, kind: input, shape index: {}]
  %s1 = inlined_call_operand.vmem [shape: f32[8,128], index: 1, kind: input, shape index: {}]
  %s2 = inlined_call_operand.vmem [shape: f32[36,16], index: 2, kind: input, shape index: {}]
  %s3 = inlined_call_operand.vmem [shape: f32[1,16], index: 3, kind: input, shape index: {}]
  %s4 = inlined_call_operand.vmem [shape: f32[16,128], index: 4, kind: input, shape index: {}]
  %s5 = inlined_call_operand.vmem [shape: f32[1,128], index: 5, kind: input, shape index: {}]
  %s6 = inlined_call_operand.vmem [shape: f32[128,64], index: 6, kind: input, shape index: {}]
  %s7 = inlined_call_operand.vmem [shape: f32[1,64], index: 7, kind: input, shape index: {}]
  %s8 = inlined_call_operand.vmem [shape: f32[64,128], index: 8, kind: input, shape index: {}]
  %s9 = inlined_call_operand.vmem [shape: f32[1,128], index: 9, kind: input, shape index: {}]
  %s10 = inlined_call_operand.vmem [shape: f32[8,128], index: 10, kind: output, shape index: {}]
  %s11 = sld [smem:[#allocation0]]
  $region50: #{local_model_forward.1} parent=0
    _
  %s13 = ssub.s32 1, %s11
  %s14 = scalar_select 0, %s13, %s11
  // Predicated region
  $region2: #{local_model_forward.1} parent=0 // pred_check
    _
  $region3: #{local_model_forward.1} parent=0 // pred_check_branch
    %16 = sbr.rel (0) target = $region5
  $region4: #{local_model_forward.1} parent=0 // pred_region
    _
  $region5: #{local_model_forward.1} parent=0 // pred_fallthru
    _
  // Predicated region
  $region6: #{local_model_forward.1} parent=0 // pred_check
    _
  $region7: #{local_model_forward.1} parent=0 // pred_check_branch
    %18 = sbr.rel (0) target = $region9
  $region8: #{local_model_forward.1} parent=0 // pred_region
    _
  $region9: #{local_model_forward.1} parent=0 // pred_fallthru
    _
  // Predicated region
  $region10: #{local_model_forward.1} parent=0 // pred_check
    _
  $region11: #{local_model_forward.1} parent=0 // pred_check_branch
    %20 = sbr.rel (0) target = $region13
  $region12: #{local_model_forward.1} parent=0 // pred_region
    _
  $region13: #{local_model_forward.1} parent=0 // pred_fallthru
    _
  // Predicated region
  $region14: #{local_model_forward.1} parent=0 // pred_check
    _
  $region15: #{local_model_forward.1} parent=0 // pred_check_branch
    %22 = sbr.rel (0) target = $region17
  $region16: #{local_model_forward.1} parent=0 // pred_region
    _
  $region17: #{local_model_forward.1} parent=0 // pred_fallthru
    _
  // Predicated region
  $region18: #{local_model_forward.1} parent=0 // pred_check
    _
  $region19: #{local_model_forward.1} parent=0 // pred_check_branch
    %24 = sbr.rel (0) target = $region21
  $region20: #{local_model_forward.1} parent=0 // pred_region
    _
  $region21: #{local_model_forward.1} parent=0 // pred_fallthru
    _
  // Predicated region
  $region22: #{local_model_forward.1} parent=0 // pred_check
    _
  $region23: #{local_model_forward.1} parent=0 // pred_check_branch
    %26 = sbr.rel (0) target = $region25
  $region24: #{local_model_forward.1} parent=0 // pred_region
    _
  $region25: #{local_model_forward.1} parent=0 // pred_fallthru
    _
  // Predicated region
  $region26: #{local_model_forward.1} parent=0 // pred_check
    _
  $region27: #{local_model_forward.1} parent=0 // pred_check_branch
    %28 = sbr.rel (0) target = $region29
  $region28: #{local_model_forward.1} parent=0 // pred_region
    _
  $region29: #{local_model_forward.1} parent=0 // pred_fallthru
    _
  // Predicated region
  $region30: #{local_model_forward.1} parent=0 // pred_check
    _
  $region31: #{local_model_forward.1} parent=0 // pred_check_branch
    %30 = sbr.rel (0) target = $region33
  $region32: #{local_model_forward.1} parent=0 // pred_region
    _
  $region33: #{local_model_forward.1} parent=0 // pred_fallthru
    _
  // Predicated region
  $region34: #{local_model_forward.1} parent=0 // pred_check
    _
  $region35: #{local_model_forward.1} parent=0 // pred_check_branch
    %32 = sbr.rel (0) target = $region37
  $region36: #{local_model_forward.1} parent=0 // pred_region
    _
  $region37: #{local_model_forward.1} parent=0 // pred_fallthru
    _
  // Predicated region
  $region38: #{local_model_forward.1} parent=0 // pred_check
    _
  $region39: #{local_model_forward.1} parent=0 // pred_check_branch
    %34 = sbr.rel (0) target = $region41
  $region40: #{local_model_forward.1} parent=0 // pred_region
    _
  $region41: #{local_model_forward.1} parent=0 // pred_fallthru
    _
  %v35 = vld [vmem:[%s0] sm:$0xff]
  %v36 = vld [vmem:[%s0 + $0x8] sm:$0xff]
  %v37 = vld [vmem:[%s0 + $0x10] sm:$0xff]
  %v38 = vld [vmem:[%s0 + $0x18] sm:$0xff]
  %v39 = vld [vmem:[%s0 + $0x20] sm:$0xff]
  %v40 = vld [vmem:[%s0 + $0x28] sm:$0xff]
  %v41 = vld [vmem:[%s0 + $0x30] sm:$0xff]
  %v42 = vld [vmem:[%s0 + $0x38] sm:$0xff]
  %v43 = vld [vmem:[%s0 + $0x40] sm:$0xff]
  %v44 = vld [vmem:[%s0 + $0x48] sm:$0xff]
  %v45 = vld [vmem:[%s0 + $0x50] sm:$0xff]
  %v46 = vld [vmem:[%s0 + $0x58] sm:$0xff]
  %v47 = vld [vmem:[%s0 + $0x60] sm:$0xff]
  %v48 = vld [vmem:[%s0 + $0x68] sm:$0xff]
  %v49 = vld [vmem:[%s0 + $0x70] sm:$0xff]
  %v50 = vld [vmem:[%s0 + $0x78] sm:$0xff]
  %v51 = vld [vmem:[%s0 + $0x80] sm:$0xff]
  %v52 = vld [vmem:[%s0 + $0x88] sm:$0xff]
  %v53 = vld [vmem:[%s0 + $0x90] sm:$0xff]
  %v54 = vld [vmem:[%s0 + $0x98] sm:$0xff]
  %v55 = vld [vmem:[%s0 + $0xa0] sm:$0xff]
  %v56 = vld [vmem:[%s0 + $0xa8] sm:$0xff]
  %v57 = vld [vmem:[%s0 + $0xb0] sm:$0xff]
  %v58 = vld [vmem:[%s0 + $0xb8] sm:$0xff]
  %v59 = vld [vmem:[%s0 + $0xc0] sm:$0xff]
  %v60 = vld [vmem:[%s0 + $0xc8] sm:$0xff]
  %v61 = vld [vmem:[%s0 + $0xd0] sm:$0xff]
  %v62 = vld [vmem:[%s0 + $0xd8] sm:$0xff]
  %v63 = vld [vmem:[%s0 + $0xe0] sm:$0xff]
  %v64 = vld [vmem:[%s0 + $0xe8] sm:$0xff]
  %v65 = vld [vmem:[%s0 + $0xf0] sm:$0xff]
  %v66 = vld [vmem:[%s0 + $0xf8] sm:$0xff]
  %v67 = vld [vmem:[%s0 + $0x100] sm:$0xff]
  %v68 = vld [vmem:[%s0 + $0x108] sm:$0xff]
  %v69 = vld [vmem:[%s0 + $0x110] sm:$0xff]
  %v70 = vld [vmem:[%s0 + $0x118] sm:$0xff]
  %v71 = vld [vmem:[%s0 + $0x120] sm:$0xff]
  %v72 = vld [vmem:[%s0 + $0x128] sm:$0xff]
  %v73 = vld [vmem:[%s0 + $0x130] sm:$0xff]
  %v74 = vld [vmem:[%s0 + $0x138] sm:$0xff]
  %v75 = vld [vmem:[%s0 + $0x140] sm:$0xff]
  %v76 = vld [vmem:[%s0 + $0x148] sm:$0xff]
  %v77 = vld [vmem:[%s0 + $0x150] sm:$0xff]
  %v78 = vld [vmem:[%s0 + $0x158] sm:$0xff]
  %v79 = vld [vmem:[%s0 + $0x160] sm:$0xff]
  %v80 = vld [vmem:[%s0 + $0x168] sm:$0xff]
  %v81 = vld [vmem:[%s0 + $0x170] sm:$0xff]
  %v82 = vld [vmem:[%s0 + $0x178] sm:$0xff]
  %v83 = vld [vmem:[%s0 + $0x180] sm:$0xff]
  %v84 = vld [vmem:[%s0 + $0x188] sm:$0xff]
  %v85 = vld [vmem:[%s0 + $0x190] sm:$0xff]
  %v86 = vld [vmem:[%s0 + $0x198] sm:$0xff]
  %v87 = vld [vmem:[%s0 + $0x1a0] sm:$0xff]
  %v88 = vld [vmem:[%s0 + $0x1a8] sm:$0xff]
  %v89 = vld [vmem:[%s0 + $0x1b0] sm:$0xff]
  %v90 = vld [vmem:[%s0 + $0x1b8] sm:$0xff]
  %v91 = vld [vmem:[%s0 + $0x1c0] sm:$0xff]
  %v92 = vld [vmem:[%s0 + $0x1c8] sm:$0xff]
  %v93 = vld [vmem:[%s0 + $0x1d0] sm:$0xff]
  %v94 = vld [vmem:[%s0 + $0x1d8] sm:$0xff]
  %v95 = vld [vmem:[%s0 + $0x1e0] sm:$0xff]
  %v96 = vld [vmem:[%s0 + $0x1e8] sm:$0xff]
  %v97 = vld [vmem:[%s0 + $0x1f0] sm:$0xff]
  %v98 = vld [vmem:[%s0 + $0x1f8] sm:$0xff]
  %v99 = vld [vmem:[%s0 + $0x200] sm:$0xff]
  %v100 = vld [vmem:[%s0 + $0x208] sm:$0xff]
  %v101 = vld [vmem:[%s0 + $0x210] sm:$0xff]
  %v102 = vld [vmem:[%s0 + $0x218] sm:$0xff]
  %v103 = vld [vmem:[%s0 + $0x220] sm:$0xff]
  %v104 = vld [vmem:[%s0 + $0x228] sm:$0xff]
  %v105 = vld [vmem:[%s0 + $0x230] sm:$0xff]
  %v106 = vld [vmem:[%s0 + $0x238] sm:$0xff]
  %v107 = vld [vmem:[%s0 + $0x240] sm:$0xff]
  %v108 = vld [vmem:[%s0 + $0x248] sm:$0xff]
  %v109 = vld [vmem:[%s0 + $0x250] sm:$0xff]
  %v110 = vld [vmem:[%s0 + $0x258] sm:$0xff]
  %v111 = vld [vmem:[%s0 + $0x260] sm:$0xff]
  %v112 = vld [vmem:[%s0 + $0x268] sm:$0xff]
  %v113 = vld [vmem:[%s0 + $0x270] sm:$0xff]
  %v114 = vld [vmem:[%s0 + $0x278] sm:$0xff]
  %v115 = vld [vmem:[%s0 + $0x280] sm:$0xff]
  %v116 = vld [vmem:[%s0 + $0x288] sm:$0xff]
  %v117 = vld [vmem:[%s0 + $0x290] sm:$0xff]
  %v118 = vld [vmem:[%s0 + $0x298] sm:$0xff]
  %v119 = vld [vmem:[%s0 + $0x2a0] sm:$0xff]
  %v120 = vld [vmem:[%s0 + $0x2a8] sm:$0xff]
  %v121 = vld [vmem:[%s0 + $0x2b0] sm:$0xff]
  %v122 = vld [vmem:[%s0 + $0x2b8] sm:$0xff]
  %v123 = vld [vmem:[%s0 + $0x2c0] sm:$0xff]
  %v124 = vld [vmem:[%s0 + $0x2c8] sm:$0xff]
  %v125 = vld [vmem:[%s0 + $0x2d0] sm:$0xff]
  %v126 = vld [vmem:[%s0 + $0x2d8] sm:$0xff]
  %v127 = vld [vmem:[%s0 + $0x2e0] sm:$0xff]
  %v128 = vld [vmem:[%s0 + $0x2e8] sm:$0xff]
  %v129 = vld [vmem:[%s0 + $0x2f0] sm:$0xff]
  %v130 = vld [vmem:[%s0 + $0x2f8] sm:$0xff]
  %v131 = vld [vmem:[%s0 + $0x300] sm:$0xff]
  %v132 = vld [vmem:[%s0 + $0x308] sm:$0xff]
  %v133 = vld [vmem:[%s0 + $0x310] sm:$0xff]
  %v134 = vld [vmem:[%s0 + $0x318] sm:$0xff]
  %v135 = vld [vmem:[%s0 + $0x320] sm:$0xff]
  %v136 = vld [vmem:[%s0 + $0x328] sm:$0xff]
  %v137 = vld [vmem:[%s0 + $0x330] sm:$0xff]
  %v138 = vld [vmem:[%s0 + $0x338] sm:$0xff]
  %v139 = vld [vmem:[%s0 + $0x340] sm:$0xff]
  %v140 = vld [vmem:[%s0 + $0x348] sm:$0xff]
  %v141 = vld [vmem:[%s0 + $0x350] sm:$0xff]
  %v142 = vld [vmem:[%s0 + $0x358] sm:$0xff]
  %v143 = vld [vmem:[%s0 + $0x360] sm:$0xff]
  %v144 = vld [vmem:[%s0 + $0x368] sm:$0xff]
  %v145 = vld [vmem:[%s0 + $0x370] sm:$0xff]
  %v146 = vld [vmem:[%s0 + $0x378] sm:$0xff]
  %v147 = vld [vmem:[%s0 + $0x380] sm:$0xff]
  %v148 = vld [vmem:[%s0 + $0x388] sm:$0xff]
  %v149 = vld [vmem:[%s0 + $0x390] sm:$0xff]
  %v150 = vld [vmem:[%s0 + $0x398] sm:$0xff]
  %v151 = vld [vmem:[%s0 + $0x3a0] sm:$0xff]
  %v152 = vld [vmem:[%s0 + $0x3a8] sm:$0xff]
  %v153 = vld [vmem:[%s0 + $0x3b0] sm:$0xff]
  %v154 = vld [vmem:[%s0 + $0x3b8] sm:$0xff]
  %v155 = vld [vmem:[%s0 + $0x3c0] sm:$0xff]
  %v156 = vld [vmem:[%s0 + $0x3c8] sm:$0xff]
  %v157 = vld [vmem:[%s0 + $0x3d0] sm:$0xff]
  %v158 = vld [vmem:[%s0 + $0x3d8] sm:$0xff]
  %v159 = vld [vmem:[%s0 + $0x3e0] sm:$0xff]
  %v160 = vld [vmem:[%s0 + $0x3e8] sm:$0xff]
  %v161 = vld [vmem:[%s0 + $0x3f0] sm:$0xff]
  %v162 = vld [vmem:[%s0 + $0x3f8] sm:$0xff]
  %v163 = vld [vmem:[%s0 + $0x400] sm:$0xff]
  %v164 = vld [vmem:[%s0 + $0x408] sm:$0xff]
  %v165 = vld [vmem:[%s0 + $0x410] sm:$0xff]
  %v166 = vld [vmem:[%s0 + $0x418] sm:$0xff]
  %v167 = vld [vmem:[%s0 + $0x420] sm:$0xff]
  %v168 = vld [vmem:[%s0 + $0x428] sm:$0xff]
  %v169 = vld [vmem:[%s0 + $0x430] sm:$0xff]
  %v170 = vld [vmem:[%s0 + $0x438] sm:$0xff]
  %v171 = vld [vmem:[%s0 + $0x440] sm:$0xff]
  %v172 = vld [vmem:[%s0 + $0x448] sm:$0xff]
  %v173 = vld [vmem:[%s0 + $0x450] sm:$0xff]
  %v174 = vld [vmem:[%s0 + $0x458] sm:$0xff]
  %v175 = vld [vmem:[%s0 + $0x460] sm:$0xff]
  %v176 = vld [vmem:[%s0 + $0x468] sm:$0xff]
  %v177 = vld [vmem:[%s0 + $0x470] sm:$0xff]
  %v178 = vld [vmem:[%s0 + $0x478] sm:$0xff]
  %v179 = vld [vmem:[%s0 + $0x480] sm:$0xff]
  %v180 = vld [vmem:[%s0 + $0x488] sm:$0xff]
  %v181 = vld [vmem:[%s0 + $0x490] sm:$0xff]
  %v182 = vld [vmem:[%s0 + $0x498] sm:$0xff]
  %v183 = vld [vmem:[%s0 + $0x4a0] sm:$0xff]
  %v184 = vld [vmem:[%s0 + $0x4a8] sm:$0xff]
  %v185 = vld [vmem:[%s0 + $0x4b0] sm:$0xff]
  %v186 = vld [vmem:[%s0 + $0x4b8] sm:$0xff]
  %v187 = vld [vmem:[%s0 + $0x4c0] sm:$0xff]
  %v188 = vld [vmem:[%s0 + $0x4c8] sm:$0xff]
  %v189 = vld [vmem:[%s0 + $0x4d0] sm:$0xff]
  %v190 = vld [vmem:[%s0 + $0x4d8] sm:$0xff]
  %v191 = vld [vmem:[%s0 + $0x4e0] sm:$0xff]
  %v192 = vld [vmem:[%s0 + $0x4e8] sm:$0xff]
  %v193 = vld [vmem:[%s0 + $0x4f0] sm:$0xff]
  %v194 = vld [vmem:[%s0 + $0x4f8] sm:$0xff]
  %v195 = vld [vmem:[%s0 + $0x500] sm:$0xff]
  %v196 = vld [vmem:[%s0 + $0x508] sm:$0xff]
  %v197 = vld [vmem:[%s0 + $0x510] sm:$0xff]
  %v198 = vld [vmem:[%s0 + $0x518] sm:$0xff]
  %v199 = vld [vmem:[%s0 + $0x520] sm:$0xff]
  %v200 = vld [vmem:[%s0 + $0x528] sm:$0xff]
  %v201 = vld [vmem:[%s0 + $0x530] sm:$0xff]
  %v202 = vld [vmem:[%s0 + $0x538] sm:$0xff]
  %v203 = vld [vmem:[%s0 + $0x540] sm:$0xff]
  %v204 = vld [vmem:[%s0 + $0x548] sm:$0xff]
  %v205 = vld [vmem:[%s0 + $0x550] sm:$0xff]
  %v206 = vld [vmem:[%s0 + $0x558] sm:$0xff]
  %v207 = vld [vmem:[%s0 + $0x560] sm:$0xff]
  %v208 = vld [vmem:[%s0 + $0x568] sm:$0xff]
  %v209 = vld [vmem:[%s0 + $0x570] sm:$0xff]
  %v210 = vld [vmem:[%s0 + $0x578] sm:$0xff]
  %v211 = vld [vmem:[%s0 + $0x580] sm:$0xff]
  %v212 = vld [vmem:[%s0 + $0x588] sm:$0xff]
  %v213 = vld [vmem:[%s0 + $0x590] sm:$0xff]
  %v214 = vld [vmem:[%s0 + $0x598] sm:$0xff]
  %v215 = vld [vmem:[%s0 + $0x5a0] sm:$0xff]
  %v216 = vld [vmem:[%s0 + $0x5a8] sm:$0xff]
  %v217 = vld [vmem:[%s0 + $0x5b0] sm:$0xff]
  %v218 = vld [vmem:[%s0 + $0x5b8] sm:$0xff]
  %v219 = vld [vmem:[%s0 + $0x5c0] sm:$0xff]
  %v220 = vld [vmem:[%s0 + $0x5c8] sm:$0xff]
  %v221 = vld [vmem:[%s0 + $0x5d0] sm:$0xff]
  %v222 = vld [vmem:[%s0 + $0x5d8] sm:$0xff]
  %v223 = vld [vmem:[%s0 + $0x5e0] sm:$0xff]
  %v224 = vld [vmem:[%s0 + $0x5e8] sm:$0xff]
  %v225 = vld [vmem:[%s0 + $0x5f0] sm:$0xff]
  %v226 = vld [vmem:[%s0 + $0x5f8] sm:$0xff]
  %v227 = vld [vmem:[%s0 + $0x600] sm:$0xff]
  %v228 = vld [vmem:[%s0 + $0x608] sm:$0xff]
  %v229 = vld [vmem:[%s0 + $0x610] sm:$0xff]
  %v230 = vld [vmem:[%s0 + $0x618] sm:$0xff]
  %v231 = vld [vmem:[%s0 + $0x620] sm:$0xff]
  %v232 = vld [vmem:[%s0 + $0x628] sm:$0xff]
  %v233 = vld [vmem:[%s0 + $0x630] sm:$0xff]
  %v234 = vld [vmem:[%s0 + $0x638] sm:$0xff]
  %v235 = vld [vmem:[%s0 + $0x640] sm:$0xff]
  %v236 = vld [vmem:[%s0 + $0x648] sm:$0xff]
  %v237 = vld [vmem:[%s0 + $0x650] sm:$0xff]
  %v238 = vld [vmem:[%s0 + $0x658] sm:$0xff]
  %v239 = vld [vmem:[%s0 + $0x660] sm:$0xff]
  %v240 = vld [vmem:[%s0 + $0x668] sm:$0xff]
  %v241 = vld [vmem:[%s0 + $0x670] sm:$0xff]
  %v242 = vld [vmem:[%s0 + $0x678] sm:$0xff]
  %v243 = vld [vmem:[%s0 + $0x680] sm:$0xff]
  %v244 = vld [vmem:[%s0 + $0x688] sm:$0xff]
  %v245 = vld [vmem:[%s0 + $0x690] sm:$0xff]
  %v246 = vld [vmem:[%s0 + $0x698] sm:$0xff]
  %v247 = vld [vmem:[%s0 + $0x6a0] sm:$0xff]
  %v248 = vld [vmem:[%s0 + $0x6a8] sm:$0xff]
  %v249 = vld [vmem:[%s0 + $0x6b0] sm:$0xff]
  %v250 = vld [vmem:[%s0 + $0x6b8] sm:$0xff]
  %v251 = vld [vmem:[%s0 + $0x6c0] sm:$0xff]
  %v252 = vld [vmem:[%s0 + $0x6c8] sm:$0xff]
  %v253 = vld [vmem:[%s0 + $0x6d0] sm:$0xff]
  %v254 = vld [vmem:[%s0 + $0x6d8] sm:$0xff]
  %v255 = vld [vmem:[%s0 + $0x6e0] sm:$0xff]
  %v256 = vld [vmem:[%s0 + $0x6e8] sm:$0xff]
  %v257 = vld [vmem:[%s0 + $0x6f0] sm:$0xff]
  %v258 = vld [vmem:[%s0 + $0x6f8] sm:$0xff]
  %v259 = vld [vmem:[%s0 + $0x700] sm:$0xff]
  %v260 = vld [vmem:[%s0 + $0x708] sm:$0xff]
  %v261 = vld [vmem:[%s0 + $0x710] sm:$0xff]
  %v262 = vld [vmem:[%s0 + $0x718] sm:$0xff]
  %v263 = vld [vmem:[%s0 + $0x720] sm:$0xff]
  %v264 = vld [vmem:[%s0 + $0x728] sm:$0xff]
  %v265 = vld [vmem:[%s0 + $0x730] sm:$0xff]
  %v266 = vld [vmem:[%s0 + $0x738] sm:$0xff]
  %v267 = vld [vmem:[%s0 + $0x740] sm:$0xff]
  %v268 = vld [vmem:[%s0 + $0x748] sm:$0xff]
  %v269 = vld [vmem:[%s0 + $0x750] sm:$0xff]
  %v270 = vld [vmem:[%s0 + $0x758] sm:$0xff]
  %v271 = vld [vmem:[%s0 + $0x760] sm:$0xff]
  %v272 = vld [vmem:[%s0 + $0x768] sm:$0xff]
  %v273 = vld [vmem:[%s0 + $0x770] sm:$0xff]
  %v274 = vld [vmem:[%s0 + $0x778] sm:$0xff]
  %v275 = vld [vmem:[%s0 + $0x780] sm:$0xff]
  %v276 = vld [vmem:[%s0 + $0x788] sm:$0xff]
  %v277 = vld [vmem:[%s0 + $0x790] sm:$0xff]
  %v278 = vld [vmem:[%s0 + $0x798] sm:$0xff]
  %v279 = vld [vmem:[%s0 + $0x7a0] sm:$0xff]
  %v280 = vld [vmem:[%s0 + $0x7a8] sm:$0xff]
  %v281 = vld [vmem:[%s0 + $0x7b0] sm:$0xff]
  %v282 = vld [vmem:[%s0 + $0x7b8] sm:$0xff]
  %v283 = vld [vmem:[%s0 + $0x7c0] sm:$0xff]
  %v284 = vld [vmem:[%s0 + $0x7c8] sm:$0xff]
  %v285 = vld [vmem:[%s0 + $0x7d0] sm:$0xff]
  %v286 = vld [vmem:[%s0 + $0x7d8] sm:$0xff]
  %v287 = vld [vmem:[%s0 + $0x7e0] sm:$0xff]
  %v288 = vld [vmem:[%s0 + $0x7e8] sm:$0xff]
  %v289 = vld [vmem:[%s0 + $0x7f0] sm:$0xff]
  %v290 = vld [vmem:[%s0 + $0x7f8] sm:$0xff]
  %v291 = vld [vmem:[%s2] sm:$0xff]
  %v292 = vld [vmem:[%s2 + $0x8] sm:$0xff]
  %v293 = vld [vmem:[%s2 + $0x10] sm:$0xff]
  %v294 = vld [vmem:[%s2 + $0x18] sm:$0xff]
  %v295 = vld [vmem:[%s2 + $0x20] sm:$0xf]
  %v296 = vld [vmem:[%s3] sm:$0x1]
  %v298 = vlaneseq
  %v299 = vshrl.u32 %v298, 7
  %v300 = vsub.s32 0, %v299
  %v301 = vrot.slane %v296, %v300
  %vm303 = vcmask 293888
  %v305 = vsel %vm303, %v35, 0
  %v308 = vsel %vm303, %v36, 0
  %v311 = vsel %vm303, %v37, 0
  %v314 = vsel %vm303, %v38, 0
  %v317 = vsel %vm303, %v39, 0
  %v320 = vsel %vm303, %v40, 0
  %v323 = vsel %vm303, %v41, 0
  %v326 = vsel %vm303, %v42, 0
  %v329 = vsel %vm303, %v43, 0
  %v332 = vsel %vm303, %v44, 0
  %v335 = vsel %vm303, %v45, 0
  %v338 = vsel %vm303, %v46, 0
  %v341 = vsel %vm303, %v47, 0
  %v344 = vsel %vm303, %v48, 0
  %v347 = vsel %vm303, %v49, 0
  %v350 = vsel %vm303, %v50, 0
  %v353 = vsel %vm303, %v51, 0
  %v356 = vsel %vm303, %v52, 0
  %v359 = vsel %vm303, %v53, 0
  %v362 = vsel %vm303, %v54, 0
  %v365 = vsel %vm303, %v55, 0
  %v368 = vsel %vm303, %v56, 0
  %v371 = vsel %vm303, %v57, 0
  %v374 = vsel %vm303, %v58, 0
  %v377 = vsel %vm303, %v59, 0
  %v380 = vsel %vm303, %v60, 0
  %v383 = vsel %vm303, %v61, 0
  %v386 = vsel %vm303, %v62, 0
  %v389 = vsel %vm303, %v63, 0
  %v392 = vsel %vm303, %v64, 0
  %v395 = vsel %vm303, %v65, 0
  %v398 = vsel %vm303, %v66, 0
  %v401 = vsel %vm303, %v67, 0
  %v404 = vsel %vm303, %v68, 0
  %v407 = vsel %vm303, %v69, 0
  %v410 = vsel %vm303, %v70, 0
  %v413 = vsel %vm303, %v71, 0
  %v416 = vsel %vm303, %v72, 0
  %v419 = vsel %vm303, %v73, 0
  %v422 = vsel %vm303, %v74, 0
  %v425 = vsel %vm303, %v75, 0
  %v428 = vsel %vm303, %v76, 0
  %v431 = vsel %vm303, %v77, 0
  %v434 = vsel %vm303, %v78, 0
  %v437 = vsel %vm303, %v79, 0
  %v440 = vsel %vm303, %v80, 0
  %v443 = vsel %vm303, %v81, 0
  %v446 = vsel %vm303, %v82, 0
  %v449 = vsel %vm303, %v83, 0
  %v452 = vsel %vm303, %v84, 0
  %v455 = vsel %vm303, %v85, 0
  %v458 = vsel %vm303, %v86, 0
  %v461 = vsel %vm303, %v87, 0
  %v464 = vsel %vm303, %v88, 0
  %v467 = vsel %vm303, %v89, 0
  %v470 = vsel %vm303, %v90, 0
  %v473 = vsel %vm303, %v91, 0
  %v476 = vsel %vm303, %v92, 0
  %v479 = vsel %vm303, %v93, 0
  %v482 = vsel %vm303, %v94, 0
  %v485 = vsel %vm303, %v95, 0
  %v488 = vsel %vm303, %v96, 0
  %v491 = vsel %vm303, %v97, 0
  %v494 = vsel %vm303, %v98, 0
  %v497 = vsel %vm303, %v99, 0
  %v500 = vsel %vm303, %v100, 0
  %v503 = vsel %vm303, %v101, 0
  %v506 = vsel %vm303, %v102, 0
  %v509 = vsel %vm303, %v103, 0
  %v512 = vsel %vm303, %v104, 0
  %v515 = vsel %vm303, %v105, 0
  %v518 = vsel %vm303, %v106, 0
  %v521 = vsel %vm303, %v107, 0
  %v524 = vsel %vm303, %v108, 0
  %v527 = vsel %vm303, %v109, 0
  %v530 = vsel %vm303, %v110, 0
  %v533 = vsel %vm303, %v111, 0
  %v536 = vsel %vm303, %v112, 0
  %v539 = vsel %vm303, %v113, 0
  %v542 = vsel %vm303, %v114, 0
  %v545 = vsel %vm303, %v115, 0
  %v548 = vsel %vm303, %v116, 0
  %v551 = vsel %vm303, %v117, 0
  %v554 = vsel %vm303, %v118, 0
  %v557 = vsel %vm303, %v119, 0
  %v560 = vsel %vm303, %v120, 0
  %v563 = vsel %vm303, %v121, 0
  %v566 = vsel %vm303, %v122, 0
  %v569 = vsel %vm303, %v123, 0
  %v572 = vsel %vm303, %v124, 0
  %v575 = vsel %vm303, %v125, 0
  %v578 = vsel %vm303, %v126, 0
  %v581 = vsel %vm303, %v127, 0
  %v584 = vsel %vm303, %v128, 0
  %v587 = vsel %vm303, %v129, 0
  %v590 = vsel %vm303, %v130, 0
  %v593 = vsel %vm303, %v131, 0
  %v596 = vsel %vm303, %v132, 0
  %v599 = vsel %vm303, %v133, 0
  %v602 = vsel %vm303, %v134, 0
  %v605 = vsel %vm303, %v135, 0
  %v608 = vsel %vm303, %v136, 0
  %v611 = vsel %vm303, %v137, 0
  %v614 = vsel %vm303, %v138, 0
  %v617 = vsel %vm303, %v139, 0
  %v620 = vsel %vm303, %v140, 0
  %v623 = vsel %vm303, %v141, 0
  %v626 = vsel %vm303, %v142, 0
  %v629 = vsel %vm303, %v143, 0
  %v632 = vsel %vm303, %v144, 0
  %v635 = vsel %vm303, %v145, 0
  %v638 = vsel %vm303, %v146, 0
  %v641 = vsel %vm303, %v147, 0
  %v644 = vsel %vm303, %v148, 0
  %v647 = vsel %vm303, %v149, 0
  %v650 = vsel %vm303, %v150, 0
  %v653 = vsel %vm303, %v151, 0
  %v656 = vsel %vm303, %v152, 0
  %v659 = vsel %vm303, %v153, 0
  %v662 = vsel %vm303, %v154, 0
  %v665 = vsel %vm303, %v155, 0
  %v668 = vsel %vm303, %v156, 0
  %v671 = vsel %vm303, %v157, 0
  %v674 = vsel %vm303, %v158, 0
  %v677 = vsel %vm303, %v159, 0
  %v680 = vsel %vm303, %v160, 0
  %v683 = vsel %vm303, %v161, 0
  %v686 = vsel %vm303, %v162, 0
  %v689 = vsel %vm303, %v163, 0
  %v692 = vsel %vm303, %v164, 0
  %v695 = vsel %vm303, %v165, 0
  %v698 = vsel %vm303, %v166, 0
  %v701 = vsel %vm303, %v167, 0
  %v704 = vsel %vm303, %v168, 0
  %v707 = vsel %vm303, %v169, 0
  %v710 = vsel %vm303, %v170, 0
  %v713 = vsel %vm303, %v171, 0
  %v716 = vsel %vm303, %v172, 0
  %v719 = vsel %vm303, %v173, 0
  %v722 = vsel %vm303, %v174, 0
  %v725 = vsel %vm303, %v175, 0
  %v728 = vsel %vm303, %v176, 0
  %v731 = vsel %vm303, %v177, 0
  %v734 = vsel %vm303, %v178, 0
  %v737 = vsel %vm303, %v179, 0
  %v740 = vsel %vm303, %v180, 0
  %v743 = vsel %vm303, %v181, 0
  %v746 = vsel %vm303, %v182, 0
  %v749 = vsel %vm303, %v183, 0
  %v752 = vsel %vm303, %v184, 0
  %v755 = vsel %vm303, %v185, 0
  %v758 = vsel %vm303, %v186, 0
  %v761 = vsel %vm303, %v187, 0
  %v764 = vsel %vm303, %v188, 0
  %v767 = vsel %vm303, %v189, 0
  %v770 = vsel %vm303, %v190, 0
  %v773 = vsel %vm303, %v191, 0
  %v776 = vsel %vm303, %v192, 0
  %v779 = vsel %vm303, %v193, 0
  %v782 = vsel %vm303, %v194, 0
  %v785 = vsel %vm303, %v195, 0
  %v788 = vsel %vm303, %v196, 0
  %v791 = vsel %vm303, %v197, 0
  %v794 = vsel %vm303, %v198, 0
  %v797 = vsel %vm303, %v199, 0
  %v800 = vsel %vm303, %v200, 0
  %v803 = vsel %vm303, %v201, 0
  %v806 = vsel %vm303, %v202, 0
  %v809 = vsel %vm303, %v203, 0
  %v812 = vsel %vm303, %v204, 0
  %v815 = vsel %vm303, %v205, 0
  %v818 = vsel %vm303, %v206, 0
  %v821 = vsel %vm303, %v207, 0
  %v824 = vsel %vm303, %v208, 0
  %v827 = vsel %vm303, %v209, 0
  %v830 = vsel %vm303, %v210, 0
  %v833 = vsel %vm303, %v211, 0
  %v836 = vsel %vm303, %v212, 0
  %v839 = vsel %vm303, %v213, 0
  %v842 = vsel %vm303, %v214, 0
  %v845 = vsel %vm303, %v215, 0
  %v848 = vsel %vm303, %v216, 0
  %v851 = vsel %vm303, %v217, 0
  %v854 = vsel %vm303, %v218, 0
  %v857 = vsel %vm303, %v219, 0
  %v860 = vsel %vm303, %v220, 0
  %v863 = vsel %vm303, %v221, 0
  %v866 = vsel %vm303, %v222, 0
  %v869 = vsel %vm303, %v223, 0
  %v872 = vsel %vm303, %v224, 0
  %v875 = vsel %vm303, %v225, 0
  %v878 = vsel %vm303, %v226, 0
  %v881 = vsel %vm303, %v227, 0
  %v884 = vsel %vm303, %v228, 0
  %v887 = vsel %vm303, %v229, 0
  %v890 = vsel %vm303, %v230, 0
  %v893 = vsel %vm303, %v231, 0
  %v896 = vsel %vm303, %v232, 0
  %v899 = vsel %vm303, %v233, 0
  %v902 = vsel %vm303, %v234, 0
  %v905 = vsel %vm303, %v235, 0
  %v908 = vsel %vm303, %v236, 0
  %v911 = vsel %vm303, %v237, 0
  %v914 = vsel %vm303, %v238, 0
  %v917 = vsel %vm303, %v239, 0
  %v920 = vsel %vm303, %v240, 0
  %v923 = vsel %vm303, %v241, 0
  %v926 = vsel %vm303, %v242, 0
  %v929 = vsel %vm303, %v243, 0
  %v932 = vsel %vm303, %v244, 0
  %v935 = vsel %vm303, %v245, 0
  %v938 = vsel %vm303, %v246, 0
  %v941 = vsel %vm303, %v247, 0
  %v944 = vsel %vm303, %v248, 0
  %v947 = vsel %vm303, %v249, 0
  %v950 = vsel %vm303, %v250, 0
  %v953 = vsel %vm303, %v251, 0
  %v956 = vsel %vm303, %v252, 0
  %v959 = vsel %vm303, %v253, 0
  %v962 = vsel %vm303, %v254, 0
  %v965 = vsel %vm303, %v255, 0
  %v968 = vsel %vm303, %v256, 0
  %v971 = vsel %vm303, %v257, 0
  %v974 = vsel %vm303, %v258, 0
  %v977 = vsel %vm303, %v259, 0
  %v980 = vsel %vm303, %v260, 0
  %v983 = vsel %vm303, %v261, 0
  %v986 = vsel %vm303, %v262, 0
  %v989 = vsel %vm303, %v263, 0
  %v992 = vsel %vm303, %v264, 0
  %v995 = vsel %vm303, %v265, 0
  %v998 = vsel %vm303, %v266, 0
  %v1001 = vsel %vm303, %v267, 0
  %v1004 = vsel %vm303, %v268, 0
  %v1007 = vsel %vm303, %v269, 0
  %v1010 = vsel %vm303, %v270, 0
  %v1013 = vsel %vm303, %v271, 0
  %v1016 = vsel %vm303, %v272, 0
  %v1019 = vsel %vm303, %v273, 0
  %v1022 = vsel %vm303, %v274, 0
  %v1025 = vsel %vm303, %v275, 0
  %v1028 = vsel %vm303, %v276, 0
  %v1031 = vsel %vm303, %v277, 0
  %v1034 = vsel %vm303, %v278, 0
  %v1037 = vsel %vm303, %v279, 0
  %v1040 = vsel %vm303, %v280, 0
  %v1043 = vsel %vm303, %v281, 0
  %v1046 = vsel %vm303, %v282, 0
  %v1049 = vsel %vm303, %v283, 0
  %v1052 = vsel %vm303, %v284, 0
  %v1055 = vsel %vm303, %v285, 0
  %v1058 = vsel %vm303, %v286, 0
  %v1061 = vsel %vm303, %v287, 0
  %v1064 = vsel %vm303, %v288, 0
  %v1067 = vsel %vm303, %v289, 0
  %v1070 = vsel %vm303, %v290, 0
  %vm1072 = vcmask 1043456
  %v1074 = vsel %vm1072, %v295, 0
  %1076 = vmatprep.subr.mxu0 0.0
  %1077 = vmatpush1.msra.mxu0 0.0
  %1078 = vmatprep.subr.mxu0 0.0
  %1079 = vmatpush1.msra.mxu0 0.0
  %1080 = vmatprep.subr.mxu0 0.0
  %1081 = vmatpush1.msra.mxu0 0.0
  %1082 = vmatprep.subr.mxu0 0.0
  %1083 = vmatpush1.msra.mxu0 0.0
  %1084 = vmatprep.subr.mxu0 0.0
  %1085 = vmatpush1.msra.mxu0 0.0
  %1086 = vmatprep.subr.mxu0 0.0
  %1087 = vmatpush1.msra.mxu0 0.0
  %1088 = vmatprep.subr.mxu0 0.0
  %1089 = vmatpush1.msra.mxu0 0.0
  %1090 = vmatprep.subr.mxu0 0.0
  %1091 = vmatpush1.msra.mxu0 0.0
  %1092 = vmatprep.subr.mxu0 0.0
  %1093 = vmatpush1.msra.mxu0 0.0
  %1094 = vmatprep.subr.mxu0 0.0
  %1095 = vmatpush1.msra.mxu0 0.0
  %1096 = vmatprep.subr.mxu0 0.0
  %1097 = vmatpush1.msra.mxu0 0.0
  %1098 = vmatprep.subr.mxu0 0.0
  %1099 = vmatpush1.msra.mxu0 %v1074
  %1100 = vmatprep.subr.mxu0 0.0
  %1101 = vmatpush1.msra.mxu0 %v294
  %1102 = vmatprep.subr.mxu0 0.0
  %1103 = vmatpush1.msra.mxu0 %v293
  %1104 = vmatprep.subr.mxu0 0.0
  %1105 = vmatpush1.msra.mxu0 %v292
  %1106 = vmatprep.subr.mxu0 0.0
  %1107 = vmatpush1.msra.mxu0 %v291
  %1108 = vmatprep.subr.mxu0 0.0
  %1109 = vmatpush2.msra.mxu0 0.0
  %1110 = vmatprep.subr.mxu0 0.0
  %1111 = vmatpush2.msra.mxu0 0.0
  %1112 = vmatprep.subr.mxu0 0.0
  %1113 = vmatpush2.msra.mxu0 0.0
  %1114 = vmatprep.subr.mxu0 0.0
  %1115 = vmatpush2.msra.mxu0 0.0
  %1116 = vmatprep.subr.mxu0 0.0
  %1117 = vmatpush2.msra.mxu0 0.0
  %1118 = vmatprep.subr.mxu0 0.0
  %1119 = vmatpush2.msra.mxu0 0.0
  %1120 = vmatprep.subr.mxu0 0.0
  %1121 = vmatpush2.msra.mxu0 0.0
  %1122 = vmatprep.subr.mxu0 0.0
  %1123 = vmatpush2.msra.mxu0 0.0
  %1124 = vmatprep.subr.mxu0 0.0
  %1125 = vmatpush2.msra.mxu0 0.0
  %1126 = vmatprep.subr.mxu0 0.0
  %1127 = vmatpush2.msra.mxu0 0.0
  %1128 = vmatprep.subr.mxu0 0.0
  %1129 = vmatpush2.msra.mxu0 0.0
  %1130 = vmatprep.subr.mxu0 0.0
  %1131 = vmatpush2.msra.mxu0 0.0
  %1132 = vmatprep.subr.mxu0 0.0
  %1133 = vmatpush2.msra.mxu0 0.0
  %1134 = vmatprep.subr.mxu0 0.0
  %1135 = vmatpush2.msra.mxu0 0.0
  %1136 = vmatprep.subr.mxu0 0.0
  %1137 = vmatpush2.msra.mxu0 0.0
  %1138 = vmatprep.subr.mxu0 0.0
  %1139 = vmatpush2.msra.mxu0 0.0
  %1140 = vmatprep.mubr.f32.mxu0 0.0
  %1141 = vmatmul.mubr.f32.gmra.mxu0 %v305
  %v1142 = vpop.f32.mrf.mxu0
  %v1143 = vadd.f32 %v301, %v1142
  %v1144 = vpop.f32.mrf.mxu0
  %1145 = vmatprep.mubr.f32.mxu0 0.0
  %1146 = vmatmul.mubr.f32.gmra.mxu0 %v308
  %v1147 = vpop.f32.mrf.mxu0
  %v1148 = vadd.f32 %v301, %v1147
  %v1149 = vpop.f32.mrf.mxu0
  %1150 = vmatprep.mubr.f32.mxu0 0.0
  %1151 = vmatmul.mubr.f32.gmra.mxu0 %v311
  %v1152 = vpop.f32.mrf.mxu0
  %v1153 = vadd.f32 %v301, %v1152
  %v1154 = vpop.f32.mrf.mxu0
  %1155 = vmatprep.mubr.f32.mxu0 0.0
  %1156 = vmatmul.mubr.f32.gmra.mxu0 %v314
  %v1157 = vpop.f32.mrf.mxu0
  %v1158 = vadd.f32 %v301, %v1157
  %v1159 = vpop.f32.mrf.mxu0
  %1160 = vmatprep.mubr.f32.mxu0 0.0
  %1161 = vmatmul.mubr.f32.gmra.mxu0 %v317
  %v1162 = vpop.f32.mrf.mxu0
  %v1163 = vadd.f32 %v301, %v1162
  %v1164 = vpop.f32.mrf.mxu0
  %1165 = vmatprep.mubr.f32.mxu0 0.0
  %1166 = vmatmul.mubr.f32.gmra.mxu0 %v320
  %v1167 = vpop.f32.mrf.mxu0
  %v1168 = vadd.f32 %v301, %v1167
  %v1169 = vpop.f32.mrf.mxu0
  %1170 = vmatprep.mubr.f32.mxu0 0.0
  %1171 = vmatmul.mubr.f32.gmra.mxu0 %v323
  %v1172 = vpop.f32.mrf.mxu0
  %v1173 = vadd.f32 %v301, %v1172
  %v1174 = vpop.f32.mrf.mxu0
  %1175 = vmatprep.mubr.f32.mxu0 0.0
  %1176 = vmatmul.mubr.f32.gmra.mxu0 %v326
  %v1177 = vpop.f32.mrf.mxu0
  %v1178 = vadd.f32 %v301, %v1177
  %v1179 = vpop.f32.mrf.mxu0
  %1180 = vmatprep.mubr.f32.mxu0 0.0
  %1181 = vmatmul.mubr.f32.gmra.mxu0 %v329
  %v1182 = vpop.f32.mrf.mxu0
  %v1183 = vadd.f32 %v301, %v1182
  %v1184 = vpop.f32.mrf.mxu0
  %1185 = vmatprep.mubr.f32.mxu0 0.0
  %1186 = vmatmul.mubr.f32.gmra.mxu0 %v332
  %v1187 = vpop.f32.mrf.mxu0
  %v1188 = vadd.f32 %v301, %v1187
  %v1189 = vpop.f32.mrf.mxu0
  %1190 = vmatprep.mubr.f32.mxu0 0.0
  %1191 = vmatmul.mubr.f32.gmra.mxu0 %v335
  %v1192 = vpop.f32.mrf.mxu0
  %v1193 = vadd.f32 %v301, %v1192
  %v1194 = vpop.f32.mrf.mxu0
  %1195 = vmatprep.mubr.f32.mxu0 0.0
  %1196 = vmatmul.mubr.f32.gmra.mxu0 %v338
  %v1197 = vpop.f32.mrf.mxu0
  %v1198 = vadd.f32 %v301, %v1197
  %v1199 = vpop.f32.mrf.mxu0
  %1200 = vmatprep.mubr.f32.mxu0 0.0
  %1201 = vmatmul.mubr.f32.gmra.mxu0 %v341
  %v1202 = vpop.f32.mrf.mxu0
  %v1203 = vadd.f32 %v301, %v1202
  %v1204 = vpop.f32.mrf.mxu0
  %1205 = vmatprep.mubr.f32.mxu0 0.0
  %1206 = vmatmul.mubr.f32.gmra.mxu0 %v344
  %v1207 = vpop.f32.mrf.mxu0
  %v1208 = vadd.f32 %v301, %v1207
  %v1209 = vpop.f32.mrf.mxu0
  %1210 = vmatprep.mubr.f32.mxu0 0.0
  %1211 = vmatmul.mubr.f32.gmra.mxu0 %v347
  %v1212 = vpop.f32.mrf.mxu0
  %v1213 = vadd.f32 %v301, %v1212
  %v1214 = vpop.f32.mrf.mxu0
  %1215 = vmatprep.mubr.f32.mxu0 0.0
  %1216 = vmatmul.mubr.f32.gmra.mxu0 %v350
  %v1217 = vpop.f32.mrf.mxu0
  %v1218 = vadd.f32 %v301, %v1217
  %v1219 = vpop.f32.mrf.mxu0
  %1220 = vmatprep.mubr.f32.mxu0 0.0
  %1221 = vmatmul.mubr.f32.gmra.mxu0 %v353
  %v1222 = vpop.f32.mrf.mxu0
  %v1223 = vadd.f32 %v301, %v1222
  %v1224 = vpop.f32.mrf.mxu0
  %1225 = vmatprep.mubr.f32.mxu0 0.0
  %1226 = vmatmul.mubr.f32.gmra.mxu0 %v356
  %v1227 = vpop.f32.mrf.mxu0
  %v1228 = vadd.f32 %v301, %v1227
  %v1229 = vpop.f32.mrf.mxu0
  %1230 = vmatprep.mubr.f32.mxu0 0.0
  %1231 = vmatmul.mubr.f32.gmra.mxu0 %v359
  %v1232 = vpop.f32.mrf.mxu0
  %v1233 = vadd.f32 %v301, %v1232
  %v1234 = vpop.f32.mrf.mxu0
  %1235 = vmatprep.mubr.f32.mxu0 0.0
  %1236 = vmatmul.mubr.f32.gmra.mxu0 %v362
  %v1237 = vpop.f32.mrf.mxu0
  %v1238 = vadd.f32 %v301, %v1237
  %v1239 = vpop.f32.mrf.mxu0
  %1240 = vmatprep.mubr.f32.mxu0 0.0
  %1241 = vmatmul.mubr.f32.gmra.mxu0 %v365
  %v1242 = vpop.f32.mrf.mxu0
  %v1243 = vadd.f32 %v301, %v1242
  %v1244 = vpop.f32.mrf.mxu0
  %1245 = vmatprep.mubr.f32.mxu0 0.0
  %1246 = vmatmul.mubr.f32.gmra.mxu0 %v368
  %v1247 = vpop.f32.mrf.mxu0
  %v1248 = vadd.f32 %v301, %v1247
  %v1249 = vpop.f32.mrf.mxu0
  %1250 = vmatprep.mubr.f32.mxu0 0.0
  %1251 = vmatmul.mubr.f32.gmra.mxu0 %v371
  %v1252 = vpop.f32.mrf.mxu0
  %v1253 = vadd.f32 %v301, %v1252
  %v1254 = vpop.f32.mrf.mxu0
  %1255 = vmatprep.mubr.f32.mxu0 0.0
  %1256 = vmatmul.mubr.f32.gmra.mxu0 %v374
  %v1257 = vpop.f32.mrf.mxu0
  %v1258 = vadd.f32 %v301, %v1257
  %v1259 = vpop.f32.mrf.mxu0
  %1260 = vmatprep.mubr.f32.mxu0 0.0
  %1261 = vmatmul.mubr.f32.gmra.mxu0 %v377
  %v1262 = vpop.f32.mrf.mxu0
  %v1263 = vadd.f32 %v301, %v1262
  %v1264 = vpop.f32.mrf.mxu0
  %1265 = vmatprep.mubr.f32.mxu0 0.0
  %1266 = vmatmul.mubr.f32.gmra.mxu0 %v380
  %v1267 = vpop.f32.mrf.mxu0
  %v1268 = vadd.f32 %v301, %v1267
  %v1269 = vpop.f32.mrf.mxu0
  %1270 = vmatprep.mubr.f32.mxu0 0.0
  %1271 = vmatmul.mubr.f32.gmra.mxu0 %v383
  %v1272 = vpop.f32.mrf.mxu0
  %v1273 = vadd.f32 %v301, %v1272
  %v1274 = vpop.f32.mrf.mxu0
  %1275 = vmatprep.mubr.f32.mxu0 0.0
  %1276 = vmatmul.mubr.f32.gmra.mxu0 %v386
  %v1277 = vpop.f32.mrf.mxu0
  %v1278 = vadd.f32 %v301, %v1277
  %v1279 = vpop.f32.mrf.mxu0
  %1280 = vmatprep.mubr.f32.mxu0 0.0
  %1281 = vmatmul.mubr.f32.gmra.mxu0 %v389
  %v1282 = vpop.f32.mrf.mxu0
  %v1283 = vadd.f32 %v301, %v1282
  %v1284 = vpop.f32.mrf.mxu0
  %1285 = vmatprep.mubr.f32.mxu0 0.0
  %1286 = vmatmul.mubr.f32.gmra.mxu0 %v392
  %v1287 = vpop.f32.mrf.mxu0
  %v1288 = vadd.f32 %v301, %v1287
  %v1289 = vpop.f32.mrf.mxu0
  %1290 = vmatprep.mubr.f32.mxu0 0.0
  %1291 = vmatmul.mubr.f32.gmra.mxu0 %v395
  %v1292 = vpop.f32.mrf.mxu0
  %v1293 = vadd.f32 %v301, %v1292
  %v1294 = vpop.f32.mrf.mxu0
  %1295 = vmatprep.mubr.f32.mxu0 0.0
  %1296 = vmatmul.mubr.f32.gmra.mxu0 %v398
  %v1297 = vpop.f32.mrf.mxu0
  %v1298 = vadd.f32 %v301, %v1297
  %v1299 = vpop.f32.mrf.mxu0
  %1300 = vmatprep.mubr.f32.mxu0 0.0
  %1301 = vmatmul.mubr.f32.gmra.mxu0 %v401
  %v1302 = vpop.f32.mrf.mxu0
  %v1303 = vadd.f32 %v301, %v1302
  %v1304 = vpop.f32.mrf.mxu0
  %1305 = vmatprep.mubr.f32.mxu0 0.0
  %1306 = vmatmul.mubr.f32.gmra.mxu0 %v404
  %v1307 = vpop.f32.mrf.mxu0
  %v1308 = vadd.f32 %v301, %v1307
  %v1309 = vpop.f32.mrf.mxu0
  %1310 = vmatprep.mubr.f32.mxu0 0.0
  %1311 = vmatmul.mubr.f32.gmra.mxu0 %v407
  %v1312 = vpop.f32.mrf.mxu0
  %v1313 = vadd.f32 %v301, %v1312
  %v1314 = vpop.f32.mrf.mxu0
  %1315 = vmatprep.mubr.f32.mxu0 0.0
  %1316 = vmatmul.mubr.f32.gmra.mxu0 %v410
  %v1317 = vpop.f32.mrf.mxu0
  %v1318 = vadd.f32 %v301, %v1317
  %v1319 = vpop.f32.mrf.mxu0
  %1320 = vmatprep.mubr.f32.mxu0 0.0
  %1321 = vmatmul.mubr.f32.gmra.mxu0 %v413
  %v1322 = vpop.f32.mrf.mxu0
  %v1323 = vadd.f32 %v301, %v1322
  %v1324 = vpop.f32.mrf.mxu0
  %1325 = vmatprep.mubr.f32.mxu0 0.0
  %1326 = vmatmul.mubr.f32.gmra.mxu0 %v416
  %v1327 = vpop.f32.mrf.mxu0
  %v1328 = vadd.f32 %v301, %v1327
  %v1329 = vpop.f32.mrf.mxu0
  %1330 = vmatprep.mubr.f32.mxu0 0.0
  %1331 = vmatmul.mubr.f32.gmra.mxu0 %v419
  %v1332 = vpop.f32.mrf.mxu0
  %v1333 = vadd.f32 %v301, %v1332
  %v1334 = vpop.f32.mrf.mxu0
  %1335 = vmatprep.mubr.f32.mxu0 0.0
  %1336 = vmatmul.mubr.f32.gmra.mxu0 %v422
  %v1337 = vpop.f32.mrf.mxu0
  %v1338 = vadd.f32 %v301, %v1337
  %v1339 = vpop.f32.mrf.mxu0
  %1340 = vmatprep.mubr.f32.mxu0 0.0
  %1341 = vmatmul.mubr.f32.gmra.mxu0 %v425
  %v1342 = vpop.f32.mrf.mxu0
  %v1343 = vadd.f32 %v301, %v1342
  %v1344 = vpop.f32.mrf.mxu0
  %1345 = vmatprep.mubr.f32.mxu0 0.0
  %1346 = vmatmul.mubr.f32.gmra.mxu0 %v428
  %v1347 = vpop.f32.mrf.mxu0
  %v1348 = vadd.f32 %v301, %v1347
  %v1349 = vpop.f32.mrf.mxu0
  %1350 = vmatprep.mubr.f32.mxu0 0.0
  %1351 = vmatmul.mubr.f32.gmra.mxu0 %v431
  %v1352 = vpop.f32.mrf.mxu0
  %v1353 = vadd.f32 %v301, %v1352
  %v1354 = vpop.f32.mrf.mxu0
  %1355 = vmatprep.mubr.f32.mxu0 0.0
  %1356 = vmatmul.mubr.f32.gmra.mxu0 %v434
  %v1357 = vpop.f32.mrf.mxu0
  %v1358 = vadd.f32 %v301, %v1357
  %v1359 = vpop.f32.mrf.mxu0
  %1360 = vmatprep.mubr.f32.mxu0 0.0
  %1361 = vmatmul.mubr.f32.gmra.mxu0 %v437
  %v1362 = vpop.f32.mrf.mxu0
  %v1363 = vadd.f32 %v301, %v1362
  %v1364 = vpop.f32.mrf.mxu0
  %1365 = vmatprep.mubr.f32.mxu0 0.0
  %1366 = vmatmul.mubr.f32.gmra.mxu0 %v440
  %v1367 = vpop.f32.mrf.mxu0
  %v1368 = vadd.f32 %v301, %v1367
  %v1369 = vpop.f32.mrf.mxu0
  %1370 = vmatprep.mubr.f32.mxu0 0.0
  %1371 = vmatmul.mubr.f32.gmra.mxu0 %v443
  %v1372 = vpop.f32.mrf.mxu0
  %v1373 = vadd.f32 %v301, %v1372
  %v1374 = vpop.f32.mrf.mxu0
  %1375 = vmatprep.mubr.f32.mxu0 0.0
  %1376 = vmatmul.mubr.f32.gmra.mxu0 %v446
  %v1377 = vpop.f32.mrf.mxu0
  %v1378 = vadd.f32 %v301, %v1377
  %v1379 = vpop.f32.mrf.mxu0
  %1380 = vmatprep.mubr.f32.mxu0 0.0
  %1381 = vmatmul.mubr.f32.gmra.mxu0 %v449
  %v1382 = vpop.f32.mrf.mxu0
  %v1383 = vadd.f32 %v301, %v1382
  %v1384 = vpop.f32.mrf.mxu0
  %1385 = vmatprep.mubr.f32.mxu0 0.0
  %1386 = vmatmul.mubr.f32.gmra.mxu0 %v452
  %v1387 = vpop.f32.mrf.mxu0
  %v1388 = vadd.f32 %v301, %v1387
  %v1389 = vpop.f32.mrf.mxu0
  %1390 = vmatprep.mubr.f32.mxu0 0.0
  %1391 = vmatmul.mubr.f32.gmra.mxu0 %v455
  %v1392 = vpop.f32.mrf.mxu0
  %v1393 = vadd.f32 %v301, %v1392
  %v1394 = vpop.f32.mrf.mxu0
  %1395 = vmatprep.mubr.f32.mxu0 0.0
  %1396 = vmatmul.mubr.f32.gmra.mxu0 %v458
  %v1397 = vpop.f32.mrf.mxu0
  %v1398 = vadd.f32 %v301, %v1397
  %v1399 = vpop.f32.mrf.mxu0
  %1400 = vmatprep.mubr.f32.mxu0 0.0
  %1401 = vmatmul.mubr.f32.gmra.mxu0 %v461
  %v1402 = vpop.f32.mrf.mxu0
  %v1403 = vadd.f32 %v301, %v1402
  %v1404 = vpop.f32.mrf.mxu0
  %1405 = vmatprep.mubr.f32.mxu0 0.0
  %1406 = vmatmul.mubr.f32.gmra.mxu0 %v464
  %v1407 = vpop.f32.mrf.mxu0
  %v1408 = vadd.f32 %v301, %v1407
  %v1409 = vpop.f32.mrf.mxu0
  %1410 = vmatprep.mubr.f32.mxu0 0.0
  %1411 = vmatmul.mubr.f32.gmra.mxu0 %v467
  %v1412 = vpop.f32.mrf.mxu0
  %v1413 = vadd.f32 %v301, %v1412
  %v1414 = vpop.f32.mrf.mxu0
  %1415 = vmatprep.mubr.f32.mxu0 0.0
  %1416 = vmatmul.mubr.f32.gmra.mxu0 %v470
  %v1417 = vpop.f32.mrf.mxu0
  %v1418 = vadd.f32 %v301, %v1417
  %v1419 = vpop.f32.mrf.mxu0
  %1420 = vmatprep.mubr.f32.mxu0 0.0
  %1421 = vmatmul.mubr.f32.gmra.mxu0 %v473
  %v1422 = vpop.f32.mrf.mxu0
  %v1423 = vadd.f32 %v301, %v1422
  %v1424 = vpop.f32.mrf.mxu0
  %1425 = vmatprep.mubr.f32.mxu0 0.0
  %1426 = vmatmul.mubr.f32.gmra.mxu0 %v476
  %v1427 = vpop.f32.mrf.mxu0
  %v1428 = vadd.f32 %v301, %v1427
  %v1429 = vpop.f32.mrf.mxu0
  %1430 = vmatprep.mubr.f32.mxu0 0.0
  %1431 = vmatmul.mubr.f32.gmra.mxu0 %v479
  %v1432 = vpop.f32.mrf.mxu0
  %v1433 = vadd.f32 %v301, %v1432
  %v1434 = vpop.f32.mrf.mxu0
  %1435 = vmatprep.mubr.f32.mxu0 0.0
  %1436 = vmatmul.mubr.f32.gmra.mxu0 %v482
  %v1437 = vpop.f32.mrf.mxu0
  %v1438 = vadd.f32 %v301, %v1437
  %v1439 = vpop.f32.mrf.mxu0
  %1440 = vmatprep.mubr.f32.mxu0 0.0
  %1441 = vmatmul.mubr.f32.gmra.mxu0 %v485
  %v1442 = vpop.f32.mrf.mxu0
  %v1443 = vadd.f32 %v301, %v1442
  %v1444 = vpop.f32.mrf.mxu0
  %1445 = vmatprep.mubr.f32.mxu0 0.0
  %1446 = vmatmul.mubr.f32.gmra.mxu0 %v488
  %v1447 = vpop.f32.mrf.mxu0
  %v1448 = vadd.f32 %v301, %v1447
  %v1449 = vpop.f32.mrf.mxu0
  %1450 = vmatprep.mubr.f32.mxu0 0.0
  %1451 = vmatmul.mubr.f32.gmra.mxu0 %v491
  %v1452 = vpop.f32.mrf.mxu0
  %v1453 = vadd.f32 %v301, %v1452
  %v1454 = vpop.f32.mrf.mxu0
  %1455 = vmatprep.mubr.f32.mxu0 0.0
  %1456 = vmatmul.mubr.f32.gmra.mxu0 %v494
  %v1457 = vpop.f32.mrf.mxu0
  %v1458 = vadd.f32 %v301, %v1457
  %v1459 = vpop.f32.mrf.mxu0
  %1460 = vmatprep.mubr.f32.mxu0 0.0
  %1461 = vmatmul.mubr.f32.gmra.mxu0 %v497
  %v1462 = vpop.f32.mrf.mxu0
  %v1463 = vadd.f32 %v301, %v1462
  %v1464 = vpop.f32.mrf.mxu0
  %1465 = vmatprep.mubr.f32.mxu0 0.0
  %1466 = vmatmul.mubr.f32.gmra.mxu0 %v500
  %v1467 = vpop.f32.mrf.mxu0
  %v1468 = vadd.f32 %v301, %v1467
  %v1469 = vpop.f32.mrf.mxu0
  %1470 = vmatprep.mubr.f32.mxu0 0.0
  %1471 = vmatmul.mubr.f32.gmra.mxu0 %v503
  %v1472 = vpop.f32.mrf.mxu0
  %v1473 = vadd.f32 %v301, %v1472
  %v1474 = vpop.f32.mrf.mxu0
  %1475 = vmatprep.mubr.f32.mxu0 0.0
  %1476 = vmatmul.mubr.f32.gmra.mxu0 %v506
  %v1477 = vpop.f32.mrf.mxu0
  %v1478 = vadd.f32 %v301, %v1477
  %v1479 = vpop.f32.mrf.mxu0
  %1480 = vmatprep.mubr.f32.mxu0 0.0
  %1481 = vmatmul.mubr.f32.gmra.mxu0 %v509
  %v1482 = vpop.f32.mrf.mxu0
  %v1483 = vadd.f32 %v301, %v1482
  %v1484 = vpop.f32.mrf.mxu0
  %1485 = vmatprep.mubr.f32.mxu0 0.0
  %1486 = vmatmul.mubr.f32.gmra.mxu0 %v512
  %v1487 = vpop.f32.mrf.mxu0
  %v1488 = vadd.f32 %v301, %v1487
  %v1489 = vpop.f32.mrf.mxu0
  %1490 = vmatprep.mubr.f32.mxu0 0.0
  %1491 = vmatmul.mubr.f32.gmra.mxu0 %v515
  %v1492 = vpop.f32.mrf.mxu0
  %v1493 = vadd.f32 %v301, %v1492
  %v1494 = vpop.f32.mrf.mxu0
  %1495 = vmatprep.mubr.f32.mxu0 0.0
  %1496 = vmatmul.mubr.f32.gmra.mxu0 %v518
  %v1497 = vpop.f32.mrf.mxu0
  %v1498 = vadd.f32 %v301, %v1497
  %v1499 = vpop.f32.mrf.mxu0
  %1500 = vmatprep.mubr.f32.mxu0 0.0
  %1501 = vmatmul.mubr.f32.gmra.mxu0 %v521
  %v1502 = vpop.f32.mrf.mxu0
  %v1503 = vadd.f32 %v301, %v1502
  %v1504 = vpop.f32.mrf.mxu0
  %1505 = vmatprep.mubr.f32.mxu0 0.0
  %1506 = vmatmul.mubr.f32.gmra.mxu0 %v524
  %v1507 = vpop.f32.mrf.mxu0
  %v1508 = vadd.f32 %v301, %v1507
  %v1509 = vpop.f32.mrf.mxu0
  %1510 = vmatprep.mubr.f32.mxu0 0.0
  %1511 = vmatmul.mubr.f32.gmra.mxu0 %v527
  %v1512 = vpop.f32.mrf.mxu0
  %v1513 = vadd.f32 %v301, %v1512
  %v1514 = vpop.f32.mrf.mxu0
  %1515 = vmatprep.mubr.f32.mxu0 0.0
  %1516 = vmatmul.mubr.f32.gmra.mxu0 %v530
  %v1517 = vpop.f32.mrf.mxu0
  %v1518 = vadd.f32 %v301, %v1517
  %v1519 = vpop.f32.mrf.mxu0
  %1520 = vmatprep.mubr.f32.mxu0 0.0
  %1521 = vmatmul.mubr.f32.gmra.mxu0 %v533
  %v1522 = vpop.f32.mrf.mxu0
  %v1523 = vadd.f32 %v301, %v1522
  %v1524 = vpop.f32.mrf.mxu0
  %1525 = vmatprep.mubr.f32.mxu0 0.0
  %1526 = vmatmul.mubr.f32.gmra.mxu0 %v536
  %v1527 = vpop.f32.mrf.mxu0
  %v1528 = vadd.f32 %v301, %v1527
  %v1529 = vpop.f32.mrf.mxu0
  %1530 = vmatprep.mubr.f32.mxu0 0.0
  %1531 = vmatmul.mubr.f32.gmra.mxu0 %v539
  %v1532 = vpop.f32.mrf.mxu0
  %v1533 = vadd.f32 %v301, %v1532
  %v1534 = vpop.f32.mrf.mxu0
  %1535 = vmatprep.mubr.f32.mxu0 0.0
  %1536 = vmatmul.mubr.f32.gmra.mxu0 %v542
  %v1537 = vpop.f32.mrf.mxu0
  %v1538 = vadd.f32 %v301, %v1537
  %v1539 = vpop.f32.mrf.mxu0
  %1540 = vmatprep.mubr.f32.mxu0 0.0
  %1541 = vmatmul.mubr.f32.gmra.mxu0 %v545
  %v1542 = vpop.f32.mrf.mxu0
  %v1543 = vadd.f32 %v301, %v1542
  %v1544 = vpop.f32.mrf.mxu0
  %1545 = vmatprep.mubr.f32.mxu0 0.0
  %1546 = vmatmul.mubr.f32.gmra.mxu0 %v548
  %v1547 = vpop.f32.mrf.mxu0
  %v1548 = vadd.f32 %v301, %v1547
  %v1549 = vpop.f32.mrf.mxu0
  %1550 = vmatprep.mubr.f32.mxu0 0.0
  %1551 = vmatmul.mubr.f32.gmra.mxu0 %v551
  %v1552 = vpop.f32.mrf.mxu0
  %v1553 = vadd.f32 %v301, %v1552
  %v1554 = vpop.f32.mrf.mxu0
  %1555 = vmatprep.mubr.f32.mxu0 0.0
  %1556 = vmatmul.mubr.f32.gmra.mxu0 %v554
  %v1557 = vpop.f32.mrf.mxu0
  %v1558 = vadd.f32 %v301, %v1557
  %v1559 = vpop.f32.mrf.mxu0
  %1560 = vmatprep.mubr.f32.mxu0 0.0
  %1561 = vmatmul.mubr.f32.gmra.mxu0 %v557
  %v1562 = vpop.f32.mrf.mxu0
  %v1563 = vadd.f32 %v301, %v1562
  %v1564 = vpop.f32.mrf.mxu0
  %1565 = vmatprep.mubr.f32.mxu0 0.0
  %1566 = vmatmul.mubr.f32.gmra.mxu0 %v560
  %v1567 = vpop.f32.mrf.mxu0
  %v1568 = vadd.f32 %v301, %v1567
  %v1569 = vpop.f32.mrf.mxu0
  %1570 = vmatprep.mubr.f32.mxu0 0.0
  %1571 = vmatmul.mubr.f32.gmra.mxu0 %v563
  %v1572 = vpop.f32.mrf.mxu0
  %v1573 = vadd.f32 %v301, %v1572
  %v1574 = vpop.f32.mrf.mxu0
  %1575 = vmatprep.mubr.f32.mxu0 0.0
  %1576 = vmatmul.mubr.f32.gmra.mxu0 %v566
  %v1577 = vpop.f32.mrf.mxu0
  %v1578 = vadd.f32 %v301, %v1577
  %v1579 = vpop.f32.mrf.mxu0
  %1580 = vmatprep.mubr.f32.mxu0 0.0
  %1581 = vmatmul.mubr.f32.gmra.mxu0 %v569
  %v1582 = vpop.f32.mrf.mxu0
  %v1583 = vadd.f32 %v301, %v1582
  %v1584 = vpop.f32.mrf.mxu0
  %1585 = vmatprep.mubr.f32.mxu0 0.0
  %1586 = vmatmul.mubr.f32.gmra.mxu0 %v572
  %v1587 = vpop.f32.mrf.mxu0
  %v1588 = vadd.f32 %v301, %v1587
  %v1589 = vpop.f32.mrf.mxu0
  %1590 = vmatprep.mubr.f32.mxu0 0.0
  %1591 = vmatmul.mubr.f32.gmra.mxu0 %v575
  %v1592 = vpop.f32.mrf.mxu0
  %v1593 = vadd.f32 %v301, %v1592
  %v1594 = vpop.f32.mrf.mxu0
  %1595 = vmatprep.mubr.f32.mxu0 0.0
  %1596 = vmatmul.mubr.f32.gmra.mxu0 %v578
  %v1597 = vpop.f32.mrf.mxu0
  %v1598 = vadd.f32 %v301, %v1597
  %v1599 = vpop.f32.mrf.mxu0
  %1600 = vmatprep.mubr.f32.mxu0 0.0
  %1601 = vmatmul.mubr.f32.gmra.mxu0 %v581
  %v1602 = vpop.f32.mrf.mxu0
  %v1603 = vadd.f32 %v301, %v1602
  %v1604 = vpop.f32.mrf.mxu0
  %1605 = vmatprep.mubr.f32.mxu0 0.0
  %1606 = vmatmul.mubr.f32.gmra.mxu0 %v584
  %v1607 = vpop.f32.mrf.mxu0
  %v1608 = vadd.f32 %v301, %v1607
  %v1609 = vpop.f32.mrf.mxu0
  %1610 = vmatprep.mubr.f32.mxu0 0.0
  %1611 = vmatmul.mubr.f32.gmra.mxu0 %v587
  %v1612 = vpop.f32.mrf.mxu0
  %v1613 = vadd.f32 %v301, %v1612
  %v1614 = vpop.f32.mrf.mxu0
  %1615 = vmatprep.mubr.f32.mxu0 0.0
  %1616 = vmatmul.mubr.f32.gmra.mxu0 %v590
  %v1617 = vpop.f32.mrf.mxu0
  %v1618 = vadd.f32 %v301, %v1617
  %v1619 = vpop.f32.mrf.mxu0
  %1620 = vmatprep.mubr.f32.mxu0 0.0
  %1621 = vmatmul.mubr.f32.gmra.mxu0 %v593
  %v1622 = vpop.f32.mrf.mxu0
  %v1623 = vadd.f32 %v301, %v1622
  %v1624 = vpop.f32.mrf.mxu0
  %1625 = vmatprep.mubr.f32.mxu0 0.0
  %1626 = vmatmul.mubr.f32.gmra.mxu0 %v596
  %v1627 = vpop.f32.mrf.mxu0
  %v1628 = vadd.f32 %v301, %v1627
  %v1629 = vpop.f32.mrf.mxu0
  %1630 = vmatprep.mubr.f32.mxu0 0.0
  %1631 = vmatmul.mubr.f32.gmra.mxu0 %v599
  %v1632 = vpop.f32.mrf.mxu0
  %v1633 = vadd.f32 %v301, %v1632
  %v1634 = vpop.f32.mrf.mxu0
  %1635 = vmatprep.mubr.f32.mxu0 0.0
  %1636 = vmatmul.mubr.f32.gmra.mxu0 %v602
  %v1637 = vpop.f32.mrf.mxu0
  %v1638 = vadd.f32 %v301, %v1637
  %v1639 = vpop.f32.mrf.mxu0
  %1640 = vmatprep.mubr.f32.mxu0 0.0
  %1641 = vmatmul.mubr.f32.gmra.mxu0 %v605
  %v1642 = vpop.f32.mrf.mxu0
  %v1643 = vadd.f32 %v301, %v1642
  %v1644 = vpop.f32.mrf.mxu0
  %1645 = vmatprep.mubr.f32.mxu0 0.0
  %1646 = vmatmul.mubr.f32.gmra.mxu0 %v608
  %v1647 = vpop.f32.mrf.mxu0
  %v1648 = vadd.f32 %v301, %v1647
  %v1649 = vpop.f32.mrf.mxu0
  %1650 = vmatprep.mubr.f32.mxu0 0.0
  %1651 = vmatmul.mubr.f32.gmra.mxu0 %v611
  %v1652 = vpop.f32.mrf.mxu0
  %v1653 = vadd.f32 %v301, %v1652
  %v1654 = vpop.f32.mrf.mxu0
  %1655 = vmatprep.mubr.f32.mxu0 0.0
  %1656 = vmatmul.mubr.f32.gmra.mxu0 %v614
  %v1657 = vpop.f32.mrf.mxu0
  %v1658 = vadd.f32 %v301, %v1657
  %v1659 = vpop.f32.mrf.mxu0
  %1660 = vmatprep.mubr.f32.mxu0 0.0
  %1661 = vmatmul.mubr.f32.gmra.mxu0 %v617
  %v1662 = vpop.f32.mrf.mxu0
  %v1663 = vadd.f32 %v301, %v1662
  %v1664 = vpop.f32.mrf.mxu0
  %1665 = vmatprep.mubr.f32.mxu0 0.0
  %1666 = vmatmul.mubr.f32.gmra.mxu0 %v620
  %v1667 = vpop.f32.mrf.mxu0
  %v1668 = vadd.f32 %v301, %v1667
  %v1669 = vpop.f32.mrf.mxu0
  %1670 = vmatprep.mubr.f32.mxu0 0.0
  %1671 = vmatmul.mubr.f32.gmra.mxu0 %v623
  %v1672 = vpop.f32.mrf.mxu0
  %v1673 = vadd.f32 %v301, %v1672
  %v1674 = vpop.f32.mrf.mxu0
  %1675 = vmatprep.mubr.f32.mxu0 0.0
  %1676 = vmatmul.mubr.f32.gmra.mxu0 %v626
  %v1677 = vpop.f32.mrf.mxu0
  %v1678 = vadd.f32 %v301, %v1677
  %v1679 = vpop.f32.mrf.mxu0
  %1680 = vmatprep.mubr.f32.mxu0 0.0
  %1681 = vmatmul.mubr.f32.gmra.mxu0 %v629
  %v1682 = vpop.f32.mrf.mxu0
  %v1683 = vadd.f32 %v301, %v1682
  %v1684 = vpop.f32.mrf.mxu0
  %1685 = vmatprep.mubr.f32.mxu0 0.0
  %1686 = vmatmul.mubr.f32.gmra.mxu0 %v632
  %v1687 = vpop.f32.mrf.mxu0
  %v1688 = vadd.f32 %v301, %v1687
  %v1689 = vpop.f32.mrf.mxu0
  %1690 = vmatprep.mubr.f32.mxu0 0.0
  %1691 = vmatmul.mubr.f32.gmra.mxu0 %v635
  %v1692 = vpop.f32.mrf.mxu0
  %v1693 = vadd.f32 %v301, %v1692
  %v1694 = vpop.f32.mrf.mxu0
  %1695 = vmatprep.mubr.f32.mxu0 0.0
  %1696 = vmatmul.mubr.f32.gmra.mxu0 %v638
  %v1697 = vpop.f32.mrf.mxu0
  %v1698 = vadd.f32 %v301, %v1697
  %v1699 = vpop.f32.mrf.mxu0
  %1700 = vmatprep.mubr.f32.mxu0 0.0
  %1701 = vmatmul.mubr.f32.gmra.mxu0 %v641
  %v1702 = vpop.f32.mrf.mxu0
  %v1703 = vadd.f32 %v301, %v1702
  %v1704 = vpop.f32.mrf.mxu0
  %1705 = vmatprep.mubr.f32.mxu0 0.0
  %1706 = vmatmul.mubr.f32.gmra.mxu0 %v644
  %v1707 = vpop.f32.mrf.mxu0
  %v1708 = vadd.f32 %v301, %v1707
  %v1709 = vpop.f32.mrf.mxu0
  %1710 = vmatprep.mubr.f32.mxu0 0.0
  %1711 = vmatmul.mubr.f32.gmra.mxu0 %v647
  %v1712 = vpop.f32.mrf.mxu0
  %v1713 = vadd.f32 %v301, %v1712
  %v1714 = vpop.f32.mrf.mxu0
  %1715 = vmatprep.mubr.f32.mxu0 0.0
  %1716 = vmatmul.mubr.f32.gmra.mxu0 %v650
  %v1717 = vpop.f32.mrf.mxu0
  %v1718 = vadd.f32 %v301, %v1717
  %v1719 = vpop.f32.mrf.mxu0
  %1720 = vmatprep.mubr.f32.mxu0 0.0
  %1721 = vmatmul.mubr.f32.gmra.mxu0 %v653
  %v1722 = vpop.f32.mrf.mxu0
  %v1723 = vadd.f32 %v301, %v1722
  %v1724 = vpop.f32.mrf.mxu0
  %1725 = vmatprep.mubr.f32.mxu0 0.0
  %1726 = vmatmul.mubr.f32.gmra.mxu0 %v656
  %v1727 = vpop.f32.mrf.mxu0
  %v1728 = vadd.f32 %v301, %v1727
  %v1729 = vpop.f32.mrf.mxu0
  %1730 = vmatprep.mubr.f32.mxu0 0.0
  %1731 = vmatmul.mubr.f32.gmra.mxu0 %v659
  %v1732 = vpop.f32.mrf.mxu0
  %v1733 = vadd.f32 %v301, %v1732
  %v1734 = vpop.f32.mrf.mxu0
  %1735 = vmatprep.mubr.f32.mxu0 0.0
  %1736 = vmatmul.mubr.f32.gmra.mxu0 %v662
  %v1737 = vpop.f32.mrf.mxu0
  %v1738 = vadd.f32 %v301, %v1737
  %v1739 = vpop.f32.mrf.mxu0
  %1740 = vmatprep.mubr.f32.mxu0 0.0
  %1741 = vmatmul.mubr.f32.gmra.mxu0 %v665
  %v1742 = vpop.f32.mrf.mxu0
  %v1743 = vadd.f32 %v301, %v1742
  %v1744 = vpop.f32.mrf.mxu0
  %1745 = vmatprep.mubr.f32.mxu0 0.0
  %1746 = vmatmul.mubr.f32.gmra.mxu0 %v668
  %v1747 = vpop.f32.mrf.mxu0
  %v1748 = vadd.f32 %v301, %v1747
  %v1749 = vpop.f32.mrf.mxu0
  %1750 = vmatprep.mubr.f32.mxu0 0.0
  %1751 = vmatmul.mubr.f32.gmra.mxu0 %v671
  %v1752 = vpop.f32.mrf.mxu0
  %v1753 = vadd.f32 %v301, %v1752
  %v1754 = vpop.f32.mrf.mxu0
  %1755 = vmatprep.mubr.f32.mxu0 0.0
  %1756 = vmatmul.mubr.f32.gmra.mxu0 %v674
  %v1757 = vpop.f32.mrf.mxu0
  %v1758 = vadd.f32 %v301, %v1757
  %v1759 = vpop.f32.mrf.mxu0
  %1760 = vmatprep.mubr.f32.mxu0 0.0
  %1761 = vmatmul.mubr.f32.gmra.mxu0 %v677
  %v1762 = vpop.f32.mrf.mxu0
  %v1763 = vadd.f32 %v301, %v1762
  %v1764 = vpop.f32.mrf.mxu0
  %1765 = vmatprep.mubr.f32.mxu0 0.0
  %1766 = vmatmul.mubr.f32.gmra.mxu0 %v680
  %v1767 = vpop.f32.mrf.mxu0
  %v1768 = vadd.f32 %v301, %v1767
  %v1769 = vpop.f32.mrf.mxu0
  %1770 = vmatprep.mubr.f32.mxu0 0.0
  %1771 = vmatmul.mubr.f32.gmra.mxu0 %v683
  %v1772 = vpop.f32.mrf.mxu0
  %v1773 = vadd.f32 %v301, %v1772
  %v1774 = vpop.f32.mrf.mxu0
  %1775 = vmatprep.mubr.f32.mxu0 0.0
  %1776 = vmatmul.mubr.f32.gmra.mxu0 %v686
  %v1777 = vpop.f32.mrf.mxu0
  %v1778 = vadd.f32 %v301, %v1777
  %v1779 = vpop.f32.mrf.mxu0
  %1780 = vmatprep.mubr.f32.mxu0 0.0
  %1781 = vmatmul.mubr.f32.gmra.mxu0 %v689
  %v1782 = vpop.f32.mrf.mxu0
  %v1783 = vadd.f32 %v301, %v1782
  %v1784 = vpop.f32.mrf.mxu0
  %1785 = vmatprep.mubr.f32.mxu0 0.0
  %1786 = vmatmul.mubr.f32.gmra.mxu0 %v692
  %v1787 = vpop.f32.mrf.mxu0
  %v1788 = vadd.f32 %v301, %v1787
  %v1789 = vpop.f32.mrf.mxu0
  %1790 = vmatprep.mubr.f32.mxu0 0.0
  %1791 = vmatmul.mubr.f32.gmra.mxu0 %v695
  %v1792 = vpop.f32.mrf.mxu0
  %v1793 = vadd.f32 %v301, %v1792
  %v1794 = vpop.f32.mrf.mxu0
  %1795 = vmatprep.mubr.f32.mxu0 0.0
  %1796 = vmatmul.mubr.f32.gmra.mxu0 %v698
  %v1797 = vpop.f32.mrf.mxu0
  %v1798 = vadd.f32 %v301, %v1797
  %v1799 = vpop.f32.mrf.mxu0
  %1800 = vmatprep.mubr.f32.mxu0 0.0
  %1801 = vmatmul.mubr.f32.gmra.mxu0 %v701
  %v1802 = vpop.f32.mrf.mxu0
  %v1803 = vadd.f32 %v301, %v1802
  %v1804 = vpop.f32.mrf.mxu0
  %1805 = vmatprep.mubr.f32.mxu0 0.0
  %1806 = vmatmul.mubr.f32.gmra.mxu0 %v704
  %v1807 = vpop.f32.mrf.mxu0
  %v1808 = vadd.f32 %v301, %v1807
  %v1809 = vpop.f32.mrf.mxu0
  %1810 = vmatprep.mubr.f32.mxu0 0.0
  %1811 = vmatmul.mubr.f32.gmra.mxu0 %v707
  %v1812 = vpop.f32.mrf.mxu0
  %v1813 = vadd.f32 %v301, %v1812
  %v1814 = vpop.f32.mrf.mxu0
  %1815 = vmatprep.mubr.f32.mxu0 0.0
  %1816 = vmatmul.mubr.f32.gmra.mxu0 %v710
  %v1817 = vpop.f32.mrf.mxu0
  %v1818 = vadd.f32 %v301, %v1817
  %v1819 = vpop.f32.mrf.mxu0
  %1820 = vmatprep.mubr.f32.mxu0 0.0
  %1821 = vmatmul.mubr.f32.gmra.mxu0 %v713
  %v1822 = vpop.f32.mrf.mxu0
  %v1823 = vadd.f32 %v301, %v1822
  %v1824 = vpop.f32.mrf.mxu0
  %1825 = vmatprep.mubr.f32.mxu0 0.0
  %1826 = vmatmul.mubr.f32.gmra.mxu0 %v716
  %v1827 = vpop.f32.mrf.mxu0
  %v1828 = vadd.f32 %v301, %v1827
  %v1829 = vpop.f32.mrf.mxu0
  %1830 = vmatprep.mubr.f32.mxu0 0.0
  %1831 = vmatmul.mubr.f32.gmra.mxu0 %v719
  %v1832 = vpop.f32.mrf.mxu0
  %v1833 = vadd.f32 %v301, %v1832
  %v1834 = vpop.f32.mrf.mxu0
  %1835 = vmatprep.mubr.f32.mxu0 0.0
  %1836 = vmatmul.mubr.f32.gmra.mxu0 %v722
  %v1837 = vpop.f32.mrf.mxu0
  %v1838 = vadd.f32 %v301, %v1837
  %v1839 = vpop.f32.mrf.mxu0
  %1840 = vmatprep.mubr.f32.mxu0 0.0
  %1841 = vmatmul.mubr.f32.gmra.mxu0 %v725
  %v1842 = vpop.f32.mrf.mxu0
  %v1843 = vadd.f32 %v301, %v1842
  %v1844 = vpop.f32.mrf.mxu0
  %1845 = vmatprep.mubr.f32.mxu0 0.0
  %1846 = vmatmul.mubr.f32.gmra.mxu0 %v728
  %v1847 = vpop.f32.mrf.mxu0
  %v1848 = vadd.f32 %v301, %v1847
  %v1849 = vpop.f32.mrf.mxu0
  %1850 = vmatprep.mubr.f32.mxu0 0.0
  %1851 = vmatmul.mubr.f32.gmra.mxu0 %v731
  %v1852 = vpop.f32.mrf.mxu0
  %v1853 = vadd.f32 %v301, %v1852
  %v1854 = vpop.f32.mrf.mxu0
  %1855 = vmatprep.mubr.f32.mxu0 0.0
  %1856 = vmatmul.mubr.f32.gmra.mxu0 %v734
  %v1857 = vpop.f32.mrf.mxu0
  %v1858 = vadd.f32 %v301, %v1857
  %v1859 = vpop.f32.mrf.mxu0
  %1860 = vmatprep.mubr.f32.mxu0 0.0
  %1861 = vmatmul.mubr.f32.gmra.mxu0 %v737
  %v1862 = vpop.f32.mrf.mxu0
  %v1863 = vadd.f32 %v301, %v1862
  %v1864 = vpop.f32.mrf.mxu0
  %1865 = vmatprep.mubr.f32.mxu0 0.0
  %1866 = vmatmul.mubr.f32.gmra.mxu0 %v740
  %v1867 = vpop.f32.mrf.mxu0
  %v1868 = vadd.f32 %v301, %v1867
  %v1869 = vpop.f32.mrf.mxu0
  %1870 = vmatprep.mubr.f32.mxu0 0.0
  %1871 = vmatmul.mubr.f32.gmra.mxu0 %v743
  %v1872 = vpop.f32.mrf.mxu0
  %v1873 = vadd.f32 %v301, %v1872
  %v1874 = vpop.f32.mrf.mxu0
  %1875 = vmatprep.mubr.f32.mxu0 0.0
  %1876 = vmatmul.mubr.f32.gmra.mxu0 %v746
  %v1877 = vpop.f32.mrf.mxu0
  %v1878 = vadd.f32 %v301, %v1877
  %v1879 = vpop.f32.mrf.mxu0
  %1880 = vmatprep.mubr.f32.mxu0 0.0
  %1881 = vmatmul.mubr.f32.gmra.mxu0 %v749
  %v1882 = vpop.f32.mrf.mxu0
  %v1883 = vadd.f32 %v301, %v1882
  %v1884 = vpop.f32.mrf.mxu0
  %1885 = vmatprep.mubr.f32.mxu0 0.0
  %1886 = vmatmul.mubr.f32.gmra.mxu0 %v752
  %v1887 = vpop.f32.mrf.mxu0
  %v1888 = vadd.f32 %v301, %v1887
  %v1889 = vpop.f32.mrf.mxu0
  %1890 = vmatprep.mubr.f32.mxu0 0.0
  %1891 = vmatmul.mubr.f32.gmra.mxu0 %v755
  %v1892 = vpop.f32.mrf.mxu0
  %v1893 = vadd.f32 %v301, %v1892
  %v1894 = vpop.f32.mrf.mxu0
  %1895 = vmatprep.mubr.f32.mxu0 0.0
  %1896 = vmatmul.mubr.f32.gmra.mxu0 %v758
  %v1897 = vpop.f32.mrf.mxu0
  %v1898 = vadd.f32 %v301, %v1897
  %v1899 = vpop.f32.mrf.mxu0
  %1900 = vmatprep.mubr.f32.mxu0 0.0
  %1901 = vmatmul.mubr.f32.gmra.mxu0 %v761
  %v1902 = vpop.f32.mrf.mxu0
  %v1903 = vadd.f32 %v301, %v1902
  %v1904 = vpop.f32.mrf.mxu0
  %1905 = vmatprep.mubr.f32.mxu0 0.0
  %1906 = vmatmul.mubr.f32.gmra.mxu0 %v764
  %v1907 = vpop.f32.mrf.mxu0
  %v1908 = vadd.f32 %v301, %v1907
  %v1909 = vpop.f32.mrf.mxu0
  %1910 = vmatprep.mubr.f32.mxu0 0.0
  %1911 = vmatmul.mubr.f32.gmra.mxu0 %v767
  %v1912 = vpop.f32.mrf.mxu0
  %v1913 = vadd.f32 %v301, %v1912
  %v1914 = vpop.f32.mrf.mxu0
  %1915 = vmatprep.mubr.f32.mxu0 0.0
  %1916 = vmatmul.mubr.f32.gmra.mxu0 %v770
  %v1917 = vpop.f32.mrf.mxu0
  %v1918 = vadd.f32 %v301, %v1917
  %v1919 = vpop.f32.mrf.mxu0
  %1920 = vmatprep.mubr.f32.mxu0 0.0
  %1921 = vmatmul.mubr.f32.gmra.mxu0 %v773
  %v1922 = vpop.f32.mrf.mxu0
  %v1923 = vadd.f32 %v301, %v1922
  %v1924 = vpop.f32.mrf.mxu0
  %1925 = vmatprep.mubr.f32.mxu0 0.0
  %1926 = vmatmul.mubr.f32.gmra.mxu0 %v776
  %v1927 = vpop.f32.mrf.mxu0
  %v1928 = vadd.f32 %v301, %v1927
  %v1929 = vpop.f32.mrf.mxu0
  %1930 = vmatprep.mubr.f32.mxu0 0.0
  %1931 = vmatmul.mubr.f32.gmra.mxu0 %v779
  %v1932 = vpop.f32.mrf.mxu0
  %v1933 = vadd.f32 %v301, %v1932
  %v1934 = vpop.f32.mrf.mxu0
  %1935 = vmatprep.mubr.f32.mxu0 0.0
  %1936 = vmatmul.mubr.f32.gmra.mxu0 %v782
  %v1937 = vpop.f32.mrf.mxu0
  %v1938 = vadd.f32 %v301, %v1937
  %v1939 = vpop.f32.mrf.mxu0
  %1940 = vmatprep.mubr.f32.mxu0 0.0
  %1941 = vmatmul.mubr.f32.gmra.mxu0 %v785
  %v1942 = vpop.f32.mrf.mxu0
  %v1943 = vadd.f32 %v301, %v1942
  %v1944 = vpop.f32.mrf.mxu0
  %1945 = vmatprep.mubr.f32.mxu0 0.0
  %1946 = vmatmul.mubr.f32.gmra.mxu0 %v788
  %v1947 = vpop.f32.mrf.mxu0
  %v1948 = vadd.f32 %v301, %v1947
  %v1949 = vpop.f32.mrf.mxu0
  %1950 = vmatprep.mubr.f32.mxu0 0.0
  %1951 = vmatmul.mubr.f32.gmra.mxu0 %v791
  %v1952 = vpop.f32.mrf.mxu0
  %v1953 = vadd.f32 %v301, %v1952
  %v1954 = vpop.f32.mrf.mxu0
  %1955 = vmatprep.mubr.f32.mxu0 0.0
  %1956 = vmatmul.mubr.f32.gmra.mxu0 %v794
  %v1957 = vpop.f32.mrf.mxu0
  %v1958 = vadd.f32 %v301, %v1957
  %v1959 = vpop.f32.mrf.mxu0
  %1960 = vmatprep.mubr.f32.mxu0 0.0
  %1961 = vmatmul.mubr.f32.gmra.mxu0 %v797
  %v1962 = vpop.f32.mrf.mxu0
  %v1963 = vadd.f32 %v301, %v1962
  %v1964 = vpop.f32.mrf.mxu0
  %1965 = vmatprep.mubr.f32.mxu0 0.0
  %1966 = vmatmul.mubr.f32.gmra.mxu0 %v800
  %v1967 = vpop.f32.mrf.mxu0
  %v1968 = vadd.f32 %v301, %v1967
  %v1969 = vpop.f32.mrf.mxu0
  %1970 = vmatprep.mubr.f32.mxu0 0.0
  %1971 = vmatmul.mubr.f32.gmra.mxu0 %v803
  %v1972 = vpop.f32.mrf.mxu0
  %v1973 = vadd.f32 %v301, %v1972
  %v1974 = vpop.f32.mrf.mxu0
  %1975 = vmatprep.mubr.f32.mxu0 0.0
  %1976 = vmatmul.mubr.f32.gmra.mxu0 %v806
  %v1977 = vpop.f32.mrf.mxu0
  %v1978 = vadd.f32 %v301, %v1977
  %v1979 = vpop.f32.mrf.mxu0
  %1980 = vmatprep.mubr.f32.mxu0 0.0
  %1981 = vmatmul.mubr.f32.gmra.mxu0 %v809
  %v1982 = vpop.f32.mrf.mxu0
  %v1983 = vadd.f32 %v301, %v1982
  %v1984 = vpop.f32.mrf.mxu0
  %1985 = vmatprep.mubr.f32.mxu0 0.0
  %1986 = vmatmul.mubr.f32.gmra.mxu0 %v812
  %v1987 = vpop.f32.mrf.mxu0
  %v1988 = vadd.f32 %v301, %v1987
  %v1989 = vpop.f32.mrf.mxu0
  %1990 = vmatprep.mubr.f32.mxu0 0.0
  %1991 = vmatmul.mubr.f32.gmra.mxu0 %v815
  %v1992 = vpop.f32.mrf.mxu0
  %v1993 = vadd.f32 %v301, %v1992
  %v1994 = vpop.f32.mrf.mxu0
  %1995 = vmatprep.mubr.f32.mxu0 0.0
  %1996 = vmatmul.mubr.f32.gmra.mxu0 %v818
  %v1997 = vpop.f32.mrf.mxu0
  %v1998 = vadd.f32 %v301, %v1997
  %v1999 = vpop.f32.mrf.mxu0
  %2000 = vmatprep.mubr.f32.mxu0 0.0
  %2001 = vmatmul.mubr.f32.gmra.mxu0 %v821
  %v2002 = vpop.f32.mrf.mxu0
  %v2003 = vadd.f32 %v301, %v2002
  %v2004 = vpop.f32.mrf.mxu0
  %2005 = vmatprep.mubr.f32.mxu0 0.0
  %2006 = vmatmul.mubr.f32.gmra.mxu0 %v824
  %v2007 = vpop.f32.mrf.mxu0
  %v2008 = vadd.f32 %v301, %v2007
  %v2009 = vpop.f32.mrf.mxu0
  %2010 = vmatprep.mubr.f32.mxu0 0.0
  %2011 = vmatmul.mubr.f32.gmra.mxu0 %v827
  %v2012 = vpop.f32.mrf.mxu0
  %v2013 = vadd.f32 %v301, %v2012
  %v2014 = vpop.f32.mrf.mxu0
  %2015 = vmatprep.mubr.f32.mxu0 0.0
  %2016 = vmatmul.mubr.f32.gmra.mxu0 %v830
  %v2017 = vpop.f32.mrf.mxu0
  %v2018 = vadd.f32 %v301, %v2017
  %v2019 = vpop.f32.mrf.mxu0
  %2020 = vmatprep.mubr.f32.mxu0 0.0
  %2021 = vmatmul.mubr.f32.gmra.mxu0 %v833
  %v2022 = vpop.f32.mrf.mxu0
  %v2023 = vadd.f32 %v301, %v2022
  %v2024 = vpop.f32.mrf.mxu0
  %2025 = vmatprep.mubr.f32.mxu0 0.0
  %2026 = vmatmul.mubr.f32.gmra.mxu0 %v836
  %v2027 = vpop.f32.mrf.mxu0
  %v2028 = vadd.f32 %v301, %v2027
  %v2029 = vpop.f32.mrf.mxu0
  %2030 = vmatprep.mubr.f32.mxu0 0.0
  %2031 = vmatmul.mubr.f32.gmra.mxu0 %v839
  %v2032 = vpop.f32.mrf.mxu0
  %v2033 = vadd.f32 %v301, %v2032
  %v2034 = vpop.f32.mrf.mxu0
  %2035 = vmatprep.mubr.f32.mxu0 0.0
  %2036 = vmatmul.mubr.f32.gmra.mxu0 %v842
  %v2037 = vpop.f32.mrf.mxu0
  %v2038 = vadd.f32 %v301, %v2037
  %v2039 = vpop.f32.mrf.mxu0
  %2040 = vmatprep.mubr.f32.mxu0 0.0
  %2041 = vmatmul.mubr.f32.gmra.mxu0 %v845
  %v2042 = vpop.f32.mrf.mxu0
  %v2043 = vadd.f32 %v301, %v2042
  %v2044 = vpop.f32.mrf.mxu0
  %2045 = vmatprep.mubr.f32.mxu0 0.0
  %2046 = vmatmul.mubr.f32.gmra.mxu0 %v848
  %v2047 = vpop.f32.mrf.mxu0
  %v2048 = vadd.f32 %v301, %v2047
  %v2049 = vpop.f32.mrf.mxu0
  %2050 = vmatprep.mubr.f32.mxu0 0.0
  %2051 = vmatmul.mubr.f32.gmra.mxu0 %v851
  %v2052 = vpop.f32.mrf.mxu0
  %v2053 = vadd.f32 %v301, %v2052
  %v2054 = vpop.f32.mrf.mxu0
  %2055 = vmatprep.mubr.f32.mxu0 0.0
  %2056 = vmatmul.mubr.f32.gmra.mxu0 %v854
  %v2057 = vpop.f32.mrf.mxu0
  %v2058 = vadd.f32 %v301, %v2057
  %v2059 = vpop.f32.mrf.mxu0
  %2060 = vmatprep.mubr.f32.mxu0 0.0
  %2061 = vmatmul.mubr.f32.gmra.mxu0 %v857
  %v2062 = vpop.f32.mrf.mxu0
  %v2063 = vadd.f32 %v301, %v2062
  %v2064 = vpop.f32.mrf.mxu0
  %2065 = vmatprep.mubr.f32.mxu0 0.0
  %2066 = vmatmul.mubr.f32.gmra.mxu0 %v860
  %v2067 = vpop.f32.mrf.mxu0
  %v2068 = vadd.f32 %v301, %v2067
  %v2069 = vpop.f32.mrf.mxu0
  %2070 = vmatprep.mubr.f32.mxu0 0.0
  %2071 = vmatmul.mubr.f32.gmra.mxu0 %v863
  %v2072 = vpop.f32.mrf.mxu0
  %v2073 = vadd.f32 %v301, %v2072
  %v2074 = vpop.f32.mrf.mxu0
  %2075 = vmatprep.mubr.f32.mxu0 0.0
  %2076 = vmatmul.mubr.f32.gmra.mxu0 %v866
  %v2077 = vpop.f32.mrf.mxu0
  %v2078 = vadd.f32 %v301, %v2077
  %v2079 = vpop.f32.mrf.mxu0
  %2080 = vmatprep.mubr.f32.mxu0 0.0
  %2081 = vmatmul.mubr.f32.gmra.mxu0 %v869
  %v2082 = vpop.f32.mrf.mxu0
  %v2083 = vadd.f32 %v301, %v2082
  %v2084 = vpop.f32.mrf.mxu0
  %2085 = vmatprep.mubr.f32.mxu0 0.0
  %2086 = vmatmul.mubr.f32.gmra.mxu0 %v872
  %v2087 = vpop.f32.mrf.mxu0
  %v2088 = vadd.f32 %v301, %v2087
  %v2089 = vpop.f32.mrf.mxu0
  %2090 = vmatprep.mubr.f32.mxu0 0.0
  %2091 = vmatmul.mubr.f32.gmra.mxu0 %v875
  %v2092 = vpop.f32.mrf.mxu0
  %v2093 = vadd.f32 %v301, %v2092
  %v2094 = vpop.f32.mrf.mxu0
  %2095 = vmatprep.mubr.f32.mxu0 0.0
  %2096 = vmatmul.mubr.f32.gmra.mxu0 %v878
  %v2097 = vpop.f32.mrf.mxu0
  %v2098 = vadd.f32 %v301, %v2097
  %v2099 = vpop.f32.mrf.mxu0
  %2100 = vmatprep.mubr.f32.mxu0 0.0
  %2101 = vmatmul.mubr.f32.gmra.mxu0 %v881
  %v2102 = vpop.f32.mrf.mxu0
  %v2103 = vadd.f32 %v301, %v2102
  %v2104 = vpop.f32.mrf.mxu0
  %2105 = vmatprep.mubr.f32.mxu0 0.0
  %2106 = vmatmul.mubr.f32.gmra.mxu0 %v884
  %v2107 = vpop.f32.mrf.mxu0
  %v2108 = vadd.f32 %v301, %v2107
  %v2109 = vpop.f32.mrf.mxu0
  %2110 = vmatprep.mubr.f32.mxu0 0.0
  %2111 = vmatmul.mubr.f32.gmra.mxu0 %v887
  %v2112 = vpop.f32.mrf.mxu0
  %v2113 = vadd.f32 %v301, %v2112
  %v2114 = vpop.f32.mrf.mxu0
  %2115 = vmatprep.mubr.f32.mxu0 0.0
  %2116 = vmatmul.mubr.f32.gmra.mxu0 %v890
  %v2117 = vpop.f32.mrf.mxu0
  %v2118 = vadd.f32 %v301, %v2117
  %v2119 = vpop.f32.mrf.mxu0
  %2120 = vmatprep.mubr.f32.mxu0 0.0
  %2121 = vmatmul.mubr.f32.gmra.mxu0 %v893
  %v2122 = vpop.f32.mrf.mxu0
  %v2123 = vadd.f32 %v301, %v2122
  %v2124 = vpop.f32.mrf.mxu0
  %2125 = vmatprep.mubr.f32.mxu0 0.0
  %2126 = vmatmul.mubr.f32.gmra.mxu0 %v896
  %v2127 = vpop.f32.mrf.mxu0
  %v2128 = vadd.f32 %v301, %v2127
  %v2129 = vpop.f32.mrf.mxu0
  %2130 = vmatprep.mubr.f32.mxu0 0.0
  %2131 = vmatmul.mubr.f32.gmra.mxu0 %v899
  %v2132 = vpop.f32.mrf.mxu0
  %v2133 = vadd.f32 %v301, %v2132
  %v2134 = vpop.f32.mrf.mxu0
  %2135 = vmatprep.mubr.f32.mxu0 0.0
  %2136 = vmatmul.mubr.f32.gmra.mxu0 %v902
  %v2137 = vpop.f32.mrf.mxu0
  %v2138 = vadd.f32 %v301, %v2137
  %v2139 = vpop.f32.mrf.mxu0
  %2140 = vmatprep.mubr.f32.mxu0 0.0
  %2141 = vmatmul.mubr.f32.gmra.mxu0 %v905
  %v2142 = vpop.f32.mrf.mxu0
  %v2143 = vadd.f32 %v301, %v2142
  %v2144 = vpop.f32.mrf.mxu0
  %2145 = vmatprep.mubr.f32.mxu0 0.0
  %2146 = vmatmul.mubr.f32.gmra.mxu0 %v908
  %v2147 = vpop.f32.mrf.mxu0
  %v2148 = vadd.f32 %v301, %v2147
  %v2149 = vpop.f32.mrf.mxu0
  %2150 = vmatprep.mubr.f32.mxu0 0.0
  %2151 = vmatmul.mubr.f32.gmra.mxu0 %v911
  %v2152 = vpop.f32.mrf.mxu0
  %v2153 = vadd.f32 %v301, %v2152
  %v2154 = vpop.f32.mrf.mxu0
  %2155 = vmatprep.mubr.f32.mxu0 0.0
  %2156 = vmatmul.mubr.f32.gmra.mxu0 %v914
  %v2157 = vpop.f32.mrf.mxu0
  %v2158 = vadd.f32 %v301, %v2157
  %v2159 = vpop.f32.mrf.mxu0
  %2160 = vmatprep.mubr.f32.mxu0 0.0
  %2161 = vmatmul.mubr.f32.gmra.mxu0 %v917
  %v2162 = vpop.f32.mrf.mxu0
  %v2163 = vadd.f32 %v301, %v2162
  %v2164 = vpop.f32.mrf.mxu0
  %2165 = vmatprep.mubr.f32.mxu0 0.0
  %2166 = vmatmul.mubr.f32.gmra.mxu0 %v920
  %v2167 = vpop.f32.mrf.mxu0
  %v2168 = vadd.f32 %v301, %v2167
  %v2169 = vpop.f32.mrf.mxu0
  %2170 = vmatprep.mubr.f32.mxu0 0.0
  %2171 = vmatmul.mubr.f32.gmra.mxu0 %v923
  %v2172 = vpop.f32.mrf.mxu0
  %v2173 = vadd.f32 %v301, %v2172
  %v2174 = vpop.f32.mrf.mxu0
  %2175 = vmatprep.mubr.f32.mxu0 0.0
  %2176 = vmatmul.mubr.f32.gmra.mxu0 %v926
  %v2177 = vpop.f32.mrf.mxu0
  %v2178 = vadd.f32 %v301, %v2177
  %v2179 = vpop.f32.mrf.mxu0
  %2180 = vmatprep.mubr.f32.mxu0 0.0
  %2181 = vmatmul.mubr.f32.gmra.mxu0 %v929
  %v2182 = vpop.f32.mrf.mxu0
  %v2183 = vadd.f32 %v301, %v2182
  %v2184 = vpop.f32.mrf.mxu0
  %2185 = vmatprep.mubr.f32.mxu0 0.0
  %2186 = vmatmul.mubr.f32.gmra.mxu0 %v932
  %v2187 = vpop.f32.mrf.mxu0
  %v2188 = vadd.f32 %v301, %v2187
  %v2189 = vpop.f32.mrf.mxu0
  %2190 = vmatprep.mubr.f32.mxu0 0.0
  %2191 = vmatmul.mubr.f32.gmra.mxu0 %v935
  %v2192 = vpop.f32.mrf.mxu0
  %v2193 = vadd.f32 %v301, %v2192
  %v2194 = vpop.f32.mrf.mxu0
  %2195 = vmatprep.mubr.f32.mxu0 0.0
  %2196 = vmatmul.mubr.f32.gmra.mxu0 %v938
  %v2197 = vpop.f32.mrf.mxu0
  %v2198 = vadd.f32 %v301, %v2197
  %v2199 = vpop.f32.mrf.mxu0
  %2200 = vmatprep.mubr.f32.mxu0 0.0
  %2201 = vmatmul.mubr.f32.gmra.mxu0 %v941
  %v2202 = vpop.f32.mrf.mxu0
  %v2203 = vadd.f32 %v301, %v2202
  %v2204 = vpop.f32.mrf.mxu0
  %2205 = vmatprep.mubr.f32.mxu0 0.0
  %2206 = vmatmul.mubr.f32.gmra.mxu0 %v944
  %v2207 = vpop.f32.mrf.mxu0
  %v2208 = vadd.f32 %v301, %v2207
  %v2209 = vpop.f32.mrf.mxu0
  %2210 = vmatprep.mubr.f32.mxu0 0.0
  %2211 = vmatmul.mubr.f32.gmra.mxu0 %v947
  %v2212 = vpop.f32.mrf.mxu0
  %v2213 = vadd.f32 %v301, %v2212
  %v2214 = vpop.f32.mrf.mxu0
  %2215 = vmatprep.mubr.f32.mxu0 0.0
  %2216 = vmatmul.mubr.f32.gmra.mxu0 %v950
  %v2217 = vpop.f32.mrf.mxu0
  %v2218 = vadd.f32 %v301, %v2217
  %v2219 = vpop.f32.mrf.mxu0
  %2220 = vmatprep.mubr.f32.mxu0 0.0
  %2221 = vmatmul.mubr.f32.gmra.mxu0 %v953
  %v2222 = vpop.f32.mrf.mxu0
  %v2223 = vadd.f32 %v301, %v2222
  %v2224 = vpop.f32.mrf.mxu0
  %2225 = vmatprep.mubr.f32.mxu0 0.0
  %2226 = vmatmul.mubr.f32.gmra.mxu0 %v956
  %v2227 = vpop.f32.mrf.mxu0
  %v2228 = vadd.f32 %v301, %v2227
  %v2229 = vpop.f32.mrf.mxu0
  %2230 = vmatprep.mubr.f32.mxu0 0.0
  %2231 = vmatmul.mubr.f32.gmra.mxu0 %v959
  %v2232 = vpop.f32.mrf.mxu0
  %v2233 = vadd.f32 %v301, %v2232
  %v2234 = vpop.f32.mrf.mxu0
  %2235 = vmatprep.mubr.f32.mxu0 0.0
  %2236 = vmatmul.mubr.f32.gmra.mxu0 %v962
  %v2237 = vpop.f32.mrf.mxu0
  %v2238 = vadd.f32 %v301, %v2237
  %v2239 = vpop.f32.mrf.mxu0
  %2240 = vmatprep.mubr.f32.mxu0 0.0
  %2241 = vmatmul.mubr.f32.gmra.mxu0 %v965
  %v2242 = vpop.f32.mrf.mxu0
  %v2243 = vadd.f32 %v301, %v2242
  %v2244 = vpop.f32.mrf.mxu0
  %2245 = vmatprep.mubr.f32.mxu0 0.0
  %2246 = vmatmul.mubr.f32.gmra.mxu0 %v968
  %v2247 = vpop.f32.mrf.mxu0
  %v2248 = vadd.f32 %v301, %v2247
  %v2249 = vpop.f32.mrf.mxu0
  %2250 = vmatprep.mubr.f32.mxu0 0.0
  %2251 = vmatmul.mubr.f32.gmra.mxu0 %v971
  %v2252 = vpop.f32.mrf.mxu0
  %v2253 = vadd.f32 %v301, %v2252
  %v2254 = vpop.f32.mrf.mxu0
  %2255 = vmatprep.mubr.f32.mxu0 0.0
  %2256 = vmatmul.mubr.f32.gmra.mxu0 %v974
  %v2257 = vpop.f32.mrf.mxu0
  %v2258 = vadd.f32 %v301, %v2257
  %v2259 = vpop.f32.mrf.mxu0
  %2260 = vmatprep.mubr.f32.mxu0 0.0
  %2261 = vmatmul.mubr.f32.gmra.mxu0 %v977
  %v2262 = vpop.f32.mrf.mxu0
  %v2263 = vadd.f32 %v301, %v2262
  %v2264 = vpop.f32.mrf.mxu0
  %2265 = vmatprep.mubr.f32.mxu0 0.0
  %2266 = vmatmul.mubr.f32.gmra.mxu0 %v980
  %v2267 = vpop.f32.mrf.mxu0
  %v2268 = vadd.f32 %v301, %v2267
  %v2269 = vpop.f32.mrf.mxu0
  %2270 = vmatprep.mubr.f32.mxu0 0.0
  %2271 = vmatmul.mubr.f32.gmra.mxu0 %v983
  %v2272 = vpop.f32.mrf.mxu0
  %v2273 = vadd.f32 %v301, %v2272
  %v2274 = vpop.f32.mrf.mxu0
  %2275 = vmatprep.mubr.f32.mxu0 0.0
  %2276 = vmatmul.mubr.f32.gmra.mxu0 %v986
  %v2277 = vpop.f32.mrf.mxu0
  %v2278 = vadd.f32 %v301, %v2277
  %v2279 = vpop.f32.mrf.mxu0
  %2280 = vmatprep.mubr.f32.mxu0 0.0
  %2281 = vmatmul.mubr.f32.gmra.mxu0 %v989
  %v2282 = vpop.f32.mrf.mxu0
  %v2283 = vadd.f32 %v301, %v2282
  %v2284 = vpop.f32.mrf.mxu0
  %2285 = vmatprep.mubr.f32.mxu0 0.0
  %2286 = vmatmul.mubr.f32.gmra.mxu0 %v992
  %v2287 = vpop.f32.mrf.mxu0
  %v2288 = vadd.f32 %v301, %v2287
  %v2289 = vpop.f32.mrf.mxu0
  %2290 = vmatprep.mubr.f32.mxu0 0.0
  %2291 = vmatmul.mubr.f32.gmra.mxu0 %v995
  %v2292 = vpop.f32.mrf.mxu0
  %v2293 = vadd.f32 %v301, %v2292
  %v2294 = vpop.f32.mrf.mxu0
  %2295 = vmatprep.mubr.f32.mxu0 0.0
  %2296 = vmatmul.mubr.f32.gmra.mxu0 %v998
  %v2297 = vpop.f32.mrf.mxu0
  %v2298 = vadd.f32 %v301, %v2297
  %v2299 = vpop.f32.mrf.mxu0
  %2300 = vmatprep.mubr.f32.mxu0 0.0
  %2301 = vmatmul.mubr.f32.gmra.mxu0 %v1001
  %v2302 = vpop.f32.mrf.mxu0
  %v2303 = vadd.f32 %v301, %v2302
  %v2304 = vpop.f32.mrf.mxu0
  %2305 = vmatprep.mubr.f32.mxu0 0.0
  %2306 = vmatmul.mubr.f32.gmra.mxu0 %v1004
  %v2307 = vpop.f32.mrf.mxu0
  %v2308 = vadd.f32 %v301, %v2307
  %v2309 = vpop.f32.mrf.mxu0
  %2310 = vmatprep.mubr.f32.mxu0 0.0
  %2311 = vmatmul.mubr.f32.gmra.mxu0 %v1007
  %v2312 = vpop.f32.mrf.mxu0
  %v2313 = vadd.f32 %v301, %v2312
  %v2314 = vpop.f32.mrf.mxu0
  %2315 = vmatprep.mubr.f32.mxu0 0.0
  %2316 = vmatmul.mubr.f32.gmra.mxu0 %v1010
  %v2317 = vpop.f32.mrf.mxu0
  %v2318 = vadd.f32 %v301, %v2317
  %v2319 = vpop.f32.mrf.mxu0
  %2320 = vmatprep.mubr.f32.mxu0 0.0
  %2321 = vmatmul.mubr.f32.gmra.mxu0 %v1013
  %v2322 = vpop.f32.mrf.mxu0
  %v2323 = vadd.f32 %v301, %v2322
  %v2324 = vpop.f32.mrf.mxu0
  %2325 = vmatprep.mubr.f32.mxu0 0.0
  %2326 = vmatmul.mubr.f32.gmra.mxu0 %v1016
  %v2327 = vpop.f32.mrf.mxu0
  %v2328 = vadd.f32 %v301, %v2327
  %v2329 = vpop.f32.mrf.mxu0
  %2330 = vmatprep.mubr.f32.mxu0 0.0
  %2331 = vmatmul.mubr.f32.gmra.mxu0 %v1019
  %v2332 = vpop.f32.mrf.mxu0
  %v2333 = vadd.f32 %v301, %v2332
  %v2334 = vpop.f32.mrf.mxu0
  %2335 = vmatprep.mubr.f32.mxu0 0.0
  %2336 = vmatmul.mubr.f32.gmra.mxu0 %v1022
  %v2337 = vpop.f32.mrf.mxu0
  %v2338 = vadd.f32 %v301, %v2337
  %v2339 = vpop.f32.mrf.mxu0
  %2340 = vmatprep.mubr.f32.mxu0 0.0
  %2341 = vmatmul.mubr.f32.gmra.mxu0 %v1025
  %v2342 = vpop.f32.mrf.mxu0
  %v2343 = vadd.f32 %v301, %v2342
  %v2344 = vpop.f32.mrf.mxu0
  %2345 = vmatprep.mubr.f32.mxu0 0.0
  %2346 = vmatmul.mubr.f32.gmra.mxu0 %v1028
  %v2347 = vpop.f32.mrf.mxu0
  %v2348 = vadd.f32 %v301, %v2347
  %v2349 = vpop.f32.mrf.mxu0
  %2350 = vmatprep.mubr.f32.mxu0 0.0
  %2351 = vmatmul.mubr.f32.gmra.mxu0 %v1031
  %v2352 = vpop.f32.mrf.mxu0
  %v2353 = vadd.f32 %v301, %v2352
  %v2354 = vpop.f32.mrf.mxu0
  %2355 = vmatprep.mubr.f32.mxu0 0.0
  %2356 = vmatmul.mubr.f32.gmra.mxu0 %v1034
  %v2357 = vpop.f32.mrf.mxu0
  %v2358 = vadd.f32 %v301, %v2357
  %v2359 = vpop.f32.mrf.mxu0
  %2360 = vmatprep.mubr.f32.mxu0 0.0
  %2361 = vmatmul.mubr.f32.gmra.mxu0 %v1037
  %v2362 = vpop.f32.mrf.mxu0
  %v2363 = vadd.f32 %v301, %v2362
  %v2364 = vpop.f32.mrf.mxu0
  %2365 = vmatprep.mubr.f32.mxu0 0.0
  %2366 = vmatmul.mubr.f32.gmra.mxu0 %v1040
  %v2367 = vpop.f32.mrf.mxu0
  %v2368 = vadd.f32 %v301, %v2367
  %v2369 = vpop.f32.mrf.mxu0
  %2370 = vmatprep.mubr.f32.mxu0 0.0
  %2371 = vmatmul.mubr.f32.gmra.mxu0 %v1043
  %v2372 = vpop.f32.mrf.mxu0
  %v2373 = vadd.f32 %v301, %v2372
  %v2374 = vpop.f32.mrf.mxu0
  %2375 = vmatprep.mubr.f32.mxu0 0.0
  %2376 = vmatmul.mubr.f32.gmra.mxu0 %v1046
  %v2377 = vpop.f32.mrf.mxu0
  %v2378 = vadd.f32 %v301, %v2377
  %v2379 = vpop.f32.mrf.mxu0
  %2380 = vmatprep.mubr.f32.mxu0 0.0
  %2381 = vmatmul.mubr.f32.gmra.mxu0 %v1049
  %v2382 = vpop.f32.mrf.mxu0
  %v2383 = vadd.f32 %v301, %v2382
  %v2384 = vpop.f32.mrf.mxu0
  %2385 = vmatprep.mubr.f32.mxu0 0.0
  %2386 = vmatmul.mubr.f32.gmra.mxu0 %v1052
  %v2387 = vpop.f32.mrf.mxu0
  %v2388 = vadd.f32 %v301, %v2387
  %v2389 = vpop.f32.mrf.mxu0
  %2390 = vmatprep.mubr.f32.mxu0 0.0
  %2391 = vmatmul.mubr.f32.gmra.mxu0 %v1055
  %v2392 = vpop.f32.mrf.mxu0
  %v2393 = vadd.f32 %v301, %v2392
  %v2394 = vpop.f32.mrf.mxu0
  %2395 = vmatprep.mubr.f32.mxu0 0.0
  %2396 = vmatmul.mubr.f32.gmra.mxu0 %v1058
  %v2397 = vpop.f32.mrf.mxu0
  %v2398 = vadd.f32 %v301, %v2397
  %v2399 = vpop.f32.mrf.mxu0
  %2400 = vmatprep.mubr.f32.mxu0 0.0
  %2401 = vmatmul.mubr.f32.gmra.mxu0 %v1061
  %v2402 = vpop.f32.mrf.mxu0
  %v2403 = vadd.f32 %v301, %v2402
  %v2404 = vpop.f32.mrf.mxu0
  %2405 = vmatprep.mubr.f32.mxu0 0.0
  %2406 = vmatmul.mubr.f32.gmra.mxu0 %v1064
  %v2407 = vpop.f32.mrf.mxu0
  %v2408 = vadd.f32 %v301, %v2407
  %v2409 = vpop.f32.mrf.mxu0
  %2410 = vmatprep.mubr.f32.mxu0 0.0
  %2411 = vmatmul.mubr.f32.gmra.mxu0 %v1067
  %v2412 = vpop.f32.mrf.mxu0
  %v2413 = vadd.f32 %v301, %v2412
  %v2414 = vpop.f32.mrf.mxu0
  %2415 = vmatprep.mubr.f32.mxu0 0.0
  %2416 = vmatmul.mubr.f32.gmra.mxu0 %v1070
  %v2417 = vpop.f32.mrf.mxu0
  %v2418 = vadd.f32 %v301, %v2417
  %v2419 = vpop.f32.mrf.mxu0
  %2420 = vdwg.mxu0
  %v2421 = vmax.f32 %v1143, 0.0
  %v2422 = vmax.f32 %v1148, 0.0
  %v2423 = vmax.f32 %v1153, 0.0
  %v2424 = vmax.f32 %v1158, 0.0
  %v2425 = vmax.f32 %v1163, 0.0
  %v2426 = vmax.f32 %v1168, 0.0
  %v2427 = vmax.f32 %v1173, 0.0
  %v2428 = vmax.f32 %v1178, 0.0
  %v2429 = vmax.f32 %v1183, 0.0
  %v2430 = vmax.f32 %v1188, 0.0
  %v2431 = vmax.f32 %v1193, 0.0
  %v2432 = vmax.f32 %v1198, 0.0
  %v2433 = vmax.f32 %v1203, 0.0
  %v2434 = vmax.f32 %v1208, 0.0
  %v2435 = vmax.f32 %v1213, 0.0
  %v2436 = vmax.f32 %v1218, 0.0
  %v2437 = vmax.f32 %v1223, 0.0
  %v2438 = vmax.f32 %v1228, 0.0
  %v2439 = vmax.f32 %v1233, 0.0
  %v2440 = vmax.f32 %v1238, 0.0
  %v2441 = vmax.f32 %v1243, 0.0
  %v2442 = vmax.f32 %v1248, 0.0
  %v2443 = vmax.f32 %v1253, 0.0
  %v2444 = vmax.f32 %v1258, 0.0
  %v2445 = vmax.f32 %v1263, 0.0
  %v2446 = vmax.f32 %v1268, 0.0
  %v2447 = vmax.f32 %v1273, 0.0
  %v2448 = vmax.f32 %v1278, 0.0
  %v2449 = vmax.f32 %v1283, 0.0
  %v2450 = vmax.f32 %v1288, 0.0
  %v2451 = vmax.f32 %v1293, 0.0
  %v2452 = vmax.f32 %v1298, 0.0
  %v2453 = vmax.f32 %v1303, 0.0
  %v2454 = vmax.f32 %v1308, 0.0
  %v2455 = vmax.f32 %v1313, 0.0
  %v2456 = vmax.f32 %v1318, 0.0
  %v2457 = vmax.f32 %v1323, 0.0
  %v2458 = vmax.f32 %v1328, 0.0
  %v2459 = vmax.f32 %v1333, 0.0
  %v2460 = vmax.f32 %v1338, 0.0
  %v2461 = vmax.f32 %v1343, 0.0
  %v2462 = vmax.f32 %v1348, 0.0
  %v2463 = vmax.f32 %v1353, 0.0
  %v2464 = vmax.f32 %v1358, 0.0
  %v2465 = vmax.f32 %v1363, 0.0
  %v2466 = vmax.f32 %v1368, 0.0
  %v2467 = vmax.f32 %v1373, 0.0
  %v2468 = vmax.f32 %v1378, 0.0
  %v2469 = vmax.f32 %v1383, 0.0
  %v2470 = vmax.f32 %v1388, 0.0
  %v2471 = vmax.f32 %v1393, 0.0
  %v2472 = vmax.f32 %v1398, 0.0
  %v2473 = vmax.f32 %v1403, 0.0
  %v2474 = vmax.f32 %v1408, 0.0
  %v2475 = vmax.f32 %v1413, 0.0
  %v2476 = vmax.f32 %v1418, 0.0
  %v2477 = vmax.f32 %v1423, 0.0
  %v2478 = vmax.f32 %v1428, 0.0
  %v2479 = vmax.f32 %v1433, 0.0
  %v2480 = vmax.f32 %v1438, 0.0
  %v2481 = vmax.f32 %v1443, 0.0
  %v2482 = vmax.f32 %v1448, 0.0
  %v2483 = vmax.f32 %v1453, 0.0
  %v2484 = vmax.f32 %v1458, 0.0
  %v2485 = vmax.f32 %v1463, 0.0
  %v2486 = vmax.f32 %v1468, 0.0
  %v2487 = vmax.f32 %v1473, 0.0
  %v2488 = vmax.f32 %v1478, 0.0
  %v2489 = vmax.f32 %v1483, 0.0
  %v2490 = vmax.f32 %v1488, 0.0
  %v2491 = vmax.f32 %v1493, 0.0
  %v2492 = vmax.f32 %v1498, 0.0
  %v2493 = vmax.f32 %v1503, 0.0
  %v2494 = vmax.f32 %v1508, 0.0
  %v2495 = vmax.f32 %v1513, 0.0
  %v2496 = vmax.f32 %v1518, 0.0
  %v2497 = vmax.f32 %v1523, 0.0
  %v2498 = vmax.f32 %v1528, 0.0
  %v2499 = vmax.f32 %v1533, 0.0
  %v2500 = vmax.f32 %v1538, 0.0
  %v2501 = vmax.f32 %v1543, 0.0
  %v2502 = vmax.f32 %v1548, 0.0
  %v2503 = vmax.f32 %v1553, 0.0
  %v2504 = vmax.f32 %v1558, 0.0
  %v2505 = vmax.f32 %v1563, 0.0
  %v2506 = vmax.f32 %v1568, 0.0
  %v2507 = vmax.f32 %v1573, 0.0
  %v2508 = vmax.f32 %v1578, 0.0
  %v2509 = vmax.f32 %v1583, 0.0
  %v2510 = vmax.f32 %v1588, 0.0
  %v2511 = vmax.f32 %v1593, 0.0
  %v2512 = vmax.f32 %v1598, 0.0
  %v2513 = vmax.f32 %v1603, 0.0
  %v2514 = vmax.f32 %v1608, 0.0
  %v2515 = vmax.f32 %v1613, 0.0
  %v2516 = vmax.f32 %v1618, 0.0
  %v2517 = vmax.f32 %v1623, 0.0
  %v2518 = vmax.f32 %v1628, 0.0
  %v2519 = vmax.f32 %v1633, 0.0
  %v2520 = vmax.f32 %v1638, 0.0
  %v2521 = vmax.f32 %v1643, 0.0
  %v2522 = vmax.f32 %v1648, 0.0
  %v2523 = vmax.f32 %v1653, 0.0
  %v2524 = vmax.f32 %v1658, 0.0
  %v2525 = vmax.f32 %v1663, 0.0
  %v2526 = vmax.f32 %v1668, 0.0
  %v2527 = vmax.f32 %v1673, 0.0
  %v2528 = vmax.f32 %v1678, 0.0
  %v2529 = vmax.f32 %v1683, 0.0
  %v2530 = vmax.f32 %v1688, 0.0
  %v2531 = vmax.f32 %v1693, 0.0
  %v2532 = vmax.f32 %v1698, 0.0
  %v2533 = vmax.f32 %v1703, 0.0
  %v2534 = vmax.f32 %v1708, 0.0
  %v2535 = vmax.f32 %v1713, 0.0
  %v2536 = vmax.f32 %v1718, 0.0
  %v2537 = vmax.f32 %v1723, 0.0
  %v2538 = vmax.f32 %v1728, 0.0
  %v2539 = vmax.f32 %v1733, 0.0
  %v2540 = vmax.f32 %v1738, 0.0
  %v2541 = vmax.f32 %v1743, 0.0
  %v2542 = vmax.f32 %v1748, 0.0
  %v2543 = vmax.f32 %v1753, 0.0
  %v2544 = vmax.f32 %v1758, 0.0
  %v2545 = vmax.f32 %v1763, 0.0
  %v2546 = vmax.f32 %v1768, 0.0
  %v2547 = vmax.f32 %v1773, 0.0
  %v2548 = vmax.f32 %v1778, 0.0
  %v2549 = vmax.f32 %v1783, 0.0
  %v2550 = vmax.f32 %v1788, 0.0
  %v2551 = vmax.f32 %v1793, 0.0
  %v2552 = vmax.f32 %v1798, 0.0
  %v2553 = vmax.f32 %v1803, 0.0
  %v2554 = vmax.f32 %v1808, 0.0
  %v2555 = vmax.f32 %v1813, 0.0
  %v2556 = vmax.f32 %v1818, 0.0
  %v2557 = vmax.f32 %v1823, 0.0
  %v2558 = vmax.f32 %v1828, 0.0
  %v2559 = vmax.f32 %v1833, 0.0
  %v2560 = vmax.f32 %v1838, 0.0
  %v2561 = vmax.f32 %v1843, 0.0
  %v2562 = vmax.f32 %v1848, 0.0
  %v2563 = vmax.f32 %v1853, 0.0
  %v2564 = vmax.f32 %v1858, 0.0
  %v2565 = vmax.f32 %v1863, 0.0
  %v2566 = vmax.f32 %v1868, 0.0
  %v2567 = vmax.f32 %v1873, 0.0
  %v2568 = vmax.f32 %v1878, 0.0
  %v2569 = vmax.f32 %v1883, 0.0
  %v2570 = vmax.f32 %v1888, 0.0
  %v2571 = vmax.f32 %v1893, 0.0
  %v2572 = vmax.f32 %v1898, 0.0
  %v2573 = vmax.f32 %v1903, 0.0
  %v2574 = vmax.f32 %v1908, 0.0
  %v2575 = vmax.f32 %v1913, 0.0
  %v2576 = vmax.f32 %v1918, 0.0
  %v2577 = vmax.f32 %v1923, 0.0
  %v2578 = vmax.f32 %v1928, 0.0
  %v2579 = vmax.f32 %v1933, 0.0
  %v2580 = vmax.f32 %v1938, 0.0
  %v2581 = vmax.f32 %v1943, 0.0
  %v2582 = vmax.f32 %v1948, 0.0
  %v2583 = vmax.f32 %v1953, 0.0
  %v2584 = vmax.f32 %v1958, 0.0
  %v2585 = vmax.f32 %v1963, 0.0
  %v2586 = vmax.f32 %v1968, 0.0
  %v2587 = vmax.f32 %v1973, 0.0
  %v2588 = vmax.f32 %v1978, 0.0
  %v2589 = vmax.f32 %v1983, 0.0
  %v2590 = vmax.f32 %v1988, 0.0
  %v2591 = vmax.f32 %v1993, 0.0
  %v2592 = vmax.f32 %v1998, 0.0
  %v2593 = vmax.f32 %v2003, 0.0
  %v2594 = vmax.f32 %v2008, 0.0
  %v2595 = vmax.f32 %v2013, 0.0
  %v2596 = vmax.f32 %v2018, 0.0
  %v2597 = vmax.f32 %v2023, 0.0
  %v2598 = vmax.f32 %v2028, 0.0
  %v2599 = vmax.f32 %v2033, 0.0
  %v2600 = vmax.f32 %v2038, 0.0
  %v2601 = vmax.f32 %v2043, 0.0
  %v2602 = vmax.f32 %v2048, 0.0
  %v2603 = vmax.f32 %v2053, 0.0
  %v2604 = vmax.f32 %v2058, 0.0
  %v2605 = vmax.f32 %v2063, 0.0
  %v2606 = vmax.f32 %v2068, 0.0
  %v2607 = vmax.f32 %v2073, 0.0
  %v2608 = vmax.f32 %v2078, 0.0
  %v2609 = vmax.f32 %v2083, 0.0
  %v2610 = vmax.f32 %v2088, 0.0
  %v2611 = vmax.f32 %v2093, 0.0
  %v2612 = vmax.f32 %v2098, 0.0
  %v2613 = vmax.f32 %v2103, 0.0
  %v2614 = vmax.f32 %v2108, 0.0
  %v2615 = vmax.f32 %v2113, 0.0
  %v2616 = vmax.f32 %v2118, 0.0
  %v2617 = vmax.f32 %v2123, 0.0
  %v2618 = vmax.f32 %v2128, 0.0
  %v2619 = vmax.f32 %v2133, 0.0
  %v2620 = vmax.f32 %v2138, 0.0
  %v2621 = vmax.f32 %v2143, 0.0
  %v2622 = vmax.f32 %v2148, 0.0
  %v2623 = vmax.f32 %v2153, 0.0
  %v2624 = vmax.f32 %v2158, 0.0
  %v2625 = vmax.f32 %v2163, 0.0
  %v2626 = vmax.f32 %v2168, 0.0
  %v2627 = vmax.f32 %v2173, 0.0
  %v2628 = vmax.f32 %v2178, 0.0
  %v2629 = vmax.f32 %v2183, 0.0
  %v2630 = vmax.f32 %v2188, 0.0
  %v2631 = vmax.f32 %v2193, 0.0
  %v2632 = vmax.f32 %v2198, 0.0
  %v2633 = vmax.f32 %v2203, 0.0
  %v2634 = vmax.f32 %v2208, 0.0
  %v2635 = vmax.f32 %v2213, 0.0
  %v2636 = vmax.f32 %v2218, 0.0
  %v2637 = vmax.f32 %v2223, 0.0
  %v2638 = vmax.f32 %v2228, 0.0
  %v2639 = vmax.f32 %v2233, 0.0
  %v2640 = vmax.f32 %v2238, 0.0
  %v2641 = vmax.f32 %v2243, 0.0
  %v2642 = vmax.f32 %v2248, 0.0
  %v2643 = vmax.f32 %v2253, 0.0
  %v2644 = vmax.f32 %v2258, 0.0
  %v2645 = vmax.f32 %v2263, 0.0
  %v2646 = vmax.f32 %v2268, 0.0
  %v2647 = vmax.f32 %v2273, 0.0
  %v2648 = vmax.f32 %v2278, 0.0
  %v2649 = vmax.f32 %v2283, 0.0
  %v2650 = vmax.f32 %v2288, 0.0
  %v2651 = vmax.f32 %v2293, 0.0
  %v2652 = vmax.f32 %v2298, 0.0
  %v2653 = vmax.f32 %v2303, 0.0
  %v2654 = vmax.f32 %v2308, 0.0
  %v2655 = vmax.f32 %v2313, 0.0
  %v2656 = vmax.f32 %v2318, 0.0
  %v2657 = vmax.f32 %v2323, 0.0
  %v2658 = vmax.f32 %v2328, 0.0
  %v2659 = vmax.f32 %v2333, 0.0
  %v2660 = vmax.f32 %v2338, 0.0
  %v2661 = vmax.f32 %v2343, 0.0
  %v2662 = vmax.f32 %v2348, 0.0
  %v2663 = vmax.f32 %v2353, 0.0
  %v2664 = vmax.f32 %v2358, 0.0
  %v2665 = vmax.f32 %v2363, 0.0
  %v2666 = vmax.f32 %v2368, 0.0
  %v2667 = vmax.f32 %v2373, 0.0
  %v2668 = vmax.f32 %v2378, 0.0
  %v2669 = vmax.f32 %v2383, 0.0
  %v2670 = vmax.f32 %v2388, 0.0
  %v2671 = vmax.f32 %v2393, 0.0
  %v2672 = vmax.f32 %v2398, 0.0
  %v2673 = vmax.f32 %v2403, 0.0
  %v2674 = vmax.f32 %v2408, 0.0
  %v2675 = vmax.f32 %v2413, 0.0
  %v2676 = vmax.f32 %v2418, 0.0
  %vm2677 = vcmask 130048
  %v2678 = vsel %vm2677, %v2421, 0.0
  %v2679 = vsel %vm2677, %v2422, 0.0
  %v2680 = vadd.f32 %v2678, %v2679
  %v2681 = vsel %vm2677, %v2423, 0.0
  %v2682 = vadd.f32 %v2680, %v2681
  %v2683 = vsel %vm2677, %v2424, 0.0
  %v2684 = vadd.f32 %v2682, %v2683
  %v2685 = vsel %vm2677, %v2425, 0.0
  %v2686 = vadd.f32 %v2684, %v2685
  %v2687 = vsel %vm2677, %v2426, 0.0
  %v2688 = vadd.f32 %v2686, %v2687
  %v2689 = vsel %vm2677, %v2427, 0.0
  %v2690 = vadd.f32 %v2688, %v2689
  %v2691 = vsel %vm2677, %v2428, 0.0
  %v2692 = vadd.f32 %v2690, %v2691
  %v2693 = vsel %vm2677, %v2429, 0.0
  %v2694 = vadd.f32 %v2692, %v2693
  %v2695 = vsel %vm2677, %v2430, 0.0
  %v2696 = vadd.f32 %v2694, %v2695
  %v2697 = vsel %vm2677, %v2431, 0.0
  %v2698 = vadd.f32 %v2696, %v2697
  %v2699 = vsel %vm2677, %v2432, 0.0
  %v2700 = vadd.f32 %v2698, %v2699
  %v2701 = vsel %vm2677, %v2433, 0.0
  %v2702 = vadd.f32 %v2700, %v2701
  %v2703 = vsel %vm2677, %v2434, 0.0
  %v2704 = vadd.f32 %v2702, %v2703
  %v2705 = vsel %vm2677, %v2435, 0.0
  %v2706 = vadd.f32 %v2704, %v2705
  %v2707 = vsel %vm2677, %v2436, 0.0
  %v2708 = vadd.f32 %v2706, %v2707
  %v2709 = vsel %vm2677, %v2437, 0.0
  %v2710 = vadd.f32 %v2708, %v2709
  %v2711 = vsel %vm2677, %v2438, 0.0
  %v2712 = vadd.f32 %v2710, %v2711
  %v2713 = vsel %vm2677, %v2439, 0.0
  %v2714 = vadd.f32 %v2712, %v2713
  %v2715 = vsel %vm2677, %v2440, 0.0
  %v2716 = vadd.f32 %v2714, %v2715
  %v2717 = vsel %vm2677, %v2441, 0.0
  %v2718 = vadd.f32 %v2716, %v2717
  %v2719 = vsel %vm2677, %v2442, 0.0
  %v2720 = vadd.f32 %v2718, %v2719
  %v2721 = vsel %vm2677, %v2443, 0.0
  %v2722 = vadd.f32 %v2720, %v2721
  %v2723 = vsel %vm2677, %v2444, 0.0
  %v2724 = vadd.f32 %v2722, %v2723
  %v2725 = vsel %vm2677, %v2445, 0.0
  %v2726 = vadd.f32 %v2724, %v2725
  %v2727 = vsel %vm2677, %v2446, 0.0
  %v2728 = vadd.f32 %v2726, %v2727
  %v2729 = vsel %vm2677, %v2447, 0.0
  %v2730 = vadd.f32 %v2728, %v2729
  %v2731 = vsel %vm2677, %v2448, 0.0
  %v2732 = vadd.f32 %v2730, %v2731
  %v2733 = vsel %vm2677, %v2449, 0.0
  %v2734 = vadd.f32 %v2732, %v2733
  %v2735 = vsel %vm2677, %v2450, 0.0
  %v2736 = vadd.f32 %v2734, %v2735
  %v2737 = vsel %vm2677, %v2451, 0.0
  %v2738 = vadd.f32 %v2736, %v2737
  %v2739 = vsel %vm2677, %v2452, 0.0
  %v2740 = vadd.f32 %v2738, %v2739
  %v2741 = vrot.slane %v2740, 4
  %v2742 = vadd.f32 %v2740, %v2741
  %v2743 = vrot.slane %v2742, 2
  %v2744 = vadd.f32 %v2742, %v2743
  %v2745 = vrot.slane %v2744, 1
  %v2746 = vadd.f32 %v2744, %v2745
  %v2747 = vsel %vm2677, %v2453, 0.0
  %v2748 = vsel %vm2677, %v2454, 0.0
  %v2749 = vadd.f32 %v2747, %v2748
  %v2750 = vsel %vm2677, %v2455, 0.0
  %v2751 = vadd.f32 %v2749, %v2750
  %v2752 = vsel %vm2677, %v2456, 0.0
  %v2753 = vadd.f32 %v2751, %v2752
  %v2754 = vsel %vm2677, %v2457, 0.0
  %v2755 = vadd.f32 %v2753, %v2754
  %v2756 = vsel %vm2677, %v2458, 0.0
  %v2757 = vadd.f32 %v2755, %v2756
  %v2758 = vsel %vm2677, %v2459, 0.0
  %v2759 = vadd.f32 %v2757, %v2758
  %v2760 = vsel %vm2677, %v2460, 0.0
  %v2761 = vadd.f32 %v2759, %v2760
  %v2762 = vsel %vm2677, %v2461, 0.0
  %v2763 = vadd.f32 %v2761, %v2762
  %v2764 = vsel %vm2677, %v2462, 0.0
  %v2765 = vadd.f32 %v2763, %v2764
  %v2766 = vsel %vm2677, %v2463, 0.0
  %v2767 = vadd.f32 %v2765, %v2766
  %v2768 = vsel %vm2677, %v2464, 0.0
  %v2769 = vadd.f32 %v2767, %v2768
  %v2770 = vsel %vm2677, %v2465, 0.0
  %v2771 = vadd.f32 %v2769, %v2770
  %v2772 = vsel %vm2677, %v2466, 0.0
  %v2773 = vadd.f32 %v2771, %v2772
  %v2774 = vsel %vm2677, %v2467, 0.0
  %v2775 = vadd.f32 %v2773, %v2774
  %v2776 = vsel %vm2677, %v2468, 0.0
  %v2777 = vadd.f32 %v2775, %v2776
  %v2778 = vsel %vm2677, %v2469, 0.0
  %v2779 = vadd.f32 %v2777, %v2778
  %v2780 = vsel %vm2677, %v2470, 0.0
  %v2781 = vadd.f32 %v2779, %v2780
  %v2782 = vsel %vm2677, %v2471, 0.0
  %v2783 = vadd.f32 %v2781, %v2782
  %v2784 = vsel %vm2677, %v2472, 0.0
  %v2785 = vadd.f32 %v2783, %v2784
  %v2786 = vsel %vm2677, %v2473, 0.0
  %v2787 = vadd.f32 %v2785, %v2786
  %v2788 = vsel %vm2677, %v2474, 0.0
  %v2789 = vadd.f32 %v2787, %v2788
  %v2790 = vsel %vm2677, %v2475, 0.0
  %v2791 = vadd.f32 %v2789, %v2790
  %v2792 = vsel %vm2677, %v2476, 0.0
  %v2793 = vadd.f32 %v2791, %v2792
  %v2794 = vsel %vm2677, %v2477, 0.0
  %v2795 = vadd.f32 %v2793, %v2794
  %v2796 = vsel %vm2677, %v2478, 0.0
  %v2797 = vadd.f32 %v2795, %v2796
  %v2798 = vsel %vm2677, %v2479, 0.0
  %v2799 = vadd.f32 %v2797, %v2798
  %v2800 = vsel %vm2677, %v2480, 0.0
  %v2801 = vadd.f32 %v2799, %v2800
  %v2802 = vsel %vm2677, %v2481, 0.0
  %v2803 = vadd.f32 %v2801, %v2802
  %v2804 = vsel %vm2677, %v2482, 0.0
  %v2805 = vadd.f32 %v2803, %v2804
  %v2806 = vsel %vm2677, %v2483, 0.0
  %v2807 = vadd.f32 %v2805, %v2806
  %v2808 = vsel %vm2677, %v2484, 0.0
  %v2809 = vadd.f32 %v2807, %v2808
  %v2810 = vrot.slane %v2809, 4
  %v2811 = vadd.f32 %v2809, %v2810
  %v2812 = vrot.slane %v2811, 2
  %v2813 = vadd.f32 %v2811, %v2812
  %v2814 = vrot.slane %v2813, 1
  %v2815 = vadd.f32 %v2813, %v2814
  %v2816 = vsel %vm2677, %v2485, 0.0
  %v2817 = vsel %vm2677, %v2486, 0.0
  %v2818 = vadd.f32 %v2816, %v2817
  %v2819 = vsel %vm2677, %v2487, 0.0
  %v2820 = vadd.f32 %v2818, %v2819
  %v2821 = vsel %vm2677, %v2488, 0.0
  %v2822 = vadd.f32 %v2820, %v2821
  %v2823 = vsel %vm2677, %v2489, 0.0
  %v2824 = vadd.f32 %v2822, %v2823
  %v2825 = vsel %vm2677, %v2490, 0.0
  %v2826 = vadd.f32 %v2824, %v2825
  %v2827 = vsel %vm2677, %v2491, 0.0
  %v2828 = vadd.f32 %v2826, %v2827
  %v2829 = vsel %vm2677, %v2492, 0.0
  %v2830 = vadd.f32 %v2828, %v2829
  %v2831 = vsel %vm2677, %v2493, 0.0
  %v2832 = vadd.f32 %v2830, %v2831
  %v2833 = vsel %vm2677, %v2494, 0.0
  %v2834 = vadd.f32 %v2832, %v2833
  %v2835 = vsel %vm2677, %v2495, 0.0
  %v2836 = vadd.f32 %v2834, %v2835
  %v2837 = vsel %vm2677, %v2496, 0.0
  %v2838 = vadd.f32 %v2836, %v2837
  %v2839 = vsel %vm2677, %v2497, 0.0
  %v2840 = vadd.f32 %v2838, %v2839
  %v2841 = vsel %vm2677, %v2498, 0.0
  %v2842 = vadd.f32 %v2840, %v2841
  %v2843 = vsel %vm2677, %v2499, 0.0
  %v2844 = vadd.f32 %v2842, %v2843
  %v2845 = vsel %vm2677, %v2500, 0.0
  %v2846 = vadd.f32 %v2844, %v2845
  %v2847 = vsel %vm2677, %v2501, 0.0
  %v2848 = vadd.f32 %v2846, %v2847
  %v2849 = vsel %vm2677, %v2502, 0.0
  %v2850 = vadd.f32 %v2848, %v2849
  %v2851 = vsel %vm2677, %v2503, 0.0
  %v2852 = vadd.f32 %v2850, %v2851
  %v2853 = vsel %vm2677, %v2504, 0.0
  %v2854 = vadd.f32 %v2852, %v2853
  %v2855 = vsel %vm2677, %v2505, 0.0
  %v2856 = vadd.f32 %v2854, %v2855
  %v2857 = vsel %vm2677, %v2506, 0.0
  %v2858 = vadd.f32 %v2856, %v2857
  %v2859 = vsel %vm2677, %v2507, 0.0
  %v2860 = vadd.f32 %v2858, %v2859
  %v2861 = vsel %vm2677, %v2508, 0.0
  %v2862 = vadd.f32 %v2860, %v2861
  %v2863 = vsel %vm2677, %v2509, 0.0
  %v2864 = vadd.f32 %v2862, %v2863
  %v2865 = vsel %vm2677, %v2510, 0.0
  %v2866 = vadd.f32 %v2864, %v2865
  %v2867 = vsel %vm2677, %v2511, 0.0
  %v2868 = vadd.f32 %v2866, %v2867
  %v2869 = vsel %vm2677, %v2512, 0.0
  %v2870 = vadd.f32 %v2868, %v2869
  %v2871 = vsel %vm2677, %v2513, 0.0
  %v2872 = vadd.f32 %v2870, %v2871
  %v2873 = vsel %vm2677, %v2514, 0.0
  %v2874 = vadd.f32 %v2872, %v2873
  %v2875 = vsel %vm2677, %v2515, 0.0
  %v2876 = vadd.f32 %v2874, %v2875
  %v2877 = vsel %vm2677, %v2516, 0.0
  %v2878 = vadd.f32 %v2876, %v2877
  %v2879 = vrot.slane %v2878, 4
  %v2880 = vadd.f32 %v2878, %v2879
  %v2881 = vrot.slane %v2880, 2
  %v2882 = vadd.f32 %v2880, %v2881
  %v2883 = vrot.slane %v2882, 1
  %v2884 = vadd.f32 %v2882, %v2883
  %v2885 = vsel %vm2677, %v2517, 0.0
  %v2886 = vsel %vm2677, %v2518, 0.0
  %v2887 = vadd.f32 %v2885, %v2886
  %v2888 = vsel %vm2677, %v2519, 0.0
  %v2889 = vadd.f32 %v2887, %v2888
  %v2890 = vsel %vm2677, %v2520, 0.0
  %v2891 = vadd.f32 %v2889, %v2890
  %v2892 = vsel %vm2677, %v2521, 0.0
  %v2893 = vadd.f32 %v2891, %v2892
  %v2894 = vsel %vm2677, %v2522, 0.0
  %v2895 = vadd.f32 %v2893, %v2894
  %v2896 = vsel %vm2677, %v2523, 0.0
  %v2897 = vadd.f32 %v2895, %v2896
  %v2898 = vsel %vm2677, %v2524, 0.0
  %v2899 = vadd.f32 %v2897, %v2898
  %v2900 = vsel %vm2677, %v2525, 0.0
  %v2901 = vadd.f32 %v2899, %v2900
  %v2902 = vsel %vm2677, %v2526, 0.0
  %v2903 = vadd.f32 %v2901, %v2902
  %v2904 = vsel %vm2677, %v2527, 0.0
  %v2905 = vadd.f32 %v2903, %v2904
  %v2906 = vsel %vm2677, %v2528, 0.0
  %v2907 = vadd.f32 %v2905, %v2906
  %v2908 = vsel %vm2677, %v2529, 0.0
  %v2909 = vadd.f32 %v2907, %v2908
  %v2910 = vsel %vm2677, %v2530, 0.0
  %v2911 = vadd.f32 %v2909, %v2910
  %v2912 = vsel %vm2677, %v2531, 0.0
  %v2913 = vadd.f32 %v2911, %v2912
  %v2914 = vsel %vm2677, %v2532, 0.0
  %v2915 = vadd.f32 %v2913, %v2914
  %v2916 = vsel %vm2677, %v2533, 0.0
  %v2917 = vadd.f32 %v2915, %v2916
  %v2918 = vsel %vm2677, %v2534, 0.0
  %v2919 = vadd.f32 %v2917, %v2918
  %v2920 = vsel %vm2677, %v2535, 0.0
  %v2921 = vadd.f32 %v2919, %v2920
  %v2922 = vsel %vm2677, %v2536, 0.0
  %v2923 = vadd.f32 %v2921, %v2922
  %v2924 = vsel %vm2677, %v2537, 0.0
  %v2925 = vadd.f32 %v2923, %v2924
  %v2926 = vsel %vm2677, %v2538, 0.0
  %v2927 = vadd.f32 %v2925, %v2926
  %v2928 = vsel %vm2677, %v2539, 0.0
  %v2929 = vadd.f32 %v2927, %v2928
  %v2930 = vsel %vm2677, %v2540, 0.0
  %v2931 = vadd.f32 %v2929, %v2930
  %v2932 = vsel %vm2677, %v2541, 0.0
  %v2933 = vadd.f32 %v2931, %v2932
  %v2934 = vsel %vm2677, %v2542, 0.0
  %v2935 = vadd.f32 %v2933, %v2934
  %v2936 = vsel %vm2677, %v2543, 0.0
  %v2937 = vadd.f32 %v2935, %v2936
  %v2938 = vsel %vm2677, %v2544, 0.0
  %v2939 = vadd.f32 %v2937, %v2938
  %v2940 = vsel %vm2677, %v2545, 0.0
  %v2941 = vadd.f32 %v2939, %v2940
  %v2942 = vsel %vm2677, %v2546, 0.0
  %v2943 = vadd.f32 %v2941, %v2942
  %v2944 = vsel %vm2677, %v2547, 0.0
  %v2945 = vadd.f32 %v2943, %v2944
  %v2946 = vsel %vm2677, %v2548, 0.0
  %v2947 = vadd.f32 %v2945, %v2946
  %v2948 = vrot.slane %v2947, 4
  %v2949 = vadd.f32 %v2947, %v2948
  %v2950 = vrot.slane %v2949, 2
  %v2951 = vadd.f32 %v2949, %v2950
  %v2952 = vrot.slane %v2951, 1
  %v2953 = vadd.f32 %v2951, %v2952
  %v2954 = vsel %vm2677, %v2549, 0.0
  %v2955 = vsel %vm2677, %v2550, 0.0
  %v2956 = vadd.f32 %v2954, %v2955
  %v2957 = vsel %vm2677, %v2551, 0.0
  %v2958 = vadd.f32 %v2956, %v2957
  %v2959 = vsel %vm2677, %v2552, 0.0
  %v2960 = vadd.f32 %v2958, %v2959
  %v2961 = vsel %vm2677, %v2553, 0.0
  %v2962 = vadd.f32 %v2960, %v2961
  %v2963 = vsel %vm2677, %v2554, 0.0
  %v2964 = vadd.f32 %v2962, %v2963
  %v2965 = vsel %vm2677, %v2555, 0.0
  %v2966 = vadd.f32 %v2964, %v2965
  %v2967 = vsel %vm2677, %v2556, 0.0
  %v2968 = vadd.f32 %v2966, %v2967
  %v2969 = vsel %vm2677, %v2557, 0.0
  %v2970 = vadd.f32 %v2968, %v2969
  %v2971 = vsel %vm2677, %v2558, 0.0
  %v2972 = vadd.f32 %v2970, %v2971
  %v2973 = vsel %vm2677, %v2559, 0.0
  %v2974 = vadd.f32 %v2972, %v2973
  %v2975 = vsel %vm2677, %v2560, 0.0
  %v2976 = vadd.f32 %v2974, %v2975
  %v2977 = vsel %vm2677, %v2561, 0.0
  %v2978 = vadd.f32 %v2976, %v2977
  %v2979 = vsel %vm2677, %v2562, 0.0
  %v2980 = vadd.f32 %v2978, %v2979
  %v2981 = vsel %vm2677, %v2563, 0.0
  %v2982 = vadd.f32 %v2980, %v2981
  %v2983 = vsel %vm2677, %v2564, 0.0
  %v2984 = vadd.f32 %v2982, %v2983
  %v2985 = vsel %vm2677, %v2565, 0.0
  %v2986 = vadd.f32 %v2984, %v2985
  %v2987 = vsel %vm2677, %v2566, 0.0
  %v2988 = vadd.f32 %v2986, %v2987
  %v2989 = vsel %vm2677, %v2567, 0.0
  %v2990 = vadd.f32 %v2988, %v2989
  %v2991 = vsel %vm2677, %v2568, 0.0
  %v2992 = vadd.f32 %v2990, %v2991
  %v2993 = vsel %vm2677, %v2569, 0.0
  %v2994 = vadd.f32 %v2992, %v2993
  %v2995 = vsel %vm2677, %v2570, 0.0
  %v2996 = vadd.f32 %v2994, %v2995
  %v2997 = vsel %vm2677, %v2571, 0.0
  %v2998 = vadd.f32 %v2996, %v2997
  %v2999 = vsel %vm2677, %v2572, 0.0
  %v3000 = vadd.f32 %v2998, %v2999
  %v3001 = vsel %vm2677, %v2573, 0.0
  %v3002 = vadd.f32 %v3000, %v3001
  %v3003 = vsel %vm2677, %v2574, 0.0
  %v3004 = vadd.f32 %v3002, %v3003
  %v3005 = vsel %vm2677, %v2575, 0.0
  %v3006 = vadd.f32 %v3004, %v3005
  %v3007 = vsel %vm2677, %v2576, 0.0
  %v3008 = vadd.f32 %v3006, %v3007
  %v3009 = vsel %vm2677, %v2577, 0.0
  %v3010 = vadd.f32 %v3008, %v3009
  %v3011 = vsel %vm2677, %v2578, 0.0
  %v3012 = vadd.f32 %v3010, %v3011
  %v3013 = vsel %vm2677, %v2579, 0.0
  %v3014 = vadd.f32 %v3012, %v3013
  %v3015 = vsel %vm2677, %v2580, 0.0
  %v3016 = vadd.f32 %v3014, %v3015
  %v3017 = vrot.slane %v3016, 4
  %v3018 = vadd.f32 %v3016, %v3017
  %v3019 = vrot.slane %v3018, 2
  %v3020 = vadd.f32 %v3018, %v3019
  %v3021 = vrot.slane %v3020, 1
  %v3022 = vadd.f32 %v3020, %v3021
  %v3023 = vsel %vm2677, %v2581, 0.0
  %v3024 = vsel %vm2677, %v2582, 0.0
  %v3025 = vadd.f32 %v3023, %v3024
  %v3026 = vsel %vm2677, %v2583, 0.0
  %v3027 = vadd.f32 %v3025, %v3026
  %v3028 = vsel %vm2677, %v2584, 0.0
  %v3029 = vadd.f32 %v3027, %v3028
  %v3030 = vsel %vm2677, %v2585, 0.0
  %v3031 = vadd.f32 %v3029, %v3030
  %v3032 = vsel %vm2677, %v2586, 0.0
  %v3033 = vadd.f32 %v3031, %v3032
  %v3034 = vsel %vm2677, %v2587, 0.0
  %v3035 = vadd.f32 %v3033, %v3034
  %v3036 = vsel %vm2677, %v2588, 0.0
  %v3037 = vadd.f32 %v3035, %v3036
  %v3038 = vsel %vm2677, %v2589, 0.0
  %v3039 = vadd.f32 %v3037, %v3038
  %v3040 = vsel %vm2677, %v2590, 0.0
  %v3041 = vadd.f32 %v3039, %v3040
  %v3042 = vsel %vm2677, %v2591, 0.0
  %v3043 = vadd.f32 %v3041, %v3042
  %v3044 = vsel %vm2677, %v2592, 0.0
  %v3045 = vadd.f32 %v3043, %v3044
  %v3046 = vsel %vm2677, %v2593, 0.0
  %v3047 = vadd.f32 %v3045, %v3046
  %v3048 = vsel %vm2677, %v2594, 0.0
  %v3049 = vadd.f32 %v3047, %v3048
  %v3050 = vsel %vm2677, %v2595, 0.0
  %v3051 = vadd.f32 %v3049, %v3050
  %v3052 = vsel %vm2677, %v2596, 0.0
  %v3053 = vadd.f32 %v3051, %v3052
  %v3054 = vsel %vm2677, %v2597, 0.0
  %v3055 = vadd.f32 %v3053, %v3054
  %v3056 = vsel %vm2677, %v2598, 0.0
  %v3057 = vadd.f32 %v3055, %v3056
  %v3058 = vsel %vm2677, %v2599, 0.0
  %v3059 = vadd.f32 %v3057, %v3058
  %v3060 = vsel %vm2677, %v2600, 0.0
  %v3061 = vadd.f32 %v3059, %v3060
  %v3062 = vsel %vm2677, %v2601, 0.0
  %v3063 = vadd.f32 %v3061, %v3062
  %v3064 = vsel %vm2677, %v2602, 0.0
  %v3065 = vadd.f32 %v3063, %v3064
  %v3066 = vsel %vm2677, %v2603, 0.0
  %v3067 = vadd.f32 %v3065, %v3066
  %v3068 = vsel %vm2677, %v2604, 0.0
  %v3069 = vadd.f32 %v3067, %v3068
  %v3070 = vsel %vm2677, %v2605, 0.0
  %v3071 = vadd.f32 %v3069, %v3070
  %v3072 = vsel %vm2677, %v2606, 0.0
  %v3073 = vadd.f32 %v3071, %v3072
  %v3074 = vsel %vm2677, %v2607, 0.0
  %v3075 = vadd.f32 %v3073, %v3074
  %v3076 = vsel %vm2677, %v2608, 0.0
  %v3077 = vadd.f32 %v3075, %v3076
  %v3078 = vsel %vm2677, %v2609, 0.0
  %v3079 = vadd.f32 %v3077, %v3078
  %v3080 = vsel %vm2677, %v2610, 0.0
  %v3081 = vadd.f32 %v3079, %v3080
  %v3082 = vsel %vm2677, %v2611, 0.0
  %v3083 = vadd.f32 %v3081, %v3082
  %v3084 = vsel %vm2677, %v2612, 0.0
  %v3085 = vadd.f32 %v3083, %v3084
  %v3086 = vrot.slane %v3085, 4
  %v3087 = vadd.f32 %v3085, %v3086
  %v3088 = vrot.slane %v3087, 2
  %v3089 = vadd.f32 %v3087, %v3088
  %v3090 = vrot.slane %v3089, 1
  %v3091 = vadd.f32 %v3089, %v3090
  %v3092 = vsel %vm2677, %v2613, 0.0
  %v3093 = vsel %vm2677, %v2614, 0.0
  %v3094 = vadd.f32 %v3092, %v3093
  %v3095 = vsel %vm2677, %v2615, 0.0
  %v3096 = vadd.f32 %v3094, %v3095
  %v3097 = vsel %vm2677, %v2616, 0.0
  %v3098 = vadd.f32 %v3096, %v3097
  %v3099 = vsel %vm2677, %v2617, 0.0
  %v3100 = vadd.f32 %v3098, %v3099
  %v3101 = vsel %vm2677, %v2618, 0.0
  %v3102 = vadd.f32 %v3100, %v3101
  %v3103 = vsel %vm2677, %v2619, 0.0
  %v3104 = vadd.f32 %v3102, %v3103
  %v3105 = vsel %vm2677, %v2620, 0.0
  %v3106 = vadd.f32 %v3104, %v3105
  %v3107 = vsel %vm2677, %v2621, 0.0
  %v3108 = vadd.f32 %v3106, %v3107
  %v3109 = vsel %vm2677, %v2622, 0.0
  %v3110 = vadd.f32 %v3108, %v3109
  %v3111 = vsel %vm2677, %v2623, 0.0
  %v3112 = vadd.f32 %v3110, %v3111
  %v3113 = vsel %vm2677, %v2624, 0.0
  %v3114 = vadd.f32 %v3112, %v3113
  %v3115 = vsel %vm2677, %v2625, 0.0
  %v3116 = vadd.f32 %v3114, %v3115
  %v3117 = vsel %vm2677, %v2626, 0.0
  %v3118 = vadd.f32 %v3116, %v3117
  %v3119 = vsel %vm2677, %v2627, 0.0
  %v3120 = vadd.f32 %v3118, %v3119
  %v3121 = vsel %vm2677, %v2628, 0.0
  %v3122 = vadd.f32 %v3120, %v3121
  %v3123 = vsel %vm2677, %v2629, 0.0
  %v3124 = vadd.f32 %v3122, %v3123
  %v3125 = vsel %vm2677, %v2630, 0.0
  %v3126 = vadd.f32 %v3124, %v3125
  %v3127 = vsel %vm2677, %v2631, 0.0
  %v3128 = vadd.f32 %v3126, %v3127
  %v3129 = vsel %vm2677, %v2632, 0.0
  %v3130 = vadd.f32 %v3128, %v3129
  %v3131 = vsel %vm2677, %v2633, 0.0
  %v3132 = vadd.f32 %v3130, %v3131
  %v3133 = vsel %vm2677, %v2634, 0.0
  %v3134 = vadd.f32 %v3132, %v3133
  %v3135 = vsel %vm2677, %v2635, 0.0
  %v3136 = vadd.f32 %v3134, %v3135
  %v3137 = vsel %vm2677, %v2636, 0.0
  %v3138 = vadd.f32 %v3136, %v3137
  %v3139 = vsel %vm2677, %v2637, 0.0
  %v3140 = vadd.f32 %v3138, %v3139
  %v3141 = vsel %vm2677, %v2638, 0.0
  %v3142 = vadd.f32 %v3140, %v3141
  %v3143 = vsel %vm2677, %v2639, 0.0
  %v3144 = vadd.f32 %v3142, %v3143
  %v3145 = vsel %vm2677, %v2640, 0.0
  %v3146 = vadd.f32 %v3144, %v3145
  %v3147 = vsel %vm2677, %v2641, 0.0
  %v3148 = vadd.f32 %v3146, %v3147
  %v3149 = vsel %vm2677, %v2642, 0.0
  %v3150 = vadd.f32 %v3148, %v3149
  %v3151 = vsel %vm2677, %v2643, 0.0
  %v3152 = vadd.f32 %v3150, %v3151
  %v3153 = vsel %vm2677, %v2644, 0.0
  %v3154 = vadd.f32 %v3152, %v3153
  %v3155 = vrot.slane %v3154, 4
  %v3156 = vadd.f32 %v3154, %v3155
  %v3157 = vrot.slane %v3156, 2
  %v3158 = vadd.f32 %v3156, %v3157
  %v3159 = vrot.slane %v3158, 1
  %v3160 = vadd.f32 %v3158, %v3159
  %v3161 = vsel %vm2677, %v2645, 0.0
  %v3162 = vsel %vm2677, %v2646, 0.0
  %v3163 = vadd.f32 %v3161, %v3162
  %v3164 = vsel %vm2677, %v2647, 0.0
  %v3165 = vadd.f32 %v3163, %v3164
  %v3166 = vsel %vm2677, %v2648, 0.0
  %v3167 = vadd.f32 %v3165, %v3166
  %v3168 = vsel %vm2677, %v2649, 0.0
  %v3169 = vadd.f32 %v3167, %v3168
  %v3170 = vsel %vm2677, %v2650, 0.0
  %v3171 = vadd.f32 %v3169, %v3170
  %v3172 = vsel %vm2677, %v2651, 0.0
  %v3173 = vadd.f32 %v3171, %v3172
  %v3174 = vsel %vm2677, %v2652, 0.0
  %v3175 = vadd.f32 %v3173, %v3174
  %v3176 = vsel %vm2677, %v2653, 0.0
  %v3177 = vadd.f32 %v3175, %v3176
  %v3178 = vsel %vm2677, %v2654, 0.0
  %v3179 = vadd.f32 %v3177, %v3178
  %v3180 = vsel %vm2677, %v2655, 0.0
  %v3181 = vadd.f32 %v3179, %v3180
  %v3182 = vsel %vm2677, %v2656, 0.0
  %v3183 = vadd.f32 %v3181, %v3182
  %v3184 = vsel %vm2677, %v2657, 0.0
  %v3185 = vadd.f32 %v3183, %v3184
  %v3186 = vsel %vm2677, %v2658, 0.0
  %v3187 = vadd.f32 %v3185, %v3186
  %v3188 = vsel %vm2677, %v2659, 0.0
  %v3189 = vadd.f32 %v3187, %v3188
  %v3190 = vsel %vm2677, %v2660, 0.0
  %v3191 = vadd.f32 %v3189, %v3190
  %v3192 = vsel %vm2677, %v2661, 0.0
  %v3193 = vadd.f32 %v3191, %v3192
  %v3194 = vsel %vm2677, %v2662, 0.0
  %v3195 = vadd.f32 %v3193, %v3194
  %v3196 = vsel %vm2677, %v2663, 0.0
  %v3197 = vadd.f32 %v3195, %v3196
  %v3198 = vsel %vm2677, %v2664, 0.0
  %v3199 = vadd.f32 %v3197, %v3198
  %v3200 = vsel %vm2677, %v2665, 0.0
  %v3201 = vadd.f32 %v3199, %v3200
  %v3202 = vsel %vm2677, %v2666, 0.0
  %v3203 = vadd.f32 %v3201, %v3202
  %v3204 = vsel %vm2677, %v2667, 0.0
  %v3205 = vadd.f32 %v3203, %v3204
  %v3206 = vsel %vm2677, %v2668, 0.0
  %v3207 = vadd.f32 %v3205, %v3206
  %v3208 = vsel %vm2677, %v2669, 0.0
  %v3209 = vadd.f32 %v3207, %v3208
  %v3210 = vsel %vm2677, %v2670, 0.0
  %v3211 = vadd.f32 %v3209, %v3210
  %v3212 = vsel %vm2677, %v2671, 0.0
  %v3213 = vadd.f32 %v3211, %v3212
  %v3214 = vsel %vm2677, %v2672, 0.0
  %v3215 = vadd.f32 %v3213, %v3214
  %v3216 = vsel %vm2677, %v2673, 0.0
  %v3217 = vadd.f32 %v3215, %v3216
  %v3218 = vsel %vm2677, %v2674, 0.0
  %v3219 = vadd.f32 %v3217, %v3218
  %v3220 = vsel %vm2677, %v2675, 0.0
  %v3221 = vadd.f32 %v3219, %v3220
  %v3222 = vsel %vm2677, %v2676, 0.0
  %v3223 = vadd.f32 %v3221, %v3222
  %v3224 = vrot.slane %v3223, 4
  %v3225 = vadd.f32 %v3223, %v3224
  %v3226 = vrot.slane %v3225, 2
  %v3227 = vadd.f32 %v3225, %v3226
  %v3228 = vrot.slane %v3227, 1
  %v3229 = vadd.f32 %v3227, %v3228
  %v3230 = vmul.f32 %v2746, 0.00390625
  %v3231 = vmul.f32 %v2815, 0.00390625
  %v3232 = vmul.f32 %v2884, 0.00390625
  %v3233 = vmul.f32 %v2953, 0.00390625
  %v3234 = vmul.f32 %v3022, 0.00390625
  %v3235 = vmul.f32 %v3091, 0.00390625
  %v3236 = vmul.f32 %v3160, 0.00390625
  %v3237 = vmul.f32 %v3229, 0.00390625
  %v3238 = vld [vmem:[%s4] sm:$0xff]
  %v3239 = vld [vmem:[%s4 + $0x8] sm:$0xff]
  %v3240 = vld [vmem:[%s5] sm:$0x1]
  %v3242 = vlaneseq
  %v3243 = vshrl.u32 %v3242, 7
  %v3244 = vsub.s32 0, %v3243
  %v3245 = vrot.slane %v3240, %v3244
  %vm3255 = vcmask 1041409
  %v3256 = vsel %vm3255, %v3231, %v3230
  %vm3257 = vcmask 1042434
  %v3258 = vsel %vm3257, %v3232, %v3256
  %vm3259 = vcmask 1043459
  %v3260 = vsel %vm3259, %v3233, %v3258
  %vm3261 = vcmask 1044484
  %v3262 = vsel %vm3261, %v3234, %v3260
  %vm3263 = vcmask 1045509
  %v3264 = vsel %vm3263, %v3235, %v3262
  %vm3265 = vcmask 1046534
  %v3266 = vsel %vm3265, %v3236, %v3264
  %vm3267 = vcmask 1047559
  %v3268 = vsel %vm3267, %v3237, %v3266
  %v3269 = vsel %vm2677, %v3268, 0
  %3271 = vmatprep.subr.mxu0 0.0
  %3272 = vmatpush1.msra.mxu0 0.0
  %3273 = vmatprep.subr.mxu0 0.0
  %3274 = vmatpush1.msra.mxu0 0.0
  %3275 = vmatprep.subr.mxu0 0.0
  %3276 = vmatpush1.msra.mxu0 0.0
  %3277 = vmatprep.subr.mxu0 0.0
  %3278 = vmatpush1.msra.mxu0 0.0
  %3279 = vmatprep.subr.mxu0 0.0
  %3280 = vmatpush1.msra.mxu0 0.0
  %3281 = vmatprep.subr.mxu0 0.0
  %3282 = vmatpush1.msra.mxu0 0.0
  %3283 = vmatprep.subr.mxu0 0.0
  %3284 = vmatpush1.msra.mxu0 0.0
  %3285 = vmatprep.subr.mxu0 0.0
  %3286 = vmatpush1.msra.mxu0 0.0
  %3287 = vmatprep.subr.mxu0 0.0
  %3288 = vmatpush1.msra.mxu0 0.0
  %3289 = vmatprep.subr.mxu0 0.0
  %3290 = vmatpush1.msra.mxu0 0.0
  %3291 = vmatprep.subr.mxu0 0.0
  %3292 = vmatpush1.msra.mxu0 0.0
  %3293 = vmatprep.subr.mxu0 0.0
  %3294 = vmatpush1.msra.mxu0 0.0
  %3295 = vmatprep.subr.mxu0 0.0
  %3296 = vmatpush1.msra.mxu0 0.0
  %3297 = vmatprep.subr.mxu0 0.0
  %3298 = vmatpush1.msra.mxu0 0.0
  %3299 = vmatprep.subr.mxu0 0.0
  %3300 = vmatpush1.msra.mxu0 %v3239
  %3301 = vmatprep.subr.mxu0 0.0
  %3302 = vmatpush1.msra.mxu0 %v3238
  %3303 = vmatprep.subr.mxu0 0.0
  %3304 = vmatpush2.msra.mxu0 0.0
  %3305 = vmatprep.subr.mxu0 0.0
  %3306 = vmatpush2.msra.mxu0 0.0
  %3307 = vmatprep.subr.mxu0 0.0
  %3308 = vmatpush2.msra.mxu0 0.0
  %3309 = vmatprep.subr.mxu0 0.0
  %3310 = vmatpush2.msra.mxu0 0.0
  %3311 = vmatprep.subr.mxu0 0.0
  %3312 = vmatpush2.msra.mxu0 0.0
  %3313 = vmatprep.subr.mxu0 0.0
  %3314 = vmatpush2.msra.mxu0 0.0
  %3315 = vmatprep.subr.mxu0 0.0
  %3316 = vmatpush2.msra.mxu0 0.0
  %3317 = vmatprep.subr.mxu0 0.0
  %3318 = vmatpush2.msra.mxu0 0.0
  %3319 = vmatprep.subr.mxu0 0.0
  %3320 = vmatpush2.msra.mxu0 0.0
  %3321 = vmatprep.subr.mxu0 0.0
  %3322 = vmatpush2.msra.mxu0 0.0
  %3323 = vmatprep.subr.mxu0 0.0
  %3324 = vmatpush2.msra.mxu0 0.0
  %3325 = vmatprep.subr.mxu0 0.0
  %3326 = vmatpush2.msra.mxu0 0.0
  %3327 = vmatprep.subr.mxu0 0.0
  %3328 = vmatpush2.msra.mxu0 0.0
  %3329 = vmatprep.subr.mxu0 0.0
  %3330 = vmatpush2.msra.mxu0 0.0
  %3331 = vmatprep.subr.mxu0 0.0
  %3332 = vmatpush2.msra.mxu0 0.0
  %3333 = vmatprep.subr.mxu0 0.0
  %3334 = vmatpush2.msra.mxu0 0.0
  %3335 = vmatprep.mubr.f32.mxu0 0.0
  %3336 = vmatmul.mubr.f32.gmra.mxu0 %v3269
  %v3337 = vpop.f32.mrf.mxu0
  %v3338 = vadd.f32 %v3245, %v3337
  %v3339 = vpop.f32.mrf.mxu0
  %3340 = vdwg.mxu0
  %v3341 = vmax.f32 %v3338, 0.0
  %v3342 = vld [vmem:[%s1] sm:$0xff]
  %v3343 = vadd.f32 %v3341, %v3342
  %v3344 = vld [vmem:[%s6] sm:$0xff]
  %v3345 = vld [vmem:[%s6 + $0x8] sm:$0xff]
  %v3346 = vld [vmem:[%s6 + $0x10] sm:$0xff]
  %v3347 = vld [vmem:[%s6 + $0x18] sm:$0xff]
  %v3348 = vld [vmem:[%s6 + $0x20] sm:$0xff]
  %v3349 = vld [vmem:[%s6 + $0x28] sm:$0xff]
  %v3350 = vld [vmem:[%s6 + $0x30] sm:$0xff]
  %v3351 = vld [vmem:[%s6 + $0x38] sm:$0xff]
  %v3352 = vld [vmem:[%s6 + $0x40] sm:$0xff]
  %v3353 = vld [vmem:[%s6 + $0x48] sm:$0xff]
  %v3354 = vld [vmem:[%s6 + $0x50] sm:$0xff]
  %v3355 = vld [vmem:[%s6 + $0x58] sm:$0xff]
  %v3356 = vld [vmem:[%s6 + $0x60] sm:$0xff]
  %v3357 = vld [vmem:[%s6 + $0x68] sm:$0xff]
  %v3358 = vld [vmem:[%s6 + $0x70] sm:$0xff]
  %v3359 = vld [vmem:[%s6 + $0x78] sm:$0xff]
  %v3360 = vld [vmem:[%s7] sm:$0x1]
  %v3362 = vlaneseq
  %v3363 = vshrl.u32 %v3362, 7
  %v3364 = vsub.s32 0, %v3363
  %v3365 = vrot.slane %v3360, %v3364
  %3367 = vmatprep.subr.mxu0 0.0
  %3368 = vmatpush1.msra.mxu0 %v3359
  %3369 = vmatprep.subr.mxu0 0.0
  %3370 = vmatpush1.msra.mxu0 %v3358
  %3371 = vmatprep.subr.mxu0 0.0
  %3372 = vmatpush1.msra.mxu0 %v3357
  %3373 = vmatprep.subr.mxu0 0.0
  %3374 = vmatpush1.msra.mxu0 %v3356
  %3375 = vmatprep.subr.mxu0 0.0
  %3376 = vmatpush1.msra.mxu0 %v3355
  %3377 = vmatprep.subr.mxu0 0.0
  %3378 = vmatpush1.msra.mxu0 %v3354
  %3379 = vmatprep.subr.mxu0 0.0
  %3380 = vmatpush1.msra.mxu0 %v3353
  %3381 = vmatprep.subr.mxu0 0.0
  %3382 = vmatpush1.msra.mxu0 %v3352
  %3383 = vmatprep.subr.mxu0 0.0
  %3384 = vmatpush1.msra.mxu0 %v3351
  %3385 = vmatprep.subr.mxu0 0.0
  %3386 = vmatpush1.msra.mxu0 %v3350
  %3387 = vmatprep.subr.mxu0 0.0
  %3388 = vmatpush1.msra.mxu0 %v3349
  %3389 = vmatprep.subr.mxu0 0.0
  %3390 = vmatpush1.msra.mxu0 %v3348
  %3391 = vmatprep.subr.mxu0 0.0
  %3392 = vmatpush1.msra.mxu0 %v3347
  %3393 = vmatprep.subr.mxu0 0.0
  %3394 = vmatpush1.msra.mxu0 %v3346
  %3395 = vmatprep.subr.mxu0 0.0
  %3396 = vmatpush1.msra.mxu0 %v3345
  %3397 = vmatprep.subr.mxu0 0.0
  %3398 = vmatpush1.msra.mxu0 %v3344
  %3399 = vmatprep.subr.mxu0 0.0
  %3400 = vmatpush2.msra.mxu0 0.0
  %3401 = vmatprep.subr.mxu0 0.0
  %3402 = vmatpush2.msra.mxu0 0.0
  %3403 = vmatprep.subr.mxu0 0.0
  %3404 = vmatpush2.msra.mxu0 0.0
  %3405 = vmatprep.subr.mxu0 0.0
  %3406 = vmatpush2.msra.mxu0 0.0
  %3407 = vmatprep.subr.mxu0 0.0
  %3408 = vmatpush2.msra.mxu0 0.0
  %3409 = vmatprep.subr.mxu0 0.0
  %3410 = vmatpush2.msra.mxu0 0.0
  %3411 = vmatprep.subr.mxu0 0.0
  %3412 = vmatpush2.msra.mxu0 0.0
  %3413 = vmatprep.subr.mxu0 0.0
  %3414 = vmatpush2.msra.mxu0 0.0
  %3415 = vmatprep.subr.mxu0 0.0
  %3416 = vmatpush2.msra.mxu0 0.0
  %3417 = vmatprep.subr.mxu0 0.0
  %3418 = vmatpush2.msra.mxu0 0.0
  %3419 = vmatprep.subr.mxu0 0.0
  %3420 = vmatpush2.msra.mxu0 0.0
  %3421 = vmatprep.subr.mxu0 0.0
  %3422 = vmatpush2.msra.mxu0 0.0
  %3423 = vmatprep.subr.mxu0 0.0
  %3424 = vmatpush2.msra.mxu0 0.0
  %3425 = vmatprep.subr.mxu0 0.0
  %3426 = vmatpush2.msra.mxu0 0.0
  %3427 = vmatprep.subr.mxu0 0.0
  %3428 = vmatpush2.msra.mxu0 0.0
  %3429 = vmatprep.subr.mxu0 0.0
  %3430 = vmatpush2.msra.mxu0 0.0
  %3431 = vmatprep.mubr.f32.mxu0 0.0
  %3432 = vmatmul.mubr.f32.gmra.mxu0 %v3343
  %v3433 = vpop.f32.mrf.mxu0
  %v3434 = vadd.f32 %v3365, %v3433
  %v3435 = vpop.f32.mrf.mxu0
  %3436 = vdwg.mxu0
  %v3437 = vmax.f32 %v3434, 0.0
  %v3438 = vld [vmem:[%s8] sm:$0xff]
  %v3439 = vld [vmem:[%s8 + $0x8] sm:$0xff]
  %v3440 = vld [vmem:[%s8 + $0x10] sm:$0xff]
  %v3441 = vld [vmem:[%s8 + $0x18] sm:$0xff]
  %v3442 = vld [vmem:[%s8 + $0x20] sm:$0xff]
  %v3443 = vld [vmem:[%s8 + $0x28] sm:$0xff]
  %v3444 = vld [vmem:[%s8 + $0x30] sm:$0xff]
  %v3445 = vld [vmem:[%s8 + $0x38] sm:$0xff]
  %vm3446 = vcmask 523264
  %v3448 = vsel %vm3446, %v3437, 0
  %3450 = vmatprep.subr.mxu0 0.0
  %3451 = vmatpush1.msra.mxu0 0.0
  %3452 = vmatprep.subr.mxu0 0.0
  %3453 = vmatpush1.msra.mxu0 0.0
  %3454 = vmatprep.subr.mxu0 0.0
  %3455 = vmatpush1.msra.mxu0 0.0
  %3456 = vmatprep.subr.mxu0 0.0
  %3457 = vmatpush1.msra.mxu0 0.0
  %3458 = vmatprep.subr.mxu0 0.0
  %3459 = vmatpush1.msra.mxu0 0.0
  %3460 = vmatprep.subr.mxu0 0.0
  %3461 = vmatpush1.msra.mxu0 0.0
  %3462 = vmatprep.subr.mxu0 0.0
  %3463 = vmatpush1.msra.mxu0 0.0
  %3464 = vmatprep.subr.mxu0 0.0
  %3465 = vmatpush1.msra.mxu0 0.0
  %3466 = vmatprep.subr.mxu0 0.0
  %3467 = vmatpush1.msra.mxu0 %v3445
  %3468 = vmatprep.subr.mxu0 0.0
  %3469 = vmatpush1.msra.mxu0 %v3444
  %3470 = vmatprep.subr.mxu0 0.0
  %3471 = vmatpush1.msra.mxu0 %v3443
  %3472 = vmatprep.subr.mxu0 0.0
  %3473 = vmatpush1.msra.mxu0 %v3442
  %3474 = vmatprep.subr.mxu0 0.0
  %3475 = vmatpush1.msra.mxu0 %v3441
  %3476 = vmatprep.subr.mxu0 0.0
  %3477 = vmatpush1.msra.mxu0 %v3440
  %3478 = vmatprep.subr.mxu0 0.0
  %3479 = vmatpush1.msra.mxu0 %v3439
  %3480 = vmatprep.subr.mxu0 0.0
  %3481 = vmatpush1.msra.mxu0 %v3438
  %3482 = vmatprep.subr.mxu0 0.0
  %3483 = vmatpush2.msra.mxu0 0.0
  %3484 = vmatprep.subr.mxu0 0.0
  %3485 = vmatpush2.msra.mxu0 0.0
  %3486 = vmatprep.subr.mxu0 0.0
  %3487 = vmatpush2.msra.mxu0 0.0
  %3488 = vmatprep.subr.mxu0 0.0
  %3489 = vmatpush2.msra.mxu0 0.0
  %3490 = vmatprep.subr.mxu0 0.0
  %3491 = vmatpush2.msra.mxu0 0.0
  %3492 = vmatprep.subr.mxu0 0.0
  %3493 = vmatpush2.msra.mxu0 0.0
  %3494 = vmatprep.subr.mxu0 0.0
  %3495 = vmatpush2.msra.mxu0 0.0
  %3496 = vmatprep.subr.mxu0 0.0
  %3497 = vmatpush2.msra.mxu0 0.0
  %3498 = vmatprep.subr.mxu0 0.0
  %3499 = vmatpush2.msra.mxu0 0.0
  %3500 = vmatprep.subr.mxu0 0.0
  %3501 = vmatpush2.msra.mxu0 0.0
  %3502 = vmatprep.subr.mxu0 0.0
  %3503 = vmatpush2.msra.mxu0 0.0
  %3504 = vmatprep.subr.mxu0 0.0
  %3505 = vmatpush2.msra.mxu0 0.0
  %3506 = vmatprep.subr.mxu0 0.0
  %3507 = vmatpush2.msra.mxu0 0.0
  %3508 = vmatprep.subr.mxu0 0.0
  %3509 = vmatpush2.msra.mxu0 0.0
  %3510 = vmatprep.subr.mxu0 0.0
  %3511 = vmatpush2.msra.mxu0 0.0
  %3512 = vmatprep.subr.mxu0 0.0
  %3513 = vmatpush2.msra.mxu0 0.0
  %3514 = vmatprep.mubr.f32.mxu0 0.0
  %3515 = vmatmul.mubr.f32.gmra.mxu0 %v3448
  %v3516 = vpop.f32.mrf.mxu0
  %v3517 = vadd.f32 0.0, %v3516
  %v3518 = vpop.f32.mrf.mxu0
  %3519 = vdwg.mxu0
  %v3520 = vadd.f32 %v3341, %v3517
  %v3521 = vld [vmem:[%s9] sm:$0x1]
  %v3523 = vlaneseq
  %v3524 = vshrl.u32 %v3523, 7
  %v3525 = vsub.s32 0, %v3524
  %v3526 = vrot.slane %v3521, %v3525
  %v3528 = vadd.f32 %v3520, %v3526
  %3529 = vst [vmem:[%s10] sm:$0xff] %v3528
  // Predicated region
  $region42: #{local_model_forward.1} parent=0 // pred_check
    _
  $region43: #{local_model_forward.1} parent=0 // pred_check_branch
    %3531 = sbr.rel (0) target = $region45
  $region44: #{local_model_forward.1} parent=0 // pred_region
    _
  $region45: #{local_model_forward.1} parent=0 // pred_fallthru
    _
  // Predicated region
  $region46: #{local_model_forward.1} parent=0 // pred_check
    _
  $region47: #{local_model_forward.1} parent=0 // pred_check_branch
    %3533 = sbr.rel (0) target = $region49
  $region48: #{local_model_forward.1} parent=0 // pred_region
    _
  $region49: #{local_model_forward.1} parent=0 // pred_fallthru
    _

</llo_original>
